<compile_context>
chip_gen: v7x
topology: tpu7x:2x2x1
jax: 0.10.0
libtpu: 0.0.40
codegen_flags: <defaults>
</compile_context>

<pallas_src>
import functools

import jax
import jax.numpy as jnp
from jax.experimental import pallas as pl
from jax.experimental.pallas import tpu as pltpu

# ---- stem geometry ---------------------------------------------------------
S2D_CIN = 12          # 2*2*3 space-to-depth channels of the 7x7/2 conv input
K1_CIN = 16           # per-tap channel block padded 12 -> 16
K1_TAPS = 16          # 4x4 stride-1 taps of the phase-decomposed 7x7/2 conv
C1 = 16               # conv1 output channels
K2_TAPS = 9           # 3x3 taps of conv2
C2 = 32               # conv2 output channels
EMB_REAL = 64         # embedding width
CPAD = 128            # lane padding for the single HBM-written tensor


# ----------------------------- Pallas kernel -------------------------------- #

def _backbone_kernel(p_ref, w1_ref, b1_ref, w2_ref, b2_ref, wfc_ref, bfc_ref,
                     o_ref, *, bpg, oh1, ow1, oh2, ow2):
    """Fused stem for `bpg` images; everything except the final embedding stays
    in VMEM.

    p_ref  : [bpg, oh1+3, ow1+3, K1_CIN] bf16  space-to-depth conv1 input
    w1_ref : [K1_TAPS*K1_CIN, C1]        bf16  tap-concat conv1 weight (BN folded)
    b1_ref : [1, C1]                     f32   folded BN bias
    w2_ref : [K2_TAPS*C1, C2]            bf16  tap-concat conv2 weight (BN folded)
    b2_ref : [1, C2]                     f32
    wfc_ref: [C2, CPAD]                  bf16  FC weight (cols >= 64 are zero)
    bfc_ref: [1, CPAD]                   f32
    o_ref  : [1, bpg, CPAD]              f32   embedding
    """
    xin = p_ref[...]                                        # bf16, no f32 round-trip

    # ---- conv1: one dense-K matmul (K = 16 taps * 16 ch = 256) -------------
    patch1 = jnp.concatenate(
        [xin[:, a:a + oh1, b:b + ow1, :] for a in range(4) for b in range(4)],
        axis=-1).reshape(bpg * oh1 * ow1, K1_TAPS * K1_CIN)
    h1 = jnp.dot(patch1, w1_ref[...], preferred_element_type=jnp.float32)
    h1 = jnp.maximum(h1 + b1_ref[...], 0.0).astype(jnp.bfloat16)
    h1 = h1.reshape(bpg, oh1, ow1, C1)

    # ---- 3x3 / stride-2 / pad-1 max pool, separable, in-kernel -------------
    # zero padding is a valid max identity only because h1 >= 0 after ReLU.
    zc = jnp.zeros((bpg, oh1, 1, C1), jnp.bfloat16)
    hp = jnp.concatenate([zc, h1, zc], axis=2)              # (bpg, oh1, ow1+2, C1)
    w3 = jnp.maximum(jnp.maximum(hp[:, :, 0:ow1, :], hp[:, :, 1:ow1 + 1, :]),
                     hp[:, :, 2:ow1 + 2, :])
    rm = jnp.concatenate(                                   # keep even columns
        [w3[:, :, 2 * k:2 * k + 1, :] for k in range(ow2)], axis=2)
    zr = jnp.zeros((bpg, 1, ow2, C1), jnp.bfloat16)
    rp = jnp.concatenate([zr, rm, zr], axis=1)              # (bpg, oh1+2, ow2, C1)
    h3 = jnp.maximum(jnp.maximum(rp[:, 0:oh1], rp[:, 1:oh1 + 1]), rp[:, 2:oh1 + 2])
    pooled = h3.reshape(bpg, oh2, 2, ow2, C1)[:, :, 0]      # even rows (major dim)

    # ---- conv2: one dense-K matmul over real channels (K = 9*16 = 144) -----
    zc2 = jnp.zeros((bpg, oh2, 1, C1), jnp.bfloat16)
    zr2 = jnp.zeros((bpg, 1, ow2 + 2, C1), jnp.bfloat16)
    pp = jnp.concatenate([zc2, pooled, zc2], axis=2)
    pp = jnp.concatenate([zr2, pp, zr2], axis=1)            # (bpg, oh2+2, ow2+2, C1)
    patch2 = jnp.concatenate(
        [pp[:, i:i + oh2, j:j + ow2, :] for i in range(3) for j in range(3)],
        axis=-1).reshape(bpg * oh2 * ow2, K2_TAPS * C1)
    h2 = jnp.dot(patch2, w2_ref[...], preferred_element_type=jnp.float32)
    h2 = jnp.maximum(h2 + b2_ref[...], 0.0)                 # (bpg*oh2*ow2, C2) f32

    # ---- global average pool + FC embedding --------------------------------
    gap = jnp.mean(h2.reshape(bpg, oh2 * ow2, C2), axis=1)  # (bpg, C2)
    emb = jnp.dot(gap.astype(jnp.bfloat16), wfc_ref[...],
                  preferred_element_type=jnp.float32) + bfc_ref[...]
    o_ref[0] = emb


def backbone(p, params, *, bpg, oh1, ow1):
    B = p.shape[0]
    num_steps = B // bpg
    oh2, ow2 = oh1 // 2, ow1 // 2
    kern = functools.partial(_backbone_kernel, bpg=bpg, oh1=oh1, ow1=ow1,
                             oh2=oh2, ow2=ow2)
    flops = B * (2 * oh1 * ow1 * (K1_TAPS * K1_CIN) * C1
                 + 2 * oh2 * ow2 * (K2_TAPS * C1) * C2
                 + 2 * C2 * CPAD)
    bytes_acc = (p.size * 2 + params["w1"].size * 2 + params["w2"].size * 2
                 + params["w_fc"].size * 2
                 + (params["b1"].size + params["b2"].size + params["b_fc"].size) * 4
                 + B * CPAD * 4)
    out = pl.pallas_call(
        kern,
        out_shape=jax.ShapeDtypeStruct((num_steps, bpg, CPAD), jnp.float32),
        grid=(num_steps,),
        in_specs=[
            pl.BlockSpec((bpg, oh1 + 3, ow1 + 3, K1_CIN), lambda i: (i, 0, 0, 0)),
            pl.BlockSpec((K1_TAPS * K1_CIN, C1), lambda i: (0, 0)),
            pl.BlockSpec((1, C1), lambda i: (0, 0)),
            pl.BlockSpec((K2_TAPS * C1, C2), lambda i: (0, 0)),
            pl.BlockSpec((1, C2), lambda i: (0, 0)),
            pl.BlockSpec((C2, CPAD), lambda i: (0, 0)),
            pl.BlockSpec((1, CPAD), lambda i: (0, 0)),
        ],
        out_specs=pl.BlockSpec((1, bpg, CPAD), lambda i: (i, 0, 0)),
        compiler_params=pltpu.CompilerParams(dimension_semantics=("parallel",)),
        cost_estimate=pl.CostEstimate(flops=int(flops), transcendentals=0,
                                      bytes_accessed=int(bytes_acc)),
    )(p, params["w1"], params["b1"], params["w2"], params["b2"],
      params["w_fc"], params["b_fc"])
    return out.reshape(B, CPAD)


# ------------------------------ parameters ---------------------------------- #

def init_params(key):
    ks = jax.random.split(key, 6)

    def he(kk, shape, fan_in):
        return jax.random.normal(kk, shape, jnp.float32) * (2.0 / fan_in) ** 0.5

    def fold_bn(kk, c):
        kg, kb, km, kv = jax.random.split(kk, 4)
        gamma = 1.0 + 0.1 * jax.random.normal(kg, (c,), jnp.float32)
        beta = 0.1 * jax.random.normal(kb, (c,), jnp.float32)
        mean = 0.1 * jax.random.normal(km, (c,), jnp.float32)
        var = 1.0 + 0.1 * jnp.abs(jax.random.normal(kv, (c,), jnp.float32))
        scale = gamma / jnp.sqrt(var + 1e-5)
        bias = beta - mean * scale
        return scale, bias

    # conv1 7x7/2, 3 -> C1 (torch [Cout, Cin, kh, kw]); phase-decompose into a
    # 4x4 stride-1 tap grid over the 12 space-to-depth channels and concatenate
    # taps into one K = 16*16 = 256 contraction.  BN scale folded into weight.
    w1 = he(ks[0], (C1, 3, 7, 7), 3 * 49)
    s1, bias1 = fold_bn(ks[1], C1)
    w1_hwio = jnp.transpose(w1, (2, 3, 1, 0))                    # [7,7,3,C1]
    w4 = jnp.zeros((4, 4, K1_CIN, C1), jnp.float32)
    for a in range(4):
        for b in range(4):
            for dy in range(2):
                for dx in range(2):
                    ky, kx = 2 * a + dy, 2 * b + dx
                    if ky < 7 and kx < 7:
                        c0 = dy * 6 + dx * 3
                        w4 = w4.at[a, b, c0:c0 + 3, :].set(w1_hwio[ky, kx])
    w1_packed = (w4 * s1).reshape(K1_TAPS * K1_CIN, C1)

    # conv2 3x3/1, C1 -> C2; taps concatenated into K = 9*16 = 144 real channels
    # (no 128-padded zero columns in the contraction).  BN scale folded.
    w2 = he(ks[2], (C2, C1, 3, 3), C1 * 9)
    s2, bias2 = fold_bn(ks[3], C2)
    w2_hwio = jnp.transpose(w2, (2, 3, 1, 0))                    # [3,3,C1,C2]
    w2_packed = (w2_hwio * s2).reshape(K2_TAPS * C1, C2)

    # fc embedding C2 -> 64; padded to 128 output lanes so the kernel's only
    # HBM store is lane-dense.
    w_fc = he(ks[4], (C2, EMB_REAL), C2)
    b_fc = 0.01 * jax.random.normal(ks[5], (EMB_REAL,), jnp.float32)
    wfc_pad = jnp.zeros((C2, CPAD), jnp.float32).at[:, :EMB_REAL].set(w_fc)
    bfc_pad = jnp.zeros((1, CPAD), jnp.float32).at[0, :EMB_REAL].set(b_fc)

    return dict(
        w1=w1_packed.astype(jnp.bfloat16), b1=bias1.reshape(1, C1),
        w2=w2_packed.astype(jnp.bfloat16), b2=bias2.reshape(1, C2),
        w_fc=wfc_pad.astype(jnp.bfloat16), b_fc=bfc_pad)


# ------------------------------ forward pass --------------------------------- #

def bninception_embed(params, x_nchw):
    """Shared embedding backbone (BN-Inception-style stem), one fused Pallas kernel."""
    x = jnp.transpose(x_nchw, (0, 2, 3, 1)).astype(jnp.float32)   # NCHW -> NHWC
    B, H, W, _ = x.shape

    # conv1 7x7 stride-2 pad-3: zero-pad + space-to-depth (factor 2) in XLA
    # (~1x traffic); the kernel does a stride-1, dense-K tap reduction in VMEM.
    xp = jnp.pad(x, ((0, 0), (3, 3), (3, 3), (0, 0)))
    Hp, Wp = H + 6, W + 6
    oh1, ow1 = (Hp - 7) // 2 + 1, (Wp - 7) // 2 + 1
    assert Hp % 2 == 0 and Wp % 2 == 0 and oh1 % 2 == 0 and ow1 % 2 == 0
    p = xp.reshape(B, Hp // 2, 2, Wp // 2, 2, 3)
    p = p.transpose(0, 1, 3, 2, 4, 5).reshape(B, Hp // 2, Wp // 2, S2D_CIN)
    p = jnp.pad(p, ((0, 0), (0, 0), (0, 0), (0, K1_CIN - S2D_CIN))).astype(jnp.bfloat16)
    assert p.shape[1] == oh1 + 3 and p.shape[2] == ow1 + 3

    # >= 2 grid steps so both v7x TensorCores get work; images are batched
    # within a step to amortize per-step overhead on single-TC v5e/v6e.
    bpg = B // 2 if (B % 2 == 0 and B >= 2) else B
    emb = backbone(p, params, bpg=bpg, oh1=oh1, ow1=ow1)
    return emb[:, :EMB_REAL]


def siamese_forward(params, x1, x2):
    """Siamese.forward: fA = model(x1), fB = model(x2), shared weights."""
    x = jnp.concatenate([x1, x2], axis=0)   # run both branches in one pass
    f = bninception_embed(params, x)
    B = x1.shape[0]
    return f[:B], f[B:]


# --------------------------------- main -------------------------------------- #

if __name__ == "__main__":
    key = jax.random.PRNGKey(0)
    kp, k1, k2 = jax.random.split(key, 3)
    params = init_params(kp)

    # small RGB inputs, NCHW like the PyTorch module expects
    x1 = jax.random.normal(k1, (2, 3, 32, 32), jnp.float32)
    x2 = jax.random.normal(k2, (2, 3, 32, 32), jnp.float32)

    fA, fB = jax.jit(siamese_forward)(params, x1, x2)
    jax.block_until_ready((fA, fB))

    assert fA.shape == (2, EMB_REAL) and fB.shape == (2, EMB_REAL)
    assert fA.dtype == jnp.float32 and fB.dtype == jnp.float32
    assert bool(jnp.all(jnp.isfinite(fA))) and bool(jnp.all(jnp.isfinite(fB)))
    print("KERNEL_OK")
</pallas_src>

<mosaic_0001>
module attributes {stable_mosaic.version = 11 : i64} {
  func.func @_backbone_kernel(%arg0: i32, %arg1: memref<2x19x19x16xbf16, #tpu.memory_space<vmem>>, %arg2: memref<256x16xbf16, #tpu.memory_space<vmem>>, %arg3: memref<1x16xf32, #tpu.memory_space<vmem>>, %arg4: memref<144x32xbf16, #tpu.memory_space<vmem>>, %arg5: memref<1x32xf32, #tpu.memory_space<vmem>>, %arg6: memref<32x128xbf16, #tpu.memory_space<vmem>>, %arg7: memref<1x128xf32, #tpu.memory_space<vmem>>, %arg8: memref<1x2x128xf32, #tpu.memory_space<vmem>>) attributes {dimension_semantics = [#tpu.dimension_semantics<parallel>], iteration_bounds = array<i64: 2>, scalar_prefetch = 0 : i64, scratch_operands = 0 : i64, tpu.core_type = #tpu.core_type<tc>, window_params = [{transform_indices = @transform_0, window_bounds = array<i64: 2, 19, 19, 16>}, {pipeline_mode = #tpu.pipeline_mode<synchronous>, transform_indices = @transform_1, window_bounds = array<i64: 256, 16>}, {pipeline_mode = #tpu.pipeline_mode<synchronous>, transform_indices = @transform_2, window_bounds = array<i64: 1, 16>}, {pipeline_mode = #tpu.pipeline_mode<synchronous>, transform_indices = @transform_3, window_bounds = array<i64: 144, 32>}, {pipeline_mode = #tpu.pipeline_mode<synchronous>, transform_indices = @transform_4, window_bounds = array<i64: 1, 32>}, {pipeline_mode = #tpu.pipeline_mode<synchronous>, transform_indices = @transform_5, window_bounds = array<i64: 32, 128>}, {pipeline_mode = #tpu.pipeline_mode<synchronous>, transform_indices = @transform_6, window_bounds = array<i64: 1, 128>}, {transform_indices = @transform_7, window_bounds = array<i64: 1, 2, 128>}]} {
    %c0 = arith.constant 0 : index
    %c0_0 = arith.constant 0 : index
    %c0_1 = arith.constant 0 : index
    %c0_2 = arith.constant 0 : index
    %0 = vector.load %arg1[%c0, %c0_0, %c0_1, %c0_2] : memref<2x19x19x16xbf16, #tpu.memory_space<vmem>>, vector<2x19x19x16xbf16>
    %1 = vector.extract_strided_slice %0 {offsets = [0, 0, 0, 0], sizes = [2, 16, 16, 16], strides = [1, 1, 1, 1]} : vector<2x19x19x16xbf16> to vector<2x16x16x16xbf16>
    %2 = vector.extract_strided_slice %0 {offsets = [0, 0, 1, 0], sizes = [2, 16, 16, 16], strides = [1, 1, 1, 1]} : vector<2x19x19x16xbf16> to vector<2x16x16x16xbf16>
    %3 = vector.extract_strided_slice %0 {offsets = [0, 0, 2, 0], sizes = [2, 16, 16, 16], strides = [1, 1, 1, 1]} : vector<2x19x19x16xbf16> to vector<2x16x16x16xbf16>
    %4 = vector.extract_strided_slice %0 {offsets = [0, 0, 3, 0], sizes = [2, 16, 16, 16], strides = [1, 1, 1, 1]} : vector<2x19x19x16xbf16> to vector<2x16x16x16xbf16>
    %5 = vector.extract_strided_slice %0 {offsets = [0, 1, 0, 0], sizes = [2, 16, 16, 16], strides = [1, 1, 1, 1]} : vector<2x19x19x16xbf16> to vector<2x16x16x16xbf16>
    %6 = vector.extract_strided_slice %0 {offsets = [0, 1, 1, 0], sizes = [2, 16, 16, 16], strides = [1, 1, 1, 1]} : vector<2x19x19x16xbf16> to vector<2x16x16x16xbf16>
    %7 = vector.extract_strided_slice %0 {offsets = [0, 1, 2, 0], sizes = [2, 16, 16, 16], strides = [1, 1, 1, 1]} : vector<2x19x19x16xbf16> to vector<2x16x16x16xbf16>
    %8 = vector.extract_strided_slice %0 {offsets = [0, 1, 3, 0], sizes = [2, 16, 16, 16], strides = [1, 1, 1, 1]} : vector<2x19x19x16xbf16> to vector<2x16x16x16xbf16>
    %9 = vector.extract_strided_slice %0 {offsets = [0, 2, 0, 0], sizes = [2, 16, 16, 16], strides = [1, 1, 1, 1]} : vector<2x19x19x16xbf16> to vector<2x16x16x16xbf16>
    %10 = vector.extract_strided_slice %0 {offsets = [0, 2, 1, 0], sizes = [2, 16, 16, 16], strides = [1, 1, 1, 1]} : vector<2x19x19x16xbf16> to vector<2x16x16x16xbf16>
    %11 = vector.extract_strided_slice %0 {offsets = [0, 2, 2, 0], sizes = [2, 16, 16, 16], strides = [1, 1, 1, 1]} : vector<2x19x19x16xbf16> to vector<2x16x16x16xbf16>
    %12 = vector.extract_strided_slice %0 {offsets = [0, 2, 3, 0], sizes = [2, 16, 16, 16], strides = [1, 1, 1, 1]} : vector<2x19x19x16xbf16> to vector<2x16x16x16xbf16>
    %13 = vector.extract_strided_slice %0 {offsets = [0, 3, 0, 0], sizes = [2, 16, 16, 16], strides = [1, 1, 1, 1]} : vector<2x19x19x16xbf16> to vector<2x16x16x16xbf16>
    %14 = vector.extract_strided_slice %0 {offsets = [0, 3, 1, 0], sizes = [2, 16, 16, 16], strides = [1, 1, 1, 1]} : vector<2x19x19x16xbf16> to vector<2x16x16x16xbf16>
    %15 = vector.extract_strided_slice %0 {offsets = [0, 3, 2, 0], sizes = [2, 16, 16, 16], strides = [1, 1, 1, 1]} : vector<2x19x19x16xbf16> to vector<2x16x16x16xbf16>
    %16 = vector.extract_strided_slice %0 {offsets = [0, 3, 3, 0], sizes = [2, 16, 16, 16], strides = [1, 1, 1, 1]} : vector<2x19x19x16xbf16> to vector<2x16x16x16xbf16>
    %17 = tpu.concatenate %1, %2, %3, %4, %5, %6, %7, %8, %9, %10, %11, %12, %13, %14, %15, %16 in 3 : vector<2x16x16x16xbf16>, vector<2x16x16x16xbf16>, vector<2x16x16x16xbf16>, vector<2x16x16x16xbf16>, vector<2x16x16x16xbf16>, vector<2x16x16x16xbf16>, vector<2x16x16x16xbf16>, vector<2x16x16x16xbf16>, vector<2x16x16x16xbf16>, vector<2x16x16x16xbf16>, vector<2x16x16x16xbf16>, vector<2x16x16x16xbf16>, vector<2x16x16x16xbf16>, vector<2x16x16x16xbf16>, vector<2x16x16x16xbf16>, vector<2x16x16x16xbf16> -> vector<2x16x16x256xbf16>
    %18 = vector.shape_cast %17 : vector<2x16x16x256xbf16> to vector<512x256xbf16>
    %c0_3 = arith.constant 0 : index
    %c0_4 = arith.constant 0 : index
    %19 = vector.load %arg2[%c0_3, %c0_4] : memref<256x16xbf16, #tpu.memory_space<vmem>>, vector<256x16xbf16>
    %cst = arith.constant dense<0.000000e+00> : vector<512x16xf32>
    %20 = tpu.matmul %18, %19, %cst {dimension_numbers = #tpu.dot_dimension_numbers<[1], [0], [0], [1], [0, 0, 1, 1], [], []>} : vector<512x256xbf16>, vector<256x16xbf16>, vector<512x16xf32> -> vector<512x16xf32>
    %c0_5 = arith.constant 0 : index
    %c0_6 = arith.constant 0 : index
    %21 = vector.load %arg3[%c0_5, %c0_6] : memref<1x16xf32, #tpu.memory_space<vmem>>, vector<1x16xf32>
    %22 = vector.broadcast %21 : vector<1x16xf32> to vector<512x16xf32>
    %23 = arith.addf %20, %22 : vector<512x16xf32>
    %cst_7 = arith.constant 0.000000e+00 : f32
    %24 = vector.broadcast %cst_7 : f32 to vector<512x16xf32>
    %25 = arith.maximumf %23, %24 : vector<512x16xf32>
    %26 = arith.truncf %25 : vector<512x16xf32> to vector<512x16xbf16>
    %27 = vector.shape_cast %26 : vector<512x16xbf16> to vector<2x16x16x16xbf16>
    %cst_8 = arith.constant 0.000000e+00 : bf16
    %28 = vector.broadcast %cst_8 : bf16 to vector<2x16x1x16xbf16>
    %29 = tpu.concatenate %28, %27, %28 in 2 : vector<2x16x1x16xbf16>, vector<2x16x16x16xbf16>, vector<2x16x1x16xbf16> -> vector<2x16x18x16xbf16>
    %30 = vector.extract_strided_slice %29 {offsets = [0, 0, 0, 0], sizes = [2, 16, 16, 16], strides = [1, 1, 1, 1]} : vector<2x16x18x16xbf16> to vector<2x16x16x16xbf16>
    %31 = vector.extract_strided_slice %29 {offsets = [0, 0, 1, 0], sizes = [2, 16, 16, 16], strides = [1, 1, 1, 1]} : vector<2x16x18x16xbf16> to vector<2x16x16x16xbf16>
    %32 = arith.maximumf %30, %31 : vector<2x16x16x16xbf16>
    %33 = vector.extract_strided_slice %29 {offsets = [0, 0, 2, 0], sizes = [2, 16, 16, 16], strides = [1, 1, 1, 1]} : vector<2x16x18x16xbf16> to vector<2x16x16x16xbf16>
    %34 = arith.maximumf %32, %33 : vector<2x16x16x16xbf16>
    %35 = vector.extract_strided_slice %34 {offsets = [0, 0, 0, 0], sizes = [2, 16, 1, 16], strides = [1, 1, 1, 1]} : vector<2x16x16x16xbf16> to vector<2x16x1x16xbf16>
    %36 = vector.extract_strided_slice %34 {offsets = [0, 0, 2, 0], sizes = [2, 16, 1, 16], strides = [1, 1, 1, 1]} : vector<2x16x16x16xbf16> to vector<2x16x1x16xbf16>
    %37 = vector.extract_strided_slice %34 {offsets = [0, 0, 4, 0], sizes = [2, 16, 1, 16], strides = [1, 1, 1, 1]} : vector<2x16x16x16xbf16> to vector<2x16x1x16xbf16>
    %38 = vector.extract_strided_slice %34 {offsets = [0, 0, 6, 0], sizes = [2, 16, 1, 16], strides = [1, 1, 1, 1]} : vector<2x16x16x16xbf16> to vector<2x16x1x16xbf16>
    %39 = vector.extract_strided_slice %34 {offsets = [0, 0, 8, 0], sizes = [2, 16, 1, 16], strides = [1, 1, 1, 1]} : vector<2x16x16x16xbf16> to vector<2x16x1x16xbf16>
    %40 = vector.extract_strided_slice %34 {offsets = [0, 0, 10, 0], sizes = [2, 16, 1, 16], strides = [1, 1, 1, 1]} : vector<2x16x16x16xbf16> to vector<2x16x1x16xbf16>
    %41 = vector.extract_strided_slice %34 {offsets = [0, 0, 12, 0], sizes = [2, 16, 1, 16], strides = [1, 1, 1, 1]} : vector<2x16x16x16xbf16> to vector<2x16x1x16xbf16>
    %42 = vector.extract_strided_slice %34 {offsets = [0, 0, 14, 0], sizes = [2, 16, 1, 16], strides = [1, 1, 1, 1]} : vector<2x16x16x16xbf16> to vector<2x16x1x16xbf16>
    %43 = tpu.concatenate %35, %36, %37, %38, %39, %40, %41, %42 in 2 : vector<2x16x1x16xbf16>, vector<2x16x1x16xbf16>, vector<2x16x1x16xbf16>, vector<2x16x1x16xbf16>, vector<2x16x1x16xbf16>, vector<2x16x1x16xbf16>, vector<2x16x1x16xbf16>, vector<2x16x1x16xbf16> -> vector<2x16x8x16xbf16>
    %cst_9 = arith.constant 0.000000e+00 : bf16
    %44 = vector.broadcast %cst_9 : bf16 to vector<2x1x8x16xbf16>
    %45 = tpu.concatenate %44, %43, %44 in 1 : vector<2x1x8x16xbf16>, vector<2x16x8x16xbf16>, vector<2x1x8x16xbf16> -> vector<2x18x8x16xbf16>
    %46 = vector.extract_strided_slice %45 {offsets = [0, 0, 0, 0], sizes = [2, 16, 8, 16], strides = [1, 1, 1, 1]} : vector<2x18x8x16xbf16> to vector<2x16x8x16xbf16>
    %47 = vector.extract_strided_slice %45 {offsets = [0, 1, 0, 0], sizes = [2, 16, 8, 16], strides = [1, 1, 1, 1]} : vector<2x18x8x16xbf16> to vector<2x16x8x16xbf16>
    %48 = arith.maximumf %46, %47 : vector<2x16x8x16xbf16>
    %49 = vector.extract_strided_slice %45 {offsets = [0, 2, 0, 0], sizes = [2, 16, 8, 16], strides = [1, 1, 1, 1]} : vector<2x18x8x16xbf16> to vector<2x16x8x16xbf16>
    %50 = arith.maximumf %48, %49 : vector<2x16x8x16xbf16>
    %51 = vector.shape_cast %50 : vector<2x16x8x16xbf16> to vector<2x8x2x8x16xbf16>
    %52 = vector.extract_strided_slice %51 {offsets = [0, 0, 0, 0, 0], sizes = [2, 8, 1, 8, 16], strides = [1, 1, 1, 1, 1]} : vector<2x8x2x8x16xbf16> to vector<2x8x1x8x16xbf16>
    %53 = vector.shape_cast %52 : vector<2x8x1x8x16xbf16> to vector<2x8x8x16xbf16>
    %cst_10 = arith.constant 0.000000e+00 : bf16
    %54 = vector.broadcast %cst_10 : bf16 to vector<2x8x1x16xbf16>
    %cst_11 = arith.constant 0.000000e+00 : bf16
    %55 = vector.broadcast %cst_11 : bf16 to vector<2x1x10x16xbf16>
    %56 = tpu.concatenate %54, %53, %54 in 2 : vector<2x8x1x16xbf16>, vector<2x8x8x16xbf16>, vector<2x8x1x16xbf16> -> vector<2x8x10x16xbf16>
    %57 = tpu.concatenate %55, %56, %55 in 1 : vector<2x1x10x16xbf16>, vector<2x8x10x16xbf16>, vector<2x1x10x16xbf16> -> vector<2x10x10x16xbf16>
    %58 = vector.extract_strided_slice %57 {offsets = [0, 0, 0, 0], sizes = [2, 8, 8, 16], strides = [1, 1, 1, 1]} : vector<2x10x10x16xbf16> to vector<2x8x8x16xbf16>
    %59 = vector.extract_strided_slice %57 {offsets = [0, 0, 1, 0], sizes = [2, 8, 8, 16], strides = [1, 1, 1, 1]} : vector<2x10x10x16xbf16> to vector<2x8x8x16xbf16>
    %60 = vector.extract_strided_slice %57 {offsets = [0, 0, 2, 0], sizes = [2, 8, 8, 16], strides = [1, 1, 1, 1]} : vector<2x10x10x16xbf16> to vector<2x8x8x16xbf16>
    %61 = vector.extract_strided_slice %57 {offsets = [0, 1, 0, 0], sizes = [2, 8, 8, 16], strides = [1, 1, 1, 1]} : vector<2x10x10x16xbf16> to vector<2x8x8x16xbf16>
    %62 = vector.extract_strided_slice %57 {offsets = [0, 1, 1, 0], sizes = [2, 8, 8, 16], strides = [1, 1, 1, 1]} : vector<2x10x10x16xbf16> to vector<2x8x8x16xbf16>
    %63 = vector.extract_strided_slice %57 {offsets = [0, 1, 2, 0], sizes = [2, 8, 8, 16], strides = [1, 1, 1, 1]} : vector<2x10x10x16xbf16> to vector<2x8x8x16xbf16>
    %64 = vector.extract_strided_slice %57 {offsets = [0, 2, 0, 0], sizes = [2, 8, 8, 16], strides = [1, 1, 1, 1]} : vector<2x10x10x16xbf16> to vector<2x8x8x16xbf16>
    %65 = vector.extract_strided_slice %57 {offsets = [0, 2, 1, 0], sizes = [2, 8, 8, 16], strides = [1, 1, 1, 1]} : vector<2x10x10x16xbf16> to vector<2x8x8x16xbf16>
    %66 = vector.extract_strided_slice %57 {offsets = [0, 2, 2, 0], sizes = [2, 8, 8, 16], strides = [1, 1, 1, 1]} : vector<2x10x10x16xbf16> to vector<2x8x8x16xbf16>
    %67 = tpu.concatenate %58, %59, %60, %61, %62, %63, %64, %65, %66 in 3 : vector<2x8x8x16xbf16>, vector<2x8x8x16xbf16>, vector<2x8x8x16xbf16>, vector<2x8x8x16xbf16>, vector<2x8x8x16xbf16>, vector<2x8x8x16xbf16>, vector<2x8x8x16xbf16>, vector<2x8x8x16xbf16>, vector<2x8x8x16xbf16> -> vector<2x8x8x144xbf16>
    %68 = vector.shape_cast %67 : vector<2x8x8x144xbf16> to vector<128x144xbf16>
    %c0_12 = arith.constant 0 : index
    %c0_13 = arith.constant 0 : index
    %69 = vector.load %arg4[%c0_12, %c0_13] : memref<144x32xbf16, #tpu.memory_space<vmem>>, vector<144x32xbf16>
    %cst_14 = arith.constant dense<0.000000e+00> : vector<128x32xf32>
    %70 = tpu.matmul %68, %69, %cst_14 {dimension_numbers = #tpu.dot_dimension_numbers<[1], [0], [0], [1], [0, 0, 1, 1], [], []>} : vector<128x144xbf16>, vector<144x32xbf16>, vector<128x32xf32> -> vector<128x32xf32>
    %c0_15 = arith.constant 0 : index
    %c0_16 = arith.constant 0 : index
    %71 = vector.load %arg5[%c0_15, %c0_16] : memref<1x32xf32, #tpu.memory_space<vmem>>, vector<1x32xf32>
    %72 = vector.broadcast %71 : vector<1x32xf32> to vector<128x32xf32>
    %73 = arith.addf %70, %72 : vector<128x32xf32>
    %cst_17 = arith.constant 0.000000e+00 : f32
    %74 = vector.broadcast %cst_17 : f32 to vector<128x32xf32>
    %75 = arith.maximumf %73, %74 : vector<128x32xf32>
    %76 = vector.shape_cast %75 : vector<128x32xf32> to vector<2x64x32xf32>
    %cst_18 = arith.constant dense<0.000000e+00> : vector<2x32xf32>
    %77 = vector.multi_reduction <add>, %76, %cst_18 [1] : vector<2x64x32xf32> to vector<2x32xf32>
    %cst_19 = arith.constant 6.400000e+01 : f32
    %78 = vector.broadcast %cst_19 : f32 to vector<2x32xf32>
    %79 = arith.divf %77, %78 : vector<2x32xf32>
    %80 = arith.truncf %79 : vector<2x32xf32> to vector<2x32xbf16>
    %c0_20 = arith.constant 0 : index
    %c0_21 = arith.constant 0 : index
    %81 = vector.load %arg6[%c0_20, %c0_21] : memref<32x128xbf16, #tpu.memory_space<vmem>>, vector<32x128xbf16>
    %cst_22 = arith.constant dense<0.000000e+00> : vector<2x128xf32>
    %82 = tpu.matmul %80, %81, %cst_22 {dimension_numbers = #tpu.dot_dimension_numbers<[1], [0], [0], [1], [0, 0, 1, 1], [], []>} : vector<2x32xbf16>, vector<32x128xbf16>, vector<2x128xf32> -> vector<2x128xf32>
    %c0_23 = arith.constant 0 : index
    %c0_24 = arith.constant 0 : index
    %83 = vector.load %arg7[%c0_23, %c0_24] : memref<1x128xf32, #tpu.memory_space<vmem>>, vector<1x128xf32>
    %84 = vector.broadcast %83 : vector<1x128xf32> to vector<2x128xf32>
    %85 = arith.addf %82, %84 : vector<2x128xf32>
    %c0_25 = arith.constant 0 : index
    %c0_26 = arith.constant 0 : index
    %c0_27 = arith.constant 0 : index
    %86 = vector.load %arg8[%c0_25, %c0_26, %c0_27] : memref<1x2x128xf32, #tpu.memory_space<vmem>>, vector<1x2x128xf32>
    %87 = vector.shape_cast %86 : vector<1x2x128xf32> to vector<2x128xf32>
    %88 = vector.shape_cast %85 : vector<2x128xf32> to vector<1x2x128xf32>
    tpu.vector_store %arg8[%c0_25, %c0_26, %c0_27], %88 {strides = array<i32>} : memref<1x2x128xf32, #tpu.memory_space<vmem>>, vector<1x2x128xf32>,
    return
  }
  func.func @transform_0(%arg0: i32) -> (i32, i32, i32, i32) {
    %c0_i32 = arith.constant 0 : i32
    %c0_i32_0 = arith.constant 0 : i32
    %c0_i32_1 = arith.constant 0 : i32
    %c0_i32_2 = arith.constant 0 : i32
    return %arg0, %c0_i32, %c0_i32_0, %c0_i32_1 : i32, i32, i32, i32
  }
  func.func @transform_1(%arg0: i32) -> (i32, i32) {
    %c0_i32 = arith.constant 0 : i32
    %c0_i32_0 = arith.constant 0 : i32
    %c0_i32_1 = arith.constant 0 : i32
    return %c0_i32, %c0_i32_0 : i32, i32
  }
  func.func @transform_2(%arg0: i32) -> (i32, i32) {
    %c0_i32 = arith.constant 0 : i32
    %c0_i32_0 = arith.constant 0 : i32
    %c0_i32_1 = arith.constant 0 : i32
    return %c0_i32, %c0_i32_0 : i32, i32
  }
  func.func @transform_3(%arg0: i32) -> (i32, i32) {
    %c0_i32 = arith.constant 0 : i32
    %c0_i32_0 = arith.constant 0 : i32
    %c0_i32_1 = arith.constant 0 : i32
    return %c0_i32, %c0_i32_0 : i32, i32
  }
  func.func @transform_4(%arg0: i32) -> (i32, i32) {
    %c0_i32 = arith.constant 0 : i32
    %c0_i32_0 = arith.constant 0 : i32
    %c0_i32_1 = arith.constant 0 : i32
    return %c0_i32, %c0_i32_0 : i32, i32
  }
  func.func @transform_5(%arg0: i32) -> (i32, i32) {
    %c0_i32 = arith.constant 0 : i32
    %c0_i32_0 = arith.constant 0 : i32
    %c0_i32_1 = arith.constant 0 : i32
    return %c0_i32, %c0_i32_0 : i32, i32
  }
  func.func @transform_6(%arg0: i32) -> (i32, i32) {
    %c0_i32 = arith.constant 0 : i32
    %c0_i32_0 = arith.constant 0 : i32
    %c0_i32_1 = arith.constant 0 : i32
    return %c0_i32, %c0_i32_0 : i32, i32
  }
  func.func @transform_7(%arg0: i32) -> (i32, i32, i32) {
    %c0_i32 = arith.constant 0 : i32
    %c0_i32_0 = arith.constant 0 : i32
    %c0_i32_1 = arith.constant 0 : i32
    return %arg0, %c0_i32, %c0_i32_0 : i32, i32, i32
  }
}

</mosaic_0001>

<llo_original>
// kernel: siamese_forward.1
$region0: #{siamese_forward.1}
  #allocation0 [shape = 'u32[]', space=smem, size = 0x4, offset = 0x4, fixed_abs, tag = 'smem constant byte address 0x4 - core index']
  #allocation1 [shape = 'u32[144,128]{1,0:T(1,128)}', space=vmem, size = 0x12000, scoped, tag = 'internal scratch']
  %s0 = inlined_call_operand.vmem [shape: bf16[4,19,19,16], index: 0, kind: input, shape index: {}]
  %s1 = inlined_call_operand.vmem [shape: bf16[256,16], index: 1, kind: input, shape index: {}]
  %s2 = inlined_call_operand.vmem [shape: f32[1,16], index: 2, kind: input, shape index: {}]
  %s3 = inlined_call_operand.vmem [shape: bf16[144,32], index: 3, kind: input, shape index: {}]
  %s4 = inlined_call_operand.vmem [shape: f32[1,32], index: 4, kind: input, shape index: {}]
  %s5 = inlined_call_operand.vmem [shape: bf16[32,128], index: 5, kind: input, shape index: {}]
  %s6 = inlined_call_operand.vmem [shape: f32[1,128], index: 6, kind: input, shape index: {}]
  %s7 = inlined_call_operand.vmem [shape: f32[2,2,128], index: 7, kind: output, shape index: {}]
  %s8 = sld [smem:[#allocation0]]
  $region61: #{siamese_forward.1} parent=0
    _
  %s10 = ssub.s32 1, %s8
  %s11 = scalar_select 0, %s10, %s8
  loop: start=0, step=1, limit=4
  $region2: #{siamese_forward.1} parent=0 // loop_pre_header
    _
  $region3: #{siamese_forward.1} parent=0 // loop_header
    %s13 = sphi 0, %s17
    %p14 = scmp.ge.s32.totalorder %s13, 4
    %s23 = sphi 0, %s25
    %s26 = sphi 0, %s23
    %s27 = sphi 0, %s26
    %s43 = sphi 0, %s27
    %s47 = sphi 0, %s47
    %s49 = sphi 0, %s47
    %s50 = sphi 0, %s49
    %s64 = sphi 0, %s50
    %s68 = sphi 0, %s68
    %s70 = sphi 0, %s68
    %s71 = sphi 0, %s70
    %s85 = sphi 0, %s71
    %s89 = sphi 0, %s89
    %s91 = sphi 0, %s89
    %s92 = sphi 0, %s91
    %s106 = sphi 0, %s92
    %s110 = sphi 0, %s110
    %s112 = sphi 0, %s110
    %s113 = sphi 0, %s112
    %s127 = sphi 0, %s113
    %s131 = sphi 0, %s131
    %s133 = sphi 0, %s131
    %s134 = sphi 0, %s133
    %s148 = sphi 0, %s134
    %s152 = sphi 0, %s152
    %s154 = sphi 0, %s152
    %s155 = sphi 0, %s154
    %s169 = sphi 0, %s155
    %s175 = sphi 0, %s177
    %s178 = sphi 0, %s175
    %s179 = sphi 0, %s178
    %s195 = sphi 0, %s179
  $region4: #{siamese_forward.1} parent=0 // loop_header_branch
    %16 = sbr.rel (%p14) target = $region8
  $region5: #{siamese_forward.1} parent=0 // loop_body
    %s18 = ssub.s32 %s13, 1
    %s19 = ssub.s32 %s13, 2
    %s20 = sadd.s32 %s13, 1
    %s21 = ssub.s32 %s13, %s20
    %p22 = scmp.eq.s32.totalorder %s21, 0
    %s24 = sadd.s32 %s23, 1
    %s25 = scalar_select %p22, %s23, %s24
    %p28 = pneg %p22
    %p29 = scmp.eq.s32.totalorder %s13, 1
    %p30 = por %p28, %p29
    %p31 = scmp.ne.s32.totalorder %s23, %s26
    %p32 = scmp.eq.s32.totalorder %s13, 0
    %p33 = por %p31, %p32
    %p34 = scmp.ne.s32.totalorder %s23, %s26
    %p35 = scmp.eq.s32.totalorder %s18, 1
    %p36 = por %p34, %p35
    %p37 = scmp.ne.s32.totalorder %s26, %s27
    %p38 = scmp.eq.s32.totalorder %s18, 0
    %p39 = por %p37, %p38
    %p40 = scmp.ne.s32.totalorder %s26, %s27
    %p41 = scmp.eq.s32.totalorder %s19, 1
    %p42 = por %p40, %p41
    %p44 = scmp.ne.s32.totalorder %s27, %s43
    %p45 = scmp.eq.s32.totalorder %s19, 0
    %p46 = por %p44, %p45
    %s48 = sadd.s32 %s47, 1
    %p51 = scmp.eq.s32.totalorder %s13, 1
    %p52 = scmp.ne.s32.totalorder %s47, %s49
    %p53 = scmp.eq.s32.totalorder %s13, 0
    %p54 = por %p52, %p53
    %p55 = scmp.ne.s32.totalorder %s47, %s49
    %p56 = scmp.eq.s32.totalorder %s18, 1
    %p57 = por %p55, %p56
    %p58 = scmp.ne.s32.totalorder %s49, %s50
    %p59 = scmp.eq.s32.totalorder %s18, 0
    %p60 = por %p58, %p59
    %p61 = scmp.ne.s32.totalorder %s49, %s50
    %p62 = scmp.eq.s32.totalorder %s19, 1
    %p63 = por %p61, %p62
    %p65 = scmp.ne.s32.totalorder %s50, %s64
    %p66 = scmp.eq.s32.totalorder %s19, 0
    %p67 = por %p65, %p66
    %s69 = sadd.s32 %s68, 1
    %p72 = scmp.eq.s32.totalorder %s13, 1
    %p73 = scmp.ne.s32.totalorder %s68, %s70
    %p74 = scmp.eq.s32.totalorder %s13, 0
    %p75 = por %p73, %p74
    %p76 = scmp.ne.s32.totalorder %s68, %s70
    %p77 = scmp.eq.s32.totalorder %s18, 1
    %p78 = por %p76, %p77
    %p79 = scmp.ne.s32.totalorder %s70, %s71
    %p80 = scmp.eq.s32.totalorder %s18, 0
    %p81 = por %p79, %p80
    %p82 = scmp.ne.s32.totalorder %s70, %s71
    %p83 = scmp.eq.s32.totalorder %s19, 1
    %p84 = por %p82, %p83
    %p86 = scmp.ne.s32.totalorder %s71, %s85
    %p87 = scmp.eq.s32.totalorder %s19, 0
    %p88 = por %p86, %p87
    %s90 = sadd.s32 %s89, 1
    %p93 = scmp.eq.s32.totalorder %s13, 1
    %p94 = scmp.ne.s32.totalorder %s89, %s91
    %p95 = scmp.eq.s32.totalorder %s13, 0
    %p96 = por %p94, %p95
    %p97 = scmp.ne.s32.totalorder %s89, %s91
    %p98 = scmp.eq.s32.totalorder %s18, 1
    %p99 = por %p97, %p98
    %p100 = scmp.ne.s32.totalorder %s91, %s92
    %p101 = scmp.eq.s32.totalorder %s18, 0
    %p102 = por %p100, %p101
    %p103 = scmp.ne.s32.totalorder %s91, %s92
    %p104 = scmp.eq.s32.totalorder %s19, 1
    %p105 = por %p103, %p104
    %p107 = scmp.ne.s32.totalorder %s92, %s106
    %p108 = scmp.eq.s32.totalorder %s19, 0
    %p109 = por %p107, %p108
    %s111 = sadd.s32 %s110, 1
    %p114 = scmp.eq.s32.totalorder %s13, 1
    %p115 = scmp.ne.s32.totalorder %s110, %s112
    %p116 = scmp.eq.s32.totalorder %s13, 0
    %p117 = por %p115, %p116
    %p118 = scmp.ne.s32.totalorder %s110, %s112
    %p119 = scmp.eq.s32.totalorder %s18, 1
    %p120 = por %p118, %p119
    %p121 = scmp.ne.s32.totalorder %s112, %s113
    %p122 = scmp.eq.s32.totalorder %s18, 0
    %p123 = por %p121, %p122
    %p124 = scmp.ne.s32.totalorder %s112, %s113
    %p125 = scmp.eq.s32.totalorder %s19, 1
    %p126 = por %p124, %p125
    %p128 = scmp.ne.s32.totalorder %s113, %s127
    %p129 = scmp.eq.s32.totalorder %s19, 0
    %p130 = por %p128, %p129
    %s132 = sadd.s32 %s131, 1
    %p135 = scmp.eq.s32.totalorder %s13, 1
    %p136 = scmp.ne.s32.totalorder %s131, %s133
    %p137 = scmp.eq.s32.totalorder %s13, 0
    %p138 = por %p136, %p137
    %p139 = scmp.ne.s32.totalorder %s131, %s133
    %p140 = scmp.eq.s32.totalorder %s18, 1
    %p141 = por %p139, %p140
    %p142 = scmp.ne.s32.totalorder %s133, %s134
    %p143 = scmp.eq.s32.totalorder %s18, 0
    %p144 = por %p142, %p143
    %p145 = scmp.ne.s32.totalorder %s133, %s134
    %p146 = scmp.eq.s32.totalorder %s19, 1
    %p147 = por %p145, %p146
    %p149 = scmp.ne.s32.totalorder %s134, %s148
    %p150 = scmp.eq.s32.totalorder %s19, 0
    %p151 = por %p149, %p150
    %s153 = sadd.s32 %s152, 1
    %p156 = scmp.eq.s32.totalorder %s13, 1
    %p157 = scmp.ne.s32.totalorder %s152, %s154
    %p158 = scmp.eq.s32.totalorder %s13, 0
    %p159 = por %p157, %p158
    %p160 = scmp.ne.s32.totalorder %s152, %s154
    %p161 = scmp.eq.s32.totalorder %s18, 1
    %p162 = por %p160, %p161
    %p163 = scmp.ne.s32.totalorder %s154, %s155
    %p164 = scmp.eq.s32.totalorder %s18, 0
    %p165 = por %p163, %p164
    %p166 = scmp.ne.s32.totalorder %s154, %s155
    %p167 = scmp.eq.s32.totalorder %s19, 1
    %p168 = por %p166, %p167
    %p170 = scmp.ne.s32.totalorder %s155, %s169
    %p171 = scmp.eq.s32.totalorder %s19, 0
    %p172 = por %p170, %p171
    %s173 = ssub.s32 %s13, %s20
    %p174 = scmp.eq.s32.totalorder %s173, 0
    %s176 = sadd.s32 %s175, 1
    %s177 = scalar_select %p174, %s175, %s176
    %p180 = pneg %p174
    %p181 = scmp.eq.s32.totalorder %s13, 1
    %p182 = por %p180, %p181
    %p183 = scmp.ne.s32.totalorder %s175, %s178
    %p184 = scmp.eq.s32.totalorder %s13, 0
    %p185 = por %p183, %p184
    %p186 = scmp.ne.s32.totalorder %s175, %s178
    %p187 = scmp.eq.s32.totalorder %s18, 1
    %p188 = por %p186, %p187
    %p189 = scmp.ne.s32.totalorder %s178, %s179
    %p190 = scmp.eq.s32.totalorder %s18, 0
    %p191 = por %p189, %p190
    %p192 = scmp.ne.s32.totalorder %s178, %s179
    %p193 = scmp.eq.s32.totalorder %s19, 1
    %p194 = por %p192, %p193
    %p196 = scmp.ne.s32.totalorder %s179, %s195
    %p197 = scmp.eq.s32.totalorder %s19, 0
    %p198 = por %p196, %p197
    %p199 = scmp.le.s32.totalorder 1, %s13
    %p200 = scmp.lt.s32.totalorder %s13, 3
    %p201 = pnand %p199, %p200
    %p202 = pneg %p201
    // Predicated region
    $region9: #{siamese_forward.1} parent=5 // pred_check
      _
    $region10: #{siamese_forward.1} parent=5 // pred_check_branch
      %204 = sbr.rel (%p201) target = $region12
    $region11: #{siamese_forward.1} parent=5 // pred_region
      %s205 = ssub.s32 %s13, 1
      // Predicated region
      $region13: #{siamese_forward.1} parent=11 // pred_check
        %p206 = pneg %p60
      $region14: #{siamese_forward.1} parent=11 // pred_check_branch
        %208 = sbr.rel (%p206) target = $region16
      $region15: #{siamese_forward.1} parent=11 // pred_region
        _
      $region16: #{siamese_forward.1} parent=11 // pred_fallthru
        _
      // Predicated region
      $region17: #{siamese_forward.1} parent=11 // pred_check
        %p209 = pneg %p81
      $region18: #{siamese_forward.1} parent=11 // pred_check_branch
        %211 = sbr.rel (%p209) target = $region20
      $region19: #{siamese_forward.1} parent=11 // pred_region
        _
      $region20: #{siamese_forward.1} parent=11 // pred_fallthru
        _
      // Predicated region
      $region21: #{siamese_forward.1} parent=11 // pred_check
        %p212 = pneg %p102
      $region22: #{siamese_forward.1} parent=11 // pred_check_branch
        %214 = sbr.rel (%p212) target = $region24
      $region23: #{siamese_forward.1} parent=11 // pred_region
        _
      $region24: #{siamese_forward.1} parent=11 // pred_fallthru
        _
      // Predicated region
      $region25: #{siamese_forward.1} parent=11 // pred_check
        %p215 = pneg %p123
      $region26: #{siamese_forward.1} parent=11 // pred_check_branch
        %217 = sbr.rel (%p215) target = $region28
      $region27: #{siamese_forward.1} parent=11 // pred_region
        _
      $region28: #{siamese_forward.1} parent=11 // pred_fallthru
        _
      // Predicated region
      $region29: #{siamese_forward.1} parent=11 // pred_check
        %p218 = pneg %p144
      $region30: #{siamese_forward.1} parent=11 // pred_check_branch
        %220 = sbr.rel (%p218) target = $region32
      $region31: #{siamese_forward.1} parent=11 // pred_region
        _
      $region32: #{siamese_forward.1} parent=11 // pred_fallthru
        _
      // Predicated region
      $region33: #{siamese_forward.1} parent=11 // pred_check
        %p221 = pneg %p165
      $region34: #{siamese_forward.1} parent=11 // pred_check_branch
        %223 = sbr.rel (%p221) target = $region36
      $region35: #{siamese_forward.1} parent=11 // pred_region
        _
      $region36: #{siamese_forward.1} parent=11 // pred_fallthru
        _
    $region12: #{siamese_forward.1} parent=5 // pred_fallthru
      _
    %p224 = scmp.lt.s32.totalorder %s13, 2
    // Predicated region
    $region37: #{siamese_forward.1} parent=5 // pred_check
      %p225 = pneg %p224
    $region38: #{siamese_forward.1} parent=5 // pred_check_branch
      %227 = sbr.rel (%p225) target = $region40
    $region39: #{siamese_forward.1} parent=5 // pred_region
      // Predicated region
      $region41: #{siamese_forward.1} parent=39 // pred_check
        %p228 = pneg %p33
      $region42: #{siamese_forward.1} parent=39 // pred_check_branch
        %230 = sbr.rel (%p228) target = $region44
      $region43: #{siamese_forward.1} parent=39 // pred_region
        %s231 = smul.u32 2, %s13
        %p232 = scmp.lt.s32.totalorder %s231, 3
        %s233 = scalar_select %p232, %s231, 3
        %s234 = smul.addr %s233, 57
        %s235 = smul.addr %s234, 4
        %s236 = scalar_lea.vmem %s0, %s235
        %s237 = smul.u32 2, %s13
      $region44: #{siamese_forward.1} parent=39 // pred_fallthru
        _
    $region40: #{siamese_forward.1} parent=5 // pred_fallthru
      _
    %p238 = scmp.le.s32.totalorder 1, %s13
    %p239 = scmp.lt.s32.totalorder %s13, 3
    %p240 = pnand %p238, %p239
    %p241 = pneg %p240
    // Predicated region
    $region45: #{siamese_forward.1} parent=5 // pred_check
      _
    $region46: #{siamese_forward.1} parent=5 // pred_check_branch
      %243 = sbr.rel (%p240) target = $region48
    $region47: #{siamese_forward.1} parent=5 // pred_region
      %s244 = ssub.s32 %s13, 1
      %s245 = smul.u32 2, %s18
      %p246 = scmp.lt.s32.totalorder %s245, 3
      %s247 = scalar_select %p246, %s245, 3
      %s248 = smul.addr %s247, 57
      %s249 = smul.addr %s248, 4
      %s250 = scalar_lea.vmem %s0, %s249
      %p251 = pneg %p39
      %p252 = pneg %p36
      %p253 = pneg %p60
      %p254 = pneg %p57
      %p255 = pneg %p81
      %p256 = pneg %p78
      %p257 = pneg %p102
      %p258 = pneg %p99
      %p259 = pneg %p123
      %p260 = pneg %p120
      %p261 = pneg %p144
      %p262 = pneg %p141
      %p263 = pneg %p165
      %p264 = pneg %p162
      %p265 = pneg %p191
      %p266 = pneg %p188
      %p267 = scmp.lt.s32.totalorder %s18, 1
      %s268 = scalar_select %p267, %s18, 1
      %s269 = smul.addr %s268, 2
      %s270 = scalar_lea.vmem %s7, %s269
      %s271 = smul.u32 2, %s18
      %p272 = scmp.lt.s32.totalorder %s271, 3
      %s273 = scalar_select %p272, %s271, 3
      %s274 = smul.addr %s273, 57
      %s275 = smul.addr %s274, 4
      %s276 = scalar_lea.vmem %s0, %s275
      %s277 = smul.u32 2, %s18
      %p278 = scmp.lt.s32.totalorder %s18, 1
      %s279 = scalar_select %p278, %s18, 1
      %s280 = smul.addr %s279, 2
      %s281 = scalar_lea.vmem %s7, %s280
      %v283 = vld [vmem:[%s276] sm:$0xf]
      %v284 = vld [vmem:[%s276 + $0x4] sm:$0xf]
      %v285 = vld [vmem:[%s276 + $0x8] sm:$0x3]
      %v286 = vld [vmem:[%s276 + $0xc] sm:$0xf]
      %v287 = vld [vmem:[%s276 + $0x10] sm:$0xf]
      %v288 = vld [vmem:[%s276 + $0x14] sm:$0x3]
      %v289 = vld [vmem:[%s276 + $0x18] sm:$0xf]
      %v290 = vld [vmem:[%s276 + $0x1c] sm:$0xf]
      %v291 = vld [vmem:[%s276 + $0x20] sm:$0x3]
      %v292 = vld [vmem:[%s276 + $0x24] sm:$0xf]
      %v293 = vld [vmem:[%s276 + $0x28] sm:$0xf]
      %v294 = vld [vmem:[%s276 + $0x2c] sm:$0x3]
      %v295 = vld [vmem:[%s276 + $0x30] sm:$0xf]
      %v296 = vld [vmem:[%s276 + $0x34] sm:$0xf]
      %v297 = vld [vmem:[%s276 + $0x38] sm:$0x3]
      %v298 = vld [vmem:[%s276 + $0x3c] sm:$0xf]
      %v299 = vld [vmem:[%s276 + $0x40] sm:$0xf]
      %v300 = vld [vmem:[%s276 + $0x44] sm:$0x3]
      %v301 = vld [vmem:[%s276 + $0x48] sm:$0xf]
      %v302 = vld [vmem:[%s276 + $0x4c] sm:$0xf]
      %v303 = vld [vmem:[%s276 + $0x50] sm:$0x3]
      %v304 = vld [vmem:[%s276 + $0x54] sm:$0xf]
      %v305 = vld [vmem:[%s276 + $0x58] sm:$0xf]
      %v306 = vld [vmem:[%s276 + $0x5c] sm:$0x3]
      %v307 = vld [vmem:[%s276 + $0x60] sm:$0xf]
      %v308 = vld [vmem:[%s276 + $0x64] sm:$0xf]
      %v309 = vld [vmem:[%s276 + $0x68] sm:$0x3]
      %v310 = vld [vmem:[%s276 + $0x6c] sm:$0xf]
      %v311 = vld [vmem:[%s276 + $0x70] sm:$0xf]
      %v312 = vld [vmem:[%s276 + $0x74] sm:$0x3]
      %v313 = vld [vmem:[%s276 + $0x78] sm:$0xf]
      %v314 = vld [vmem:[%s276 + $0x7c] sm:$0xf]
      %v315 = vld [vmem:[%s276 + $0x80] sm:$0x3]
      %v316 = vld [vmem:[%s276 + $0x84] sm:$0xf]
      %v317 = vld [vmem:[%s276 + $0x88] sm:$0xf]
      %v318 = vld [vmem:[%s276 + $0x8c] sm:$0x3]
      %v319 = vld [vmem:[%s276 + $0x90] sm:$0xf]
      %v320 = vld [vmem:[%s276 + $0x94] sm:$0xf]
      %v321 = vld [vmem:[%s276 + $0x98] sm:$0x3]
      %v322 = vld [vmem:[%s276 + $0x9c] sm:$0xf]
      %v323 = vld [vmem:[%s276 + $0xa0] sm:$0xf]
      %v324 = vld [vmem:[%s276 + $0xa4] sm:$0x3]
      %v325 = vld [vmem:[%s276 + $0xa8] sm:$0xf]
      %v326 = vld [vmem:[%s276 + $0xac] sm:$0xf]
      %v327 = vld [vmem:[%s276 + $0xb0] sm:$0x3]
      %v328 = vld [vmem:[%s276 + $0xb4] sm:$0xf]
      %v329 = vld [vmem:[%s276 + $0xb8] sm:$0xf]
      %v330 = vld [vmem:[%s276 + $0xbc] sm:$0x3]
      %v331 = vld [vmem:[%s276 + $0xc0] sm:$0xf]
      %v332 = vld [vmem:[%s276 + $0xc4] sm:$0xf]
      %v333 = vld [vmem:[%s276 + $0xc8] sm:$0x3]
      %v334 = vld [vmem:[%s276 + $0xcc] sm:$0xf]
      %v335 = vld [vmem:[%s276 + $0xd0] sm:$0xf]
      %v336 = vld [vmem:[%s276 + $0xd4] sm:$0x3]
      %v337 = vld [vmem:[%s276 + $0xd8] sm:$0xf]
      %v338 = vld [vmem:[%s276 + $0xdc] sm:$0xf]
      %v339 = vld [vmem:[%s276 + $0xe0] sm:$0x3]
      %v340 = vld [vmem:[%s276 + $0xe4] sm:$0xf]
      %v341 = vld [vmem:[%s276 + $0xe8] sm:$0xf]
      %v342 = vld [vmem:[%s276 + $0xec] sm:$0x3]
      %v343 = vld [vmem:[%s276 + $0xf0] sm:$0xf]
      %v344 = vld [vmem:[%s276 + $0xf4] sm:$0xf]
      %v345 = vld [vmem:[%s276 + $0xf8] sm:$0x3]
      %v346 = vld [vmem:[%s276 + $0xfc] sm:$0xf]
      %v347 = vld [vmem:[%s276 + $0x100] sm:$0xf]
      %v348 = vld [vmem:[%s276 + $0x104] sm:$0x3]
      %v349 = vld [vmem:[%s276 + $0x108] sm:$0xf]
      %v350 = vld [vmem:[%s276 + $0x10c] sm:$0xf]
      %v351 = vld [vmem:[%s276 + $0x110] sm:$0x3]
      %v352 = vld [vmem:[%s276 + $0x114] sm:$0xf]
      %v353 = vld [vmem:[%s276 + $0x118] sm:$0xf]
      %v354 = vld [vmem:[%s276 + $0x11c] sm:$0x3]
      %v355 = vld [vmem:[%s276 + $0x120] sm:$0xf]
      %v356 = vld [vmem:[%s276 + $0x124] sm:$0xf]
      %v357 = vld [vmem:[%s276 + $0x128] sm:$0x3]
      %v358 = vld [vmem:[%s276 + $0x12c] sm:$0xf]
      %v359 = vld [vmem:[%s276 + $0x130] sm:$0xf]
      %v360 = vld [vmem:[%s276 + $0x134] sm:$0x3]
      %v361 = vld [vmem:[%s276 + $0x138] sm:$0xf]
      %v362 = vld [vmem:[%s276 + $0x13c] sm:$0xf]
      %v363 = vld [vmem:[%s276 + $0x140] sm:$0x3]
      %v364 = vld [vmem:[%s276 + $0x144] sm:$0xf]
      %v365 = vld [vmem:[%s276 + $0x148] sm:$0xf]
      %v366 = vld [vmem:[%s276 + $0x14c] sm:$0x3]
      %v367 = vld [vmem:[%s276 + $0x150] sm:$0xf]
      %v368 = vld [vmem:[%s276 + $0x154] sm:$0xf]
      %v369 = vld [vmem:[%s276 + $0x158] sm:$0x3]
      %v370 = vld [vmem:[%s276 + $0x15c] sm:$0xf]
      %v371 = vld [vmem:[%s276 + $0x160] sm:$0xf]
      %v372 = vld [vmem:[%s276 + $0x164] sm:$0x3]
      %v373 = vld [vmem:[%s276 + $0x168] sm:$0xf]
      %v374 = vld [vmem:[%s276 + $0x16c] sm:$0xf]
      %v375 = vld [vmem:[%s276 + $0x170] sm:$0x3]
      %v376 = vld [vmem:[%s276 + $0x174] sm:$0xf]
      %v377 = vld [vmem:[%s276 + $0x178] sm:$0xf]
      %v378 = vld [vmem:[%s276 + $0x17c] sm:$0x3]
      %v379 = vld [vmem:[%s276 + $0x180] sm:$0xf]
      %v380 = vld [vmem:[%s276 + $0x184] sm:$0xf]
      %v381 = vld [vmem:[%s276 + $0x188] sm:$0x3]
      %v382 = vld [vmem:[%s276 + $0x18c] sm:$0xf]
      %v383 = vld [vmem:[%s276 + $0x190] sm:$0xf]
      %v384 = vld [vmem:[%s276 + $0x194] sm:$0x3]
      %v385 = vld [vmem:[%s276 + $0x198] sm:$0xf]
      %v386 = vld [vmem:[%s276 + $0x19c] sm:$0xf]
      %v387 = vld [vmem:[%s276 + $0x1a0] sm:$0x3]
      %v388 = vld [vmem:[%s276 + $0x1a4] sm:$0xf]
      %v389 = vld [vmem:[%s276 + $0x1a8] sm:$0xf]
      %v390 = vld [vmem:[%s276 + $0x1ac] sm:$0x3]
      %v391 = vld [vmem:[%s276 + $0x1b0] sm:$0xf]
      %v392 = vld [vmem:[%s276 + $0x1b4] sm:$0xf]
      %v393 = vld [vmem:[%s276 + $0x1b8] sm:$0x3]
      %v394 = vld [vmem:[%s276 + $0x1bc] sm:$0xf]
      %v395 = vld [vmem:[%s276 + $0x1c0] sm:$0xf]
      %v396 = vld [vmem:[%s276 + $0x1c4] sm:$0x3]
      %v461 = vunpack.c.l.b16 %v283
      %v462 = vunpack.c.l.b16 %v284
      %v463 = vunpack.c.l.b16 %v286
      %v464 = vunpack.c.l.b16 %v287
      %v465 = vunpack.c.l.b16 %v289
      %v466 = vunpack.c.l.b16 %v290
      %v467 = vunpack.c.l.b16 %v292
      %v468 = vunpack.c.l.b16 %v293
      %v469 = vunpack.c.l.b16 %v295
      %v470 = vunpack.c.l.b16 %v296
      %v471 = vunpack.c.l.b16 %v298
      %v472 = vunpack.c.l.b16 %v299
      %v473 = vunpack.c.l.b16 %v301
      %v474 = vunpack.c.l.b16 %v302
      %v475 = vunpack.c.l.b16 %v304
      %v476 = vunpack.c.l.b16 %v305
      %v477 = vunpack.c.l.b16 %v307
      %v478 = vunpack.c.l.b16 %v308
      %v479 = vunpack.c.l.b16 %v310
      %v480 = vunpack.c.l.b16 %v311
      %v481 = vunpack.c.l.b16 %v313
      %v482 = vunpack.c.l.b16 %v314
      %v483 = vunpack.c.l.b16 %v316
      %v484 = vunpack.c.l.b16 %v317
      %v485 = vunpack.c.l.b16 %v319
      %v486 = vunpack.c.l.b16 %v320
      %v487 = vunpack.c.l.b16 %v322
      %v488 = vunpack.c.l.b16 %v323
      %v489 = vunpack.c.l.b16 %v325
      %v490 = vunpack.c.l.b16 %v326
      %v491 = vunpack.c.l.b16 %v328
      %v492 = vunpack.c.l.b16 %v329
      %v493 = vunpack.c.l.b16 %v340
      %v494 = vunpack.c.l.b16 %v341
      %v495 = vunpack.c.l.b16 %v343
      %v496 = vunpack.c.l.b16 %v344
      %v497 = vunpack.c.l.b16 %v346
      %v498 = vunpack.c.l.b16 %v347
      %v499 = vunpack.c.l.b16 %v349
      %v500 = vunpack.c.l.b16 %v350
      %v501 = vunpack.c.l.b16 %v352
      %v502 = vunpack.c.l.b16 %v353
      %v503 = vunpack.c.l.b16 %v355
      %v504 = vunpack.c.l.b16 %v356
      %v505 = vunpack.c.l.b16 %v358
      %v506 = vunpack.c.l.b16 %v359
      %v507 = vunpack.c.l.b16 %v361
      %v508 = vunpack.c.l.b16 %v362
      %v509 = vunpack.c.l.b16 %v364
      %v510 = vunpack.c.l.b16 %v365
      %v511 = vunpack.c.l.b16 %v367
      %v512 = vunpack.c.l.b16 %v368
      %v513 = vunpack.c.l.b16 %v370
      %v514 = vunpack.c.l.b16 %v371
      %v515 = vunpack.c.l.b16 %v373
      %v516 = vunpack.c.l.b16 %v374
      %v517 = vunpack.c.l.b16 %v376
      %v518 = vunpack.c.l.b16 %v377
      %v519 = vunpack.c.l.b16 %v379
      %v520 = vunpack.c.l.b16 %v380
      %v521 = vunpack.c.l.b16 %v382
      %v522 = vunpack.c.l.b16 %v383
      %v523 = vunpack.c.l.b16 %v385
      %v524 = vunpack.c.l.b16 %v386
      %v525 = vpack.c.b16 %v462, %v461
      %v526 = vpack.c.b16 %v464, %v463
      %v527 = vpack.c.b16 %v466, %v465
      %v528 = vpack.c.b16 %v468, %v467
      %v529 = vpack.c.b16 %v470, %v469
      %v530 = vpack.c.b16 %v472, %v471
      %v531 = vpack.c.b16 %v474, %v473
      %v532 = vpack.c.b16 %v476, %v475
      %v533 = vpack.c.b16 %v478, %v477
      %v534 = vpack.c.b16 %v480, %v479
      %v535 = vpack.c.b16 %v482, %v481
      %v536 = vpack.c.b16 %v484, %v483
      %v537 = vpack.c.b16 %v486, %v485
      %v538 = vpack.c.b16 %v488, %v487
      %v539 = vpack.c.b16 %v490, %v489
      %v540 = vpack.c.b16 %v492, %v491
      %v541 = vpack.c.b16 %v494, %v493
      %v542 = vpack.c.b16 %v496, %v495
      %v543 = vpack.c.b16 %v498, %v497
      %v544 = vpack.c.b16 %v500, %v499
      %v545 = vpack.c.b16 %v502, %v501
      %v546 = vpack.c.b16 %v504, %v503
      %v547 = vpack.c.b16 %v506, %v505
      %v548 = vpack.c.b16 %v508, %v507
      %v549 = vpack.c.b16 %v510, %v509
      %v550 = vpack.c.b16 %v512, %v511
      %v551 = vpack.c.b16 %v514, %v513
      %v552 = vpack.c.b16 %v516, %v515
      %v553 = vpack.c.b16 %v518, %v517
      %v554 = vpack.c.b16 %v520, %v519
      %v555 = vpack.c.b16 %v522, %v521
      %v556 = vpack.c.b16 %v524, %v523
      %v589 = vunpack.c.l.b16 %v285
      %v590 = vunpack.c.l.b16 %v288
      %v591 = vunpack.c.l.b16 %v291
      %v592 = vunpack.c.l.b16 %v294
      %v593 = vunpack.c.l.b16 %v297
      %v594 = vunpack.c.l.b16 %v300
      %v595 = vunpack.c.l.b16 %v303
      %v596 = vunpack.c.l.b16 %v306
      %v597 = vunpack.c.l.b16 %v309
      %v598 = vunpack.c.l.b16 %v312
      %v599 = vunpack.c.l.b16 %v315
      %v600 = vunpack.c.l.b16 %v318
      %v601 = vunpack.c.l.b16 %v321
      %v602 = vunpack.c.l.b16 %v324
      %v603 = vunpack.c.l.b16 %v327
      %v604 = vunpack.c.l.b16 %v330
      %v605 = vunpack.c.l.b16 %v342
      %v606 = vunpack.c.l.b16 %v345
      %v607 = vunpack.c.l.b16 %v348
      %v608 = vunpack.c.l.b16 %v351
      %v609 = vunpack.c.l.b16 %v354
      %v610 = vunpack.c.l.b16 %v357
      %v611 = vunpack.c.l.b16 %v360
      %v612 = vunpack.c.l.b16 %v363
      %v613 = vunpack.c.l.b16 %v366
      %v614 = vunpack.c.l.b16 %v369
      %v615 = vunpack.c.l.b16 %v372
      %v616 = vunpack.c.l.b16 %v375
      %v617 = vunpack.c.l.b16 %v378
      %v618 = vunpack.c.l.b16 %v381
      %v619 = vunpack.c.l.b16 %v384
      %v620 = vunpack.c.l.b16 %v387
      %v621 = vpack.c.b16 %v589, %v589
      %v622 = vpack.c.b16 %v590, %v590
      %v623 = vpack.c.b16 %v591, %v591
      %v624 = vpack.c.b16 %v592, %v592
      %v625 = vpack.c.b16 %v593, %v593
      %v626 = vpack.c.b16 %v594, %v594
      %v627 = vpack.c.b16 %v595, %v595
      %v628 = vpack.c.b16 %v596, %v596
      %v629 = vpack.c.b16 %v597, %v597
      %v630 = vpack.c.b16 %v598, %v598
      %v631 = vpack.c.b16 %v599, %v599
      %v632 = vpack.c.b16 %v600, %v600
      %v633 = vpack.c.b16 %v601, %v601
      %v634 = vpack.c.b16 %v602, %v602
      %v635 = vpack.c.b16 %v603, %v603
      %v636 = vpack.c.b16 %v604, %v604
      %v637 = vpack.c.b16 %v605, %v605
      %v638 = vpack.c.b16 %v606, %v606
      %v639 = vpack.c.b16 %v607, %v607
      %v640 = vpack.c.b16 %v608, %v608
      %v641 = vpack.c.b16 %v609, %v609
      %v642 = vpack.c.b16 %v610, %v610
      %v643 = vpack.c.b16 %v611, %v611
      %v644 = vpack.c.b16 %v612, %v612
      %v645 = vpack.c.b16 %v613, %v613
      %v646 = vpack.c.b16 %v614, %v614
      %v647 = vpack.c.b16 %v615, %v615
      %v648 = vpack.c.b16 %v616, %v616
      %v649 = vpack.c.b16 %v617, %v617
      %v650 = vpack.c.b16 %v618, %v618
      %v651 = vpack.c.b16 %v619, %v619
      %v652 = vpack.c.b16 %v620, %v620
      %vm653 = vsmask.f32 7424
      %v655 = vshrl.u32 %v525, 16
      %v657 = vshll.u32 %v525, 16
      %v659 = vrot.slane %v657, 1
      %v660 = vor.u32 %v655, %v659
      %v662 = vshll.u32 %v621, 16
      %v664 = vrot.slane %v662, 1
      %v665 = vsel %vm653, %v660, %v664
      %v667 = vshrl.u32 %v526, 16
      %v669 = vshll.u32 %v526, 16
      %v671 = vrot.slane %v669, 1
      %v672 = vor.u32 %v667, %v671
      %v674 = vshll.u32 %v622, 16
      %v676 = vrot.slane %v674, 1
      %v677 = vsel %vm653, %v672, %v676
      %v679 = vshrl.u32 %v527, 16
      %v681 = vshll.u32 %v527, 16
      %v683 = vrot.slane %v681, 1
      %v684 = vor.u32 %v679, %v683
      %v686 = vshll.u32 %v623, 16
      %v688 = vrot.slane %v686, 1
      %v689 = vsel %vm653, %v684, %v688
      %v691 = vshrl.u32 %v528, 16
      %v693 = vshll.u32 %v528, 16
      %v695 = vrot.slane %v693, 1
      %v696 = vor.u32 %v691, %v695
      %v698 = vshll.u32 %v624, 16
      %v700 = vrot.slane %v698, 1
      %v701 = vsel %vm653, %v696, %v700
      %v703 = vshrl.u32 %v529, 16
      %v705 = vshll.u32 %v529, 16
      %v707 = vrot.slane %v705, 1
      %v708 = vor.u32 %v703, %v707
      %v710 = vshll.u32 %v625, 16
      %v712 = vrot.slane %v710, 1
      %v713 = vsel %vm653, %v708, %v712
      %v715 = vshrl.u32 %v530, 16
      %v717 = vshll.u32 %v530, 16
      %v719 = vrot.slane %v717, 1
      %v720 = vor.u32 %v715, %v719
      %v722 = vshll.u32 %v626, 16
      %v724 = vrot.slane %v722, 1
      %v725 = vsel %vm653, %v720, %v724
      %v727 = vshrl.u32 %v531, 16
      %v729 = vshll.u32 %v531, 16
      %v731 = vrot.slane %v729, 1
      %v732 = vor.u32 %v727, %v731
      %v734 = vshll.u32 %v627, 16
      %v736 = vrot.slane %v734, 1
      %v737 = vsel %vm653, %v732, %v736
      %v739 = vshrl.u32 %v532, 16
      %v741 = vshll.u32 %v532, 16
      %v743 = vrot.slane %v741, 1
      %v744 = vor.u32 %v739, %v743
      %v746 = vshll.u32 %v628, 16
      %v748 = vrot.slane %v746, 1
      %v749 = vsel %vm653, %v744, %v748
      %v751 = vshrl.u32 %v533, 16
      %v753 = vshll.u32 %v533, 16
      %v755 = vrot.slane %v753, 1
      %v756 = vor.u32 %v751, %v755
      %v758 = vshll.u32 %v629, 16
      %v760 = vrot.slane %v758, 1
      %v761 = vsel %vm653, %v756, %v760
      %v763 = vshrl.u32 %v534, 16
      %v765 = vshll.u32 %v534, 16
      %v767 = vrot.slane %v765, 1
      %v768 = vor.u32 %v763, %v767
      %v770 = vshll.u32 %v630, 16
      %v772 = vrot.slane %v770, 1
      %v773 = vsel %vm653, %v768, %v772
      %v775 = vshrl.u32 %v535, 16
      %v777 = vshll.u32 %v535, 16
      %v779 = vrot.slane %v777, 1
      %v780 = vor.u32 %v775, %v779
      %v782 = vshll.u32 %v631, 16
      %v784 = vrot.slane %v782, 1
      %v785 = vsel %vm653, %v780, %v784
      %v787 = vshrl.u32 %v536, 16
      %v789 = vshll.u32 %v536, 16
      %v791 = vrot.slane %v789, 1
      %v792 = vor.u32 %v787, %v791
      %v794 = vshll.u32 %v632, 16
      %v796 = vrot.slane %v794, 1
      %v797 = vsel %vm653, %v792, %v796
      %v799 = vshrl.u32 %v537, 16
      %v801 = vshll.u32 %v537, 16
      %v803 = vrot.slane %v801, 1
      %v804 = vor.u32 %v799, %v803
      %v806 = vshll.u32 %v633, 16
      %v808 = vrot.slane %v806, 1
      %v809 = vsel %vm653, %v804, %v808
      %v811 = vshrl.u32 %v538, 16
      %v813 = vshll.u32 %v538, 16
      %v815 = vrot.slane %v813, 1
      %v816 = vor.u32 %v811, %v815
      %v818 = vshll.u32 %v634, 16
      %v820 = vrot.slane %v818, 1
      %v821 = vsel %vm653, %v816, %v820
      %v823 = vshrl.u32 %v539, 16
      %v825 = vshll.u32 %v539, 16
      %v827 = vrot.slane %v825, 1
      %v828 = vor.u32 %v823, %v827
      %v830 = vshll.u32 %v635, 16
      %v832 = vrot.slane %v830, 1
      %v833 = vsel %vm653, %v828, %v832
      %v835 = vshrl.u32 %v540, 16
      %v837 = vshll.u32 %v540, 16
      %v839 = vrot.slane %v837, 1
      %v840 = vor.u32 %v835, %v839
      %v842 = vshll.u32 %v636, 16
      %v844 = vrot.slane %v842, 1
      %v845 = vsel %vm653, %v840, %v844
      %v847 = vshrl.u32 %v541, 16
      %v849 = vshll.u32 %v541, 16
      %v851 = vrot.slane %v849, 1
      %v852 = vor.u32 %v847, %v851
      %v854 = vshll.u32 %v637, 16
      %v856 = vrot.slane %v854, 1
      %v857 = vsel %vm653, %v852, %v856
      %v859 = vshrl.u32 %v542, 16
      %v861 = vshll.u32 %v542, 16
      %v863 = vrot.slane %v861, 1
      %v864 = vor.u32 %v859, %v863
      %v866 = vshll.u32 %v638, 16
      %v868 = vrot.slane %v866, 1
      %v869 = vsel %vm653, %v864, %v868
      %v871 = vshrl.u32 %v543, 16
      %v873 = vshll.u32 %v543, 16
      %v875 = vrot.slane %v873, 1
      %v876 = vor.u32 %v871, %v875
      %v878 = vshll.u32 %v639, 16
      %v880 = vrot.slane %v878, 1
      %v881 = vsel %vm653, %v876, %v880
      %v883 = vshrl.u32 %v544, 16
      %v885 = vshll.u32 %v544, 16
      %v887 = vrot.slane %v885, 1
      %v888 = vor.u32 %v883, %v887
      %v890 = vshll.u32 %v640, 16
      %v892 = vrot.slane %v890, 1
      %v893 = vsel %vm653, %v888, %v892
      %v895 = vshrl.u32 %v545, 16
      %v897 = vshll.u32 %v545, 16
      %v899 = vrot.slane %v897, 1
      %v900 = vor.u32 %v895, %v899
      %v902 = vshll.u32 %v641, 16
      %v904 = vrot.slane %v902, 1
      %v905 = vsel %vm653, %v900, %v904
      %v907 = vshrl.u32 %v546, 16
      %v909 = vshll.u32 %v546, 16
      %v911 = vrot.slane %v909, 1
      %v912 = vor.u32 %v907, %v911
      %v914 = vshll.u32 %v642, 16
      %v916 = vrot.slane %v914, 1
      %v917 = vsel %vm653, %v912, %v916
      %v919 = vshrl.u32 %v547, 16
      %v921 = vshll.u32 %v547, 16
      %v923 = vrot.slane %v921, 1
      %v924 = vor.u32 %v919, %v923
      %v926 = vshll.u32 %v643, 16
      %v928 = vrot.slane %v926, 1
      %v929 = vsel %vm653, %v924, %v928
      %v931 = vshrl.u32 %v548, 16
      %v933 = vshll.u32 %v548, 16
      %v935 = vrot.slane %v933, 1
      %v936 = vor.u32 %v931, %v935
      %v938 = vshll.u32 %v644, 16
      %v940 = vrot.slane %v938, 1
      %v941 = vsel %vm653, %v936, %v940
      %v943 = vshrl.u32 %v549, 16
      %v945 = vshll.u32 %v549, 16
      %v947 = vrot.slane %v945, 1
      %v948 = vor.u32 %v943, %v947
      %v950 = vshll.u32 %v645, 16
      %v952 = vrot.slane %v950, 1
      %v953 = vsel %vm653, %v948, %v952
      %v955 = vshrl.u32 %v550, 16
      %v957 = vshll.u32 %v550, 16
      %v959 = vrot.slane %v957, 1
      %v960 = vor.u32 %v955, %v959
      %v962 = vshll.u32 %v646, 16
      %v964 = vrot.slane %v962, 1
      %v965 = vsel %vm653, %v960, %v964
      %v967 = vshrl.u32 %v551, 16
      %v969 = vshll.u32 %v551, 16
      %v971 = vrot.slane %v969, 1
      %v972 = vor.u32 %v967, %v971
      %v974 = vshll.u32 %v647, 16
      %v976 = vrot.slane %v974, 1
      %v977 = vsel %vm653, %v972, %v976
      %v979 = vshrl.u32 %v552, 16
      %v981 = vshll.u32 %v552, 16
      %v983 = vrot.slane %v981, 1
      %v984 = vor.u32 %v979, %v983
      %v986 = vshll.u32 %v648, 16
      %v988 = vrot.slane %v986, 1
      %v989 = vsel %vm653, %v984, %v988
      %v991 = vshrl.u32 %v553, 16
      %v993 = vshll.u32 %v553, 16
      %v995 = vrot.slane %v993, 1
      %v996 = vor.u32 %v991, %v995
      %v998 = vshll.u32 %v649, 16
      %v1000 = vrot.slane %v998, 1
      %v1001 = vsel %vm653, %v996, %v1000
      %v1003 = vshrl.u32 %v554, 16
      %v1005 = vshll.u32 %v554, 16
      %v1007 = vrot.slane %v1005, 1
      %v1008 = vor.u32 %v1003, %v1007
      %v1010 = vshll.u32 %v650, 16
      %v1012 = vrot.slane %v1010, 1
      %v1013 = vsel %vm653, %v1008, %v1012
      %v1015 = vshrl.u32 %v555, 16
      %v1017 = vshll.u32 %v555, 16
      %v1019 = vrot.slane %v1017, 1
      %v1020 = vor.u32 %v1015, %v1019
      %v1022 = vshll.u32 %v651, 16
      %v1024 = vrot.slane %v1022, 1
      %v1025 = vsel %vm653, %v1020, %v1024
      %v1027 = vshrl.u32 %v556, 16
      %v1029 = vshll.u32 %v556, 16
      %v1031 = vrot.slane %v1029, 1
      %v1032 = vor.u32 %v1027, %v1031
      %v1034 = vshll.u32 %v652, 16
      %v1036 = vrot.slane %v1034, 1
      %v1037 = vsel %vm653, %v1032, %v1036
      %1038 = vrot.lane.b32.xlu0 %v665, 16
      %v1039 = vpop.permute.xlu0 %1038
      %1040 = vrot.lane.b32.xlu0 %v677, 16
      %v1041 = vpop.permute.xlu0 %1040
      %1042 = vrot.lane.b32.xlu0 %v689, 16
      %v1043 = vpop.permute.xlu0 %1042
      %1044 = vrot.lane.b32.xlu0 %v701, 16
      %v1045 = vpop.permute.xlu0 %1044
      %1046 = vrot.lane.b32.xlu0 %v713, 16
      %v1047 = vpop.permute.xlu0 %1046
      %1048 = vrot.lane.b32.xlu0 %v725, 16
      %v1049 = vpop.permute.xlu0 %1048
      %1050 = vrot.lane.b32.xlu0 %v737, 16
      %v1051 = vpop.permute.xlu0 %1050
      %1052 = vrot.lane.b32.xlu0 %v749, 16
      %v1053 = vpop.permute.xlu0 %1052
      %1054 = vrot.lane.b32.xlu0 %v761, 16
      %v1055 = vpop.permute.xlu0 %1054
      %1056 = vrot.lane.b32.xlu0 %v773, 16
      %v1057 = vpop.permute.xlu0 %1056
      %1058 = vrot.lane.b32.xlu0 %v785, 16
      %v1059 = vpop.permute.xlu0 %1058
      %1060 = vrot.lane.b32.xlu0 %v797, 16
      %v1061 = vpop.permute.xlu0 %1060
      %1062 = vrot.lane.b32.xlu0 %v809, 16
      %v1063 = vpop.permute.xlu0 %1062
      %1064 = vrot.lane.b32.xlu0 %v821, 16
      %v1065 = vpop.permute.xlu0 %1064
      %1066 = vrot.lane.b32.xlu0 %v833, 16
      %v1067 = vpop.permute.xlu0 %1066
      %1068 = vrot.lane.b32.xlu0 %v845, 16
      %v1069 = vpop.permute.xlu0 %1068
      %1070 = vrot.lane.b32.xlu0 %v857, 16
      %v1071 = vpop.permute.xlu0 %1070
      %1072 = vrot.lane.b32.xlu0 %v869, 16
      %v1073 = vpop.permute.xlu0 %1072
      %1074 = vrot.lane.b32.xlu0 %v881, 16
      %v1075 = vpop.permute.xlu0 %1074
      %1076 = vrot.lane.b32.xlu0 %v893, 16
      %v1077 = vpop.permute.xlu0 %1076
      %1078 = vrot.lane.b32.xlu0 %v905, 16
      %v1079 = vpop.permute.xlu0 %1078
      %1080 = vrot.lane.b32.xlu0 %v917, 16
      %v1081 = vpop.permute.xlu0 %1080
      %1082 = vrot.lane.b32.xlu0 %v929, 16
      %v1083 = vpop.permute.xlu0 %1082
      %1084 = vrot.lane.b32.xlu0 %v941, 16
      %v1085 = vpop.permute.xlu0 %1084
      %1086 = vrot.lane.b32.xlu0 %v953, 16
      %v1087 = vpop.permute.xlu0 %1086
      %1088 = vrot.lane.b32.xlu0 %v965, 16
      %v1089 = vpop.permute.xlu0 %1088
      %1090 = vrot.lane.b32.xlu0 %v977, 16
      %v1091 = vpop.permute.xlu0 %1090
      %1092 = vrot.lane.b32.xlu0 %v989, 16
      %v1093 = vpop.permute.xlu0 %1092
      %1094 = vrot.lane.b32.xlu0 %v1001, 16
      %v1095 = vpop.permute.xlu0 %1094
      %1096 = vrot.lane.b32.xlu0 %v1013, 16
      %v1097 = vpop.permute.xlu0 %1096
      %1098 = vrot.lane.b32.xlu0 %v1025, 16
      %v1099 = vpop.permute.xlu0 %1098
      %1100 = vrot.lane.b32.xlu0 %v1037, 16
      %v1101 = vpop.permute.xlu0 %1100
      %vm1102 = vcmask 1046528
      %v1103 = vrot.slane %v525, 1
      %v1104 = vrot.slane %v621, 1
      %v1105 = vsel %vm1102, %v1103, %v1104
      %v1106 = vrot.slane %v526, 1
      %v1107 = vrot.slane %v622, 1
      %v1108 = vsel %vm1102, %v1106, %v1107
      %v1109 = vrot.slane %v527, 1
      %v1110 = vrot.slane %v623, 1
      %v1111 = vsel %vm1102, %v1109, %v1110
      %v1112 = vrot.slane %v528, 1
      %v1113 = vrot.slane %v624, 1
      %v1114 = vsel %vm1102, %v1112, %v1113
      %v1115 = vrot.slane %v529, 1
      %v1116 = vrot.slane %v625, 1
      %v1117 = vsel %vm1102, %v1115, %v1116
      %v1118 = vrot.slane %v530, 1
      %v1119 = vrot.slane %v626, 1
      %v1120 = vsel %vm1102, %v1118, %v1119
      %v1121 = vrot.slane %v531, 1
      %v1122 = vrot.slane %v627, 1
      %v1123 = vsel %vm1102, %v1121, %v1122
      %v1124 = vrot.slane %v532, 1
      %v1125 = vrot.slane %v628, 1
      %v1126 = vsel %vm1102, %v1124, %v1125
      %v1127 = vrot.slane %v533, 1
      %v1128 = vrot.slane %v629, 1
      %v1129 = vsel %vm1102, %v1127, %v1128
      %v1130 = vrot.slane %v534, 1
      %v1131 = vrot.slane %v630, 1
      %v1132 = vsel %vm1102, %v1130, %v1131
      %v1133 = vrot.slane %v535, 1
      %v1134 = vrot.slane %v631, 1
      %v1135 = vsel %vm1102, %v1133, %v1134
      %v1136 = vrot.slane %v536, 1
      %v1137 = vrot.slane %v632, 1
      %v1138 = vsel %vm1102, %v1136, %v1137
      %v1139 = vrot.slane %v537, 1
      %v1140 = vrot.slane %v633, 1
      %v1141 = vsel %vm1102, %v1139, %v1140
      %v1142 = vrot.slane %v538, 1
      %v1143 = vrot.slane %v634, 1
      %v1144 = vsel %vm1102, %v1142, %v1143
      %v1145 = vrot.slane %v539, 1
      %v1146 = vrot.slane %v635, 1
      %v1147 = vsel %vm1102, %v1145, %v1146
      %v1148 = vrot.slane %v540, 1
      %v1149 = vrot.slane %v636, 1
      %v1150 = vsel %vm1102, %v1148, %v1149
      %v1151 = vrot.slane %v541, 1
      %v1152 = vrot.slane %v637, 1
      %v1153 = vsel %vm1102, %v1151, %v1152
      %v1154 = vrot.slane %v542, 1
      %v1155 = vrot.slane %v638, 1
      %v1156 = vsel %vm1102, %v1154, %v1155
      %v1157 = vrot.slane %v543, 1
      %v1158 = vrot.slane %v639, 1
      %v1159 = vsel %vm1102, %v1157, %v1158
      %v1160 = vrot.slane %v544, 1
      %v1161 = vrot.slane %v640, 1
      %v1162 = vsel %vm1102, %v1160, %v1161
      %v1163 = vrot.slane %v545, 1
      %v1164 = vrot.slane %v641, 1
      %v1165 = vsel %vm1102, %v1163, %v1164
      %v1166 = vrot.slane %v546, 1
      %v1167 = vrot.slane %v642, 1
      %v1168 = vsel %vm1102, %v1166, %v1167
      %v1169 = vrot.slane %v547, 1
      %v1170 = vrot.slane %v643, 1
      %v1171 = vsel %vm1102, %v1169, %v1170
      %v1172 = vrot.slane %v548, 1
      %v1173 = vrot.slane %v644, 1
      %v1174 = vsel %vm1102, %v1172, %v1173
      %v1175 = vrot.slane %v549, 1
      %v1176 = vrot.slane %v645, 1
      %v1177 = vsel %vm1102, %v1175, %v1176
      %v1178 = vrot.slane %v550, 1
      %v1179 = vrot.slane %v646, 1
      %v1180 = vsel %vm1102, %v1178, %v1179
      %v1181 = vrot.slane %v551, 1
      %v1182 = vrot.slane %v647, 1
      %v1183 = vsel %vm1102, %v1181, %v1182
      %v1184 = vrot.slane %v552, 1
      %v1185 = vrot.slane %v648, 1
      %v1186 = vsel %vm1102, %v1184, %v1185
      %v1187 = vrot.slane %v553, 1
      %v1188 = vrot.slane %v649, 1
      %v1189 = vsel %vm1102, %v1187, %v1188
      %v1190 = vrot.slane %v554, 1
      %v1191 = vrot.slane %v650, 1
      %v1192 = vsel %vm1102, %v1190, %v1191
      %v1193 = vrot.slane %v555, 1
      %v1194 = vrot.slane %v651, 1
      %v1195 = vsel %vm1102, %v1193, %v1194
      %v1196 = vrot.slane %v556, 1
      %v1197 = vrot.slane %v652, 1
      %v1198 = vsel %vm1102, %v1196, %v1197
      %1199 = vrot.lane.b32.xlu0 %v1105, 32
      %v1200 = vpop.permute.xlu0 %1199
      %1201 = vrot.lane.b32.xlu0 %v1108, 32
      %v1202 = vpop.permute.xlu0 %1201
      %1203 = vrot.lane.b32.xlu0 %v1111, 32
      %v1204 = vpop.permute.xlu0 %1203
      %1205 = vrot.lane.b32.xlu0 %v1114, 32
      %v1206 = vpop.permute.xlu0 %1205
      %1207 = vrot.lane.b32.xlu0 %v1117, 32
      %v1208 = vpop.permute.xlu0 %1207
      %1209 = vrot.lane.b32.xlu0 %v1120, 32
      %v1210 = vpop.permute.xlu0 %1209
      %1211 = vrot.lane.b32.xlu0 %v1123, 32
      %v1212 = vpop.permute.xlu0 %1211
      %1213 = vrot.lane.b32.xlu0 %v1126, 32
      %v1214 = vpop.permute.xlu0 %1213
      %1215 = vrot.lane.b32.xlu0 %v1129, 32
      %v1216 = vpop.permute.xlu0 %1215
      %1217 = vrot.lane.b32.xlu0 %v1132, 32
      %v1218 = vpop.permute.xlu0 %1217
      %1219 = vrot.lane.b32.xlu0 %v1135, 32
      %v1220 = vpop.permute.xlu0 %1219
      %1221 = vrot.lane.b32.xlu0 %v1138, 32
      %v1222 = vpop.permute.xlu0 %1221
      %1223 = vrot.lane.b32.xlu0 %v1141, 32
      %v1224 = vpop.permute.xlu0 %1223
      %1225 = vrot.lane.b32.xlu0 %v1144, 32
      %v1226 = vpop.permute.xlu0 %1225
      %1227 = vrot.lane.b32.xlu0 %v1147, 32
      %v1228 = vpop.permute.xlu0 %1227
      %1229 = vrot.lane.b32.xlu0 %v1150, 32
      %v1230 = vpop.permute.xlu0 %1229
      %1231 = vrot.lane.b32.xlu0 %v1153, 32
      %v1232 = vpop.permute.xlu0 %1231
      %1233 = vrot.lane.b32.xlu0 %v1156, 32
      %v1234 = vpop.permute.xlu0 %1233
      %1235 = vrot.lane.b32.xlu0 %v1159, 32
      %v1236 = vpop.permute.xlu0 %1235
      %1237 = vrot.lane.b32.xlu0 %v1162, 32
      %v1238 = vpop.permute.xlu0 %1237
      %1239 = vrot.lane.b32.xlu0 %v1165, 32
      %v1240 = vpop.permute.xlu0 %1239
      %1241 = vrot.lane.b32.xlu0 %v1168, 32
      %v1242 = vpop.permute.xlu0 %1241
      %1243 = vrot.lane.b32.xlu0 %v1171, 32
      %v1244 = vpop.permute.xlu0 %1243
      %1245 = vrot.lane.b32.xlu0 %v1174, 32
      %v1246 = vpop.permute.xlu0 %1245
      %1247 = vrot.lane.b32.xlu0 %v1177, 32
      %v1248 = vpop.permute.xlu0 %1247
      %1249 = vrot.lane.b32.xlu0 %v1180, 32
      %v1250 = vpop.permute.xlu0 %1249
      %1251 = vrot.lane.b32.xlu0 %v1183, 32
      %v1252 = vpop.permute.xlu0 %1251
      %1253 = vrot.lane.b32.xlu0 %v1186, 32
      %v1254 = vpop.permute.xlu0 %1253
      %1255 = vrot.lane.b32.xlu0 %v1189, 32
      %v1256 = vpop.permute.xlu0 %1255
      %1257 = vrot.lane.b32.xlu0 %v1192, 32
      %v1258 = vpop.permute.xlu0 %1257
      %1259 = vrot.lane.b32.xlu0 %v1195, 32
      %v1260 = vpop.permute.xlu0 %1259
      %1261 = vrot.lane.b32.xlu0 %v1198, 32
      %v1262 = vpop.permute.xlu0 %1261
      %vm1263 = vsmask.f32 6400
      %v1264 = vrot.slane %v655, 1
      %v1265 = vrot.slane %v657, 2
      %v1266 = vor.u32 %v1264, %v1265
      %v1267 = vshrl.u32 %v621, 16
      %v1269 = vrot.slane %v1267, 1
      %v1270 = vrot.slane %v662, 2
      %v1271 = vor.u32 %v1269, %v1270
      %v1272 = vsel %vm1263, %v1266, %v1271
      %v1273 = vrot.slane %v667, 1
      %v1274 = vrot.slane %v669, 2
      %v1275 = vor.u32 %v1273, %v1274
      %v1276 = vshrl.u32 %v622, 16
      %v1278 = vrot.slane %v1276, 1
      %v1279 = vrot.slane %v674, 2
      %v1280 = vor.u32 %v1278, %v1279
      %v1281 = vsel %vm1263, %v1275, %v1280
      %v1282 = vrot.slane %v679, 1
      %v1283 = vrot.slane %v681, 2
      %v1284 = vor.u32 %v1282, %v1283
      %v1285 = vshrl.u32 %v623, 16
      %v1287 = vrot.slane %v1285, 1
      %v1288 = vrot.slane %v686, 2
      %v1289 = vor.u32 %v1287, %v1288
      %v1290 = vsel %vm1263, %v1284, %v1289
      %v1291 = vrot.slane %v691, 1
      %v1292 = vrot.slane %v693, 2
      %v1293 = vor.u32 %v1291, %v1292
      %v1294 = vshrl.u32 %v624, 16
      %v1296 = vrot.slane %v1294, 1
      %v1297 = vrot.slane %v698, 2
      %v1298 = vor.u32 %v1296, %v1297
      %v1299 = vsel %vm1263, %v1293, %v1298
      %v1300 = vrot.slane %v703, 1
      %v1301 = vrot.slane %v705, 2
      %v1302 = vor.u32 %v1300, %v1301
      %v1303 = vshrl.u32 %v625, 16
      %v1305 = vrot.slane %v1303, 1
      %v1306 = vrot.slane %v710, 2
      %v1307 = vor.u32 %v1305, %v1306
      %v1308 = vsel %vm1263, %v1302, %v1307
      %v1309 = vrot.slane %v715, 1
      %v1310 = vrot.slane %v717, 2
      %v1311 = vor.u32 %v1309, %v1310
      %v1312 = vshrl.u32 %v626, 16
      %v1314 = vrot.slane %v1312, 1
      %v1315 = vrot.slane %v722, 2
      %v1316 = vor.u32 %v1314, %v1315
      %v1317 = vsel %vm1263, %v1311, %v1316
      %v1318 = vrot.slane %v727, 1
      %v1319 = vrot.slane %v729, 2
      %v1320 = vor.u32 %v1318, %v1319
      %v1321 = vshrl.u32 %v627, 16
      %v1323 = vrot.slane %v1321, 1
      %v1324 = vrot.slane %v734, 2
      %v1325 = vor.u32 %v1323, %v1324
      %v1326 = vsel %vm1263, %v1320, %v1325
      %v1327 = vrot.slane %v739, 1
      %v1328 = vrot.slane %v741, 2
      %v1329 = vor.u32 %v1327, %v1328
      %v1330 = vshrl.u32 %v628, 16
      %v1332 = vrot.slane %v1330, 1
      %v1333 = vrot.slane %v746, 2
      %v1334 = vor.u32 %v1332, %v1333
      %v1335 = vsel %vm1263, %v1329, %v1334
      %v1336 = vrot.slane %v751, 1
      %v1337 = vrot.slane %v753, 2
      %v1338 = vor.u32 %v1336, %v1337
      %v1339 = vshrl.u32 %v629, 16
      %v1341 = vrot.slane %v1339, 1
      %v1342 = vrot.slane %v758, 2
      %v1343 = vor.u32 %v1341, %v1342
      %v1344 = vsel %vm1263, %v1338, %v1343
      %v1345 = vrot.slane %v763, 1
      %v1346 = vrot.slane %v765, 2
      %v1347 = vor.u32 %v1345, %v1346
      %v1348 = vshrl.u32 %v630, 16
      %v1350 = vrot.slane %v1348, 1
      %v1351 = vrot.slane %v770, 2
      %v1352 = vor.u32 %v1350, %v1351
      %v1353 = vsel %vm1263, %v1347, %v1352
      %v1354 = vrot.slane %v775, 1
      %v1355 = vrot.slane %v777, 2
      %v1356 = vor.u32 %v1354, %v1355
      %v1357 = vshrl.u32 %v631, 16
      %v1359 = vrot.slane %v1357, 1
      %v1360 = vrot.slane %v782, 2
      %v1361 = vor.u32 %v1359, %v1360
      %v1362 = vsel %vm1263, %v1356, %v1361
      %v1363 = vrot.slane %v787, 1
      %v1364 = vrot.slane %v789, 2
      %v1365 = vor.u32 %v1363, %v1364
      %v1366 = vshrl.u32 %v632, 16
      %v1368 = vrot.slane %v1366, 1
      %v1369 = vrot.slane %v794, 2
      %v1370 = vor.u32 %v1368, %v1369
      %v1371 = vsel %vm1263, %v1365, %v1370
      %v1372 = vrot.slane %v799, 1
      %v1373 = vrot.slane %v801, 2
      %v1374 = vor.u32 %v1372, %v1373
      %v1375 = vshrl.u32 %v633, 16
      %v1377 = vrot.slane %v1375, 1
      %v1378 = vrot.slane %v806, 2
      %v1379 = vor.u32 %v1377, %v1378
      %v1380 = vsel %vm1263, %v1374, %v1379
      %v1381 = vrot.slane %v811, 1
      %v1382 = vrot.slane %v813, 2
      %v1383 = vor.u32 %v1381, %v1382
      %v1384 = vshrl.u32 %v634, 16
      %v1386 = vrot.slane %v1384, 1
      %v1387 = vrot.slane %v818, 2
      %v1388 = vor.u32 %v1386, %v1387
      %v1389 = vsel %vm1263, %v1383, %v1388
      %v1390 = vrot.slane %v823, 1
      %v1391 = vrot.slane %v825, 2
      %v1392 = vor.u32 %v1390, %v1391
      %v1393 = vshrl.u32 %v635, 16
      %v1395 = vrot.slane %v1393, 1
      %v1396 = vrot.slane %v830, 2
      %v1397 = vor.u32 %v1395, %v1396
      %v1398 = vsel %vm1263, %v1392, %v1397
      %v1399 = vrot.slane %v835, 1
      %v1400 = vrot.slane %v837, 2
      %v1401 = vor.u32 %v1399, %v1400
      %v1402 = vshrl.u32 %v636, 16
      %v1404 = vrot.slane %v1402, 1
      %v1405 = vrot.slane %v842, 2
      %v1406 = vor.u32 %v1404, %v1405
      %v1407 = vsel %vm1263, %v1401, %v1406
      %v1408 = vrot.slane %v847, 1
      %v1409 = vrot.slane %v849, 2
      %v1410 = vor.u32 %v1408, %v1409
      %v1411 = vshrl.u32 %v637, 16
      %v1413 = vrot.slane %v1411, 1
      %v1414 = vrot.slane %v854, 2
      %v1415 = vor.u32 %v1413, %v1414
      %v1416 = vsel %vm1263, %v1410, %v1415
      %v1417 = vrot.slane %v859, 1
      %v1418 = vrot.slane %v861, 2
      %v1419 = vor.u32 %v1417, %v1418
      %v1420 = vshrl.u32 %v638, 16
      %v1422 = vrot.slane %v1420, 1
      %v1423 = vrot.slane %v866, 2
      %v1424 = vor.u32 %v1422, %v1423
      %v1425 = vsel %vm1263, %v1419, %v1424
      %v1426 = vrot.slane %v871, 1
      %v1427 = vrot.slane %v873, 2
      %v1428 = vor.u32 %v1426, %v1427
      %v1429 = vshrl.u32 %v639, 16
      %v1431 = vrot.slane %v1429, 1
      %v1432 = vrot.slane %v878, 2
      %v1433 = vor.u32 %v1431, %v1432
      %v1434 = vsel %vm1263, %v1428, %v1433
      %v1435 = vrot.slane %v883, 1
      %v1436 = vrot.slane %v885, 2
      %v1437 = vor.u32 %v1435, %v1436
      %v1438 = vshrl.u32 %v640, 16
      %v1440 = vrot.slane %v1438, 1
      %v1441 = vrot.slane %v890, 2
      %v1442 = vor.u32 %v1440, %v1441
      %v1443 = vsel %vm1263, %v1437, %v1442
      %v1444 = vrot.slane %v895, 1
      %v1445 = vrot.slane %v897, 2
      %v1446 = vor.u32 %v1444, %v1445
      %v1447 = vshrl.u32 %v641, 16
      %v1449 = vrot.slane %v1447, 1
      %v1450 = vrot.slane %v902, 2
      %v1451 = vor.u32 %v1449, %v1450
      %v1452 = vsel %vm1263, %v1446, %v1451
      %v1453 = vrot.slane %v907, 1
      %v1454 = vrot.slane %v909, 2
      %v1455 = vor.u32 %v1453, %v1454
      %v1456 = vshrl.u32 %v642, 16
      %v1458 = vrot.slane %v1456, 1
      %v1459 = vrot.slane %v914, 2
      %v1460 = vor.u32 %v1458, %v1459
      %v1461 = vsel %vm1263, %v1455, %v1460
      %v1462 = vrot.slane %v919, 1
      %v1463 = vrot.slane %v921, 2
      %v1464 = vor.u32 %v1462, %v1463
      %v1465 = vshrl.u32 %v643, 16
      %v1467 = vrot.slane %v1465, 1
      %v1468 = vrot.slane %v926, 2
      %v1469 = vor.u32 %v1467, %v1468
      %v1470 = vsel %vm1263, %v1464, %v1469
      %v1471 = vrot.slane %v931, 1
      %v1472 = vrot.slane %v933, 2
      %v1473 = vor.u32 %v1471, %v1472
      %v1474 = vshrl.u32 %v644, 16
      %v1476 = vrot.slane %v1474, 1
      %v1477 = vrot.slane %v938, 2
      %v1478 = vor.u32 %v1476, %v1477
      %v1479 = vsel %vm1263, %v1473, %v1478
      %v1480 = vrot.slane %v943, 1
      %v1481 = vrot.slane %v945, 2
      %v1482 = vor.u32 %v1480, %v1481
      %v1483 = vshrl.u32 %v645, 16
      %v1485 = vrot.slane %v1483, 1
      %v1486 = vrot.slane %v950, 2
      %v1487 = vor.u32 %v1485, %v1486
      %v1488 = vsel %vm1263, %v1482, %v1487
      %v1489 = vrot.slane %v955, 1
      %v1490 = vrot.slane %v957, 2
      %v1491 = vor.u32 %v1489, %v1490
      %v1492 = vshrl.u32 %v646, 16
      %v1494 = vrot.slane %v1492, 1
      %v1495 = vrot.slane %v962, 2
      %v1496 = vor.u32 %v1494, %v1495
      %v1497 = vsel %vm1263, %v1491, %v1496
      %v1498 = vrot.slane %v967, 1
      %v1499 = vrot.slane %v969, 2
      %v1500 = vor.u32 %v1498, %v1499
      %v1501 = vshrl.u32 %v647, 16
      %v1503 = vrot.slane %v1501, 1
      %v1504 = vrot.slane %v974, 2
      %v1505 = vor.u32 %v1503, %v1504
      %v1506 = vsel %vm1263, %v1500, %v1505
      %v1507 = vrot.slane %v979, 1
      %v1508 = vrot.slane %v981, 2
      %v1509 = vor.u32 %v1507, %v1508
      %v1510 = vshrl.u32 %v648, 16
      %v1512 = vrot.slane %v1510, 1
      %v1513 = vrot.slane %v986, 2
      %v1514 = vor.u32 %v1512, %v1513
      %v1515 = vsel %vm1263, %v1509, %v1514
      %v1516 = vrot.slane %v991, 1
      %v1517 = vrot.slane %v993, 2
      %v1518 = vor.u32 %v1516, %v1517
      %v1519 = vshrl.u32 %v649, 16
      %v1521 = vrot.slane %v1519, 1
      %v1522 = vrot.slane %v998, 2
      %v1523 = vor.u32 %v1521, %v1522
      %v1524 = vsel %vm1263, %v1518, %v1523
      %v1525 = vrot.slane %v1003, 1
      %v1526 = vrot.slane %v1005, 2
      %v1527 = vor.u32 %v1525, %v1526
      %v1528 = vshrl.u32 %v650, 16
      %v1530 = vrot.slane %v1528, 1
      %v1531 = vrot.slane %v1010, 2
      %v1532 = vor.u32 %v1530, %v1531
      %v1533 = vsel %vm1263, %v1527, %v1532
      %v1534 = vrot.slane %v1015, 1
      %v1535 = vrot.slane %v1017, 2
      %v1536 = vor.u32 %v1534, %v1535
      %v1537 = vshrl.u32 %v651, 16
      %v1539 = vrot.slane %v1537, 1
      %v1540 = vrot.slane %v1022, 2
      %v1541 = vor.u32 %v1539, %v1540
      %v1542 = vsel %vm1263, %v1536, %v1541
      %v1543 = vrot.slane %v1027, 1
      %v1544 = vrot.slane %v1029, 2
      %v1545 = vor.u32 %v1543, %v1544
      %v1546 = vshrl.u32 %v652, 16
      %v1548 = vrot.slane %v1546, 1
      %v1549 = vrot.slane %v1034, 2
      %v1550 = vor.u32 %v1548, %v1549
      %v1551 = vsel %vm1263, %v1545, %v1550
      %1552 = vrot.lane.b32.xlu0 %v1272, 48
      %v1553 = vpop.permute.xlu0 %1552
      %1554 = vrot.lane.b32.xlu0 %v1281, 48
      %v1555 = vpop.permute.xlu0 %1554
      %1556 = vrot.lane.b32.xlu0 %v1290, 48
      %v1557 = vpop.permute.xlu0 %1556
      %1558 = vrot.lane.b32.xlu0 %v1299, 48
      %v1559 = vpop.permute.xlu0 %1558
      %1560 = vrot.lane.b32.xlu0 %v1308, 48
      %v1561 = vpop.permute.xlu0 %1560
      %1562 = vrot.lane.b32.xlu0 %v1317, 48
      %v1563 = vpop.permute.xlu0 %1562
      %1564 = vrot.lane.b32.xlu0 %v1326, 48
      %v1565 = vpop.permute.xlu0 %1564
      %1566 = vrot.lane.b32.xlu0 %v1335, 48
      %v1567 = vpop.permute.xlu0 %1566
      %1568 = vrot.lane.b32.xlu0 %v1344, 48
      %v1569 = vpop.permute.xlu0 %1568
      %1570 = vrot.lane.b32.xlu0 %v1353, 48
      %v1571 = vpop.permute.xlu0 %1570
      %1572 = vrot.lane.b32.xlu0 %v1362, 48
      %v1573 = vpop.permute.xlu0 %1572
      %1574 = vrot.lane.b32.xlu0 %v1371, 48
      %v1575 = vpop.permute.xlu0 %1574
      %1576 = vrot.lane.b32.xlu0 %v1380, 48
      %v1577 = vpop.permute.xlu0 %1576
      %1578 = vrot.lane.b32.xlu0 %v1389, 48
      %v1579 = vpop.permute.xlu0 %1578
      %1580 = vrot.lane.b32.xlu0 %v1398, 48
      %v1581 = vpop.permute.xlu0 %1580
      %1582 = vrot.lane.b32.xlu0 %v1407, 48
      %v1583 = vpop.permute.xlu0 %1582
      %1584 = vrot.lane.b32.xlu0 %v1416, 48
      %v1585 = vpop.permute.xlu0 %1584
      %1586 = vrot.lane.b32.xlu0 %v1425, 48
      %v1587 = vpop.permute.xlu0 %1586
      %1588 = vrot.lane.b32.xlu0 %v1434, 48
      %v1589 = vpop.permute.xlu0 %1588
      %1590 = vrot.lane.b32.xlu0 %v1443, 48
      %v1591 = vpop.permute.xlu0 %1590
      %1592 = vrot.lane.b32.xlu0 %v1452, 48
      %v1593 = vpop.permute.xlu0 %1592
      %1594 = vrot.lane.b32.xlu0 %v1461, 48
      %v1595 = vpop.permute.xlu0 %1594
      %1596 = vrot.lane.b32.xlu0 %v1470, 48
      %v1597 = vpop.permute.xlu0 %1596
      %1598 = vrot.lane.b32.xlu0 %v1479, 48
      %v1599 = vpop.permute.xlu0 %1598
      %1600 = vrot.lane.b32.xlu0 %v1488, 48
      %v1601 = vpop.permute.xlu0 %1600
      %1602 = vrot.lane.b32.xlu0 %v1497, 48
      %v1603 = vpop.permute.xlu0 %1602
      %1604 = vrot.lane.b32.xlu0 %v1506, 48
      %v1605 = vpop.permute.xlu0 %1604
      %1606 = vrot.lane.b32.xlu0 %v1515, 48
      %v1607 = vpop.permute.xlu0 %1606
      %1608 = vrot.lane.b32.xlu0 %v1524, 48
      %v1609 = vpop.permute.xlu0 %1608
      %1610 = vrot.lane.b32.xlu0 %v1533, 48
      %v1611 = vpop.permute.xlu0 %1610
      %1612 = vrot.lane.b32.xlu0 %v1542, 48
      %v1613 = vpop.permute.xlu0 %1612
      %1614 = vrot.lane.b32.xlu0 %v1551, 48
      %v1615 = vpop.permute.xlu0 %1614
      %v1620 = vunpack.c.l.b16 %v331
      %v1621 = vunpack.c.l.b16 %v332
      %v1622 = vunpack.c.l.b16 %v388
      %v1623 = vunpack.c.l.b16 %v389
      %v1624 = vpack.c.b16 %v1621, %v1620
      %v1625 = vpack.c.b16 %v1623, %v1622
      %1626 = vrot.lane.b32.xlu0 %v526, 64
      %v1627 = vpop.permute.xlu0 %1626
      %1628 = vrot.lane.b32.xlu0 %v527, 64
      %v1629 = vpop.permute.xlu0 %1628
      %1630 = vrot.lane.b32.xlu0 %v528, 64
      %v1631 = vpop.permute.xlu0 %1630
      %1632 = vrot.lane.b32.xlu0 %v529, 64
      %v1633 = vpop.permute.xlu0 %1632
      %1634 = vrot.lane.b32.xlu0 %v530, 64
      %v1635 = vpop.permute.xlu0 %1634
      %1636 = vrot.lane.b32.xlu0 %v531, 64
      %v1637 = vpop.permute.xlu0 %1636
      %1638 = vrot.lane.b32.xlu0 %v532, 64
      %v1639 = vpop.permute.xlu0 %1638
      %1640 = vrot.lane.b32.xlu0 %v533, 64
      %v1641 = vpop.permute.xlu0 %1640
      %1642 = vrot.lane.b32.xlu0 %v534, 64
      %v1643 = vpop.permute.xlu0 %1642
      %1644 = vrot.lane.b32.xlu0 %v535, 64
      %v1645 = vpop.permute.xlu0 %1644
      %1646 = vrot.lane.b32.xlu0 %v536, 64
      %v1647 = vpop.permute.xlu0 %1646
      %1648 = vrot.lane.b32.xlu0 %v537, 64
      %v1649 = vpop.permute.xlu0 %1648
      %1650 = vrot.lane.b32.xlu0 %v538, 64
      %v1651 = vpop.permute.xlu0 %1650
      %1652 = vrot.lane.b32.xlu0 %v539, 64
      %v1653 = vpop.permute.xlu0 %1652
      %1654 = vrot.lane.b32.xlu0 %v540, 64
      %v1655 = vpop.permute.xlu0 %1654
      %1656 = vrot.lane.b32.xlu0 %v1624, 64
      %v1657 = vpop.permute.xlu0 %1656
      %1658 = vrot.lane.b32.xlu0 %v542, 64
      %v1659 = vpop.permute.xlu0 %1658
      %1660 = vrot.lane.b32.xlu0 %v543, 64
      %v1661 = vpop.permute.xlu0 %1660
      %1662 = vrot.lane.b32.xlu0 %v544, 64
      %v1663 = vpop.permute.xlu0 %1662
      %1664 = vrot.lane.b32.xlu0 %v545, 64
      %v1665 = vpop.permute.xlu0 %1664
      %1666 = vrot.lane.b32.xlu0 %v546, 64
      %v1667 = vpop.permute.xlu0 %1666
      %1668 = vrot.lane.b32.xlu0 %v547, 64
      %v1669 = vpop.permute.xlu0 %1668
      %1670 = vrot.lane.b32.xlu0 %v548, 64
      %v1671 = vpop.permute.xlu0 %1670
      %1672 = vrot.lane.b32.xlu0 %v549, 64
      %v1673 = vpop.permute.xlu0 %1672
      %1674 = vrot.lane.b32.xlu0 %v550, 64
      %v1675 = vpop.permute.xlu0 %1674
      %1676 = vrot.lane.b32.xlu0 %v551, 64
      %v1677 = vpop.permute.xlu0 %1676
      %1678 = vrot.lane.b32.xlu0 %v552, 64
      %v1679 = vpop.permute.xlu0 %1678
      %1680 = vrot.lane.b32.xlu0 %v553, 64
      %v1681 = vpop.permute.xlu0 %1680
      %1682 = vrot.lane.b32.xlu0 %v554, 64
      %v1683 = vpop.permute.xlu0 %1682
      %1684 = vrot.lane.b32.xlu0 %v555, 64
      %v1685 = vpop.permute.xlu0 %1684
      %1686 = vrot.lane.b32.xlu0 %v556, 64
      %v1687 = vpop.permute.xlu0 %1686
      %1688 = vrot.lane.b32.xlu0 %v1625, 64
      %v1689 = vpop.permute.xlu0 %1688
      %v1692 = vunpack.c.l.b16 %v333
      %v1693 = vunpack.c.l.b16 %v390
      %v1694 = vpack.c.b16 %v1692, %v1692
      %v1695 = vpack.c.b16 %v1693, %v1693
      %v1697 = vshrl.u32 %v1624, 16
      %v1699 = vshll.u32 %v1624, 16
      %v1701 = vrot.slane %v1699, 1
      %v1702 = vor.u32 %v1697, %v1701
      %v1704 = vshll.u32 %v1694, 16
      %v1706 = vrot.slane %v1704, 1
      %v1707 = vsel %vm653, %v1702, %v1706
      %v1709 = vshrl.u32 %v1625, 16
      %v1711 = vshll.u32 %v1625, 16
      %v1713 = vrot.slane %v1711, 1
      %v1714 = vor.u32 %v1709, %v1713
      %v1716 = vshll.u32 %v1695, 16
      %v1718 = vrot.slane %v1716, 1
      %v1719 = vsel %vm653, %v1714, %v1718
      %1720 = vrot.lane.b32.xlu0 %v677, 80
      %v1721 = vpop.permute.xlu0 %1720
      %1722 = vrot.lane.b32.xlu0 %v689, 80
      %v1723 = vpop.permute.xlu0 %1722
      %1724 = vrot.lane.b32.xlu0 %v701, 80
      %v1725 = vpop.permute.xlu0 %1724
      %1726 = vrot.lane.b32.xlu0 %v713, 80
      %v1727 = vpop.permute.xlu0 %1726
      %1728 = vrot.lane.b32.xlu0 %v725, 80
      %v1729 = vpop.permute.xlu0 %1728
      %1730 = vrot.lane.b32.xlu0 %v737, 80
      %v1731 = vpop.permute.xlu0 %1730
      %1732 = vrot.lane.b32.xlu0 %v749, 80
      %v1733 = vpop.permute.xlu0 %1732
      %1734 = vrot.lane.b32.xlu0 %v761, 80
      %v1735 = vpop.permute.xlu0 %1734
      %1736 = vrot.lane.b32.xlu0 %v773, 80
      %v1737 = vpop.permute.xlu0 %1736
      %1738 = vrot.lane.b32.xlu0 %v785, 80
      %v1739 = vpop.permute.xlu0 %1738
      %1740 = vrot.lane.b32.xlu0 %v797, 80
      %v1741 = vpop.permute.xlu0 %1740
      %1742 = vrot.lane.b32.xlu0 %v809, 80
      %v1743 = vpop.permute.xlu0 %1742
      %1744 = vrot.lane.b32.xlu0 %v821, 80
      %v1745 = vpop.permute.xlu0 %1744
      %1746 = vrot.lane.b32.xlu0 %v833, 80
      %v1747 = vpop.permute.xlu0 %1746
      %1748 = vrot.lane.b32.xlu0 %v845, 80
      %v1749 = vpop.permute.xlu0 %1748
      %1750 = vrot.lane.b32.xlu0 %v1707, 80
      %v1751 = vpop.permute.xlu0 %1750
      %1752 = vrot.lane.b32.xlu0 %v869, 80
      %v1753 = vpop.permute.xlu0 %1752
      %1754 = vrot.lane.b32.xlu0 %v881, 80
      %v1755 = vpop.permute.xlu0 %1754
      %1756 = vrot.lane.b32.xlu0 %v893, 80
      %v1757 = vpop.permute.xlu0 %1756
      %1758 = vrot.lane.b32.xlu0 %v905, 80
      %v1759 = vpop.permute.xlu0 %1758
      %1760 = vrot.lane.b32.xlu0 %v917, 80
      %v1761 = vpop.permute.xlu0 %1760
      %1762 = vrot.lane.b32.xlu0 %v929, 80
      %v1763 = vpop.permute.xlu0 %1762
      %1764 = vrot.lane.b32.xlu0 %v941, 80
      %v1765 = vpop.permute.xlu0 %1764
      %1766 = vrot.lane.b32.xlu0 %v953, 80
      %v1767 = vpop.permute.xlu0 %1766
      %1768 = vrot.lane.b32.xlu0 %v965, 80
      %v1769 = vpop.permute.xlu0 %1768
      %1770 = vrot.lane.b32.xlu0 %v977, 80
      %v1771 = vpop.permute.xlu0 %1770
      %1772 = vrot.lane.b32.xlu0 %v989, 80
      %v1773 = vpop.permute.xlu0 %1772
      %1774 = vrot.lane.b32.xlu0 %v1001, 80
      %v1775 = vpop.permute.xlu0 %1774
      %1776 = vrot.lane.b32.xlu0 %v1013, 80
      %v1777 = vpop.permute.xlu0 %1776
      %1778 = vrot.lane.b32.xlu0 %v1025, 80
      %v1779 = vpop.permute.xlu0 %1778
      %1780 = vrot.lane.b32.xlu0 %v1037, 80
      %v1781 = vpop.permute.xlu0 %1780
      %1782 = vrot.lane.b32.xlu0 %v1719, 80
      %v1783 = vpop.permute.xlu0 %1782
      %v1784 = vrot.slane %v1624, 1
      %v1785 = vrot.slane %v1694, 1
      %v1786 = vsel %vm1102, %v1784, %v1785
      %v1787 = vrot.slane %v1625, 1
      %v1788 = vrot.slane %v1695, 1
      %v1789 = vsel %vm1102, %v1787, %v1788
      %1790 = vrot.lane.b32.xlu0 %v1108, 96
      %v1791 = vpop.permute.xlu0 %1790
      %1792 = vrot.lane.b32.xlu0 %v1111, 96
      %v1793 = vpop.permute.xlu0 %1792
      %1794 = vrot.lane.b32.xlu0 %v1114, 96
      %v1795 = vpop.permute.xlu0 %1794
      %1796 = vrot.lane.b32.xlu0 %v1117, 96
      %v1797 = vpop.permute.xlu0 %1796
      %1798 = vrot.lane.b32.xlu0 %v1120, 96
      %v1799 = vpop.permute.xlu0 %1798
      %1800 = vrot.lane.b32.xlu0 %v1123, 96
      %v1801 = vpop.permute.xlu0 %1800
      %1802 = vrot.lane.b32.xlu0 %v1126, 96
      %v1803 = vpop.permute.xlu0 %1802
      %1804 = vrot.lane.b32.xlu0 %v1129, 96
      %v1805 = vpop.permute.xlu0 %1804
      %1806 = vrot.lane.b32.xlu0 %v1132, 96
      %v1807 = vpop.permute.xlu0 %1806
      %1808 = vrot.lane.b32.xlu0 %v1135, 96
      %v1809 = vpop.permute.xlu0 %1808
      %1810 = vrot.lane.b32.xlu0 %v1138, 96
      %v1811 = vpop.permute.xlu0 %1810
      %1812 = vrot.lane.b32.xlu0 %v1141, 96
      %v1813 = vpop.permute.xlu0 %1812
      %1814 = vrot.lane.b32.xlu0 %v1144, 96
      %v1815 = vpop.permute.xlu0 %1814
      %1816 = vrot.lane.b32.xlu0 %v1147, 96
      %v1817 = vpop.permute.xlu0 %1816
      %1818 = vrot.lane.b32.xlu0 %v1150, 96
      %v1819 = vpop.permute.xlu0 %1818
      %1820 = vrot.lane.b32.xlu0 %v1786, 96
      %v1821 = vpop.permute.xlu0 %1820
      %1822 = vrot.lane.b32.xlu0 %v1156, 96
      %v1823 = vpop.permute.xlu0 %1822
      %1824 = vrot.lane.b32.xlu0 %v1159, 96
      %v1825 = vpop.permute.xlu0 %1824
      %1826 = vrot.lane.b32.xlu0 %v1162, 96
      %v1827 = vpop.permute.xlu0 %1826
      %1828 = vrot.lane.b32.xlu0 %v1165, 96
      %v1829 = vpop.permute.xlu0 %1828
      %1830 = vrot.lane.b32.xlu0 %v1168, 96
      %v1831 = vpop.permute.xlu0 %1830
      %1832 = vrot.lane.b32.xlu0 %v1171, 96
      %v1833 = vpop.permute.xlu0 %1832
      %1834 = vrot.lane.b32.xlu0 %v1174, 96
      %v1835 = vpop.permute.xlu0 %1834
      %1836 = vrot.lane.b32.xlu0 %v1177, 96
      %v1837 = vpop.permute.xlu0 %1836
      %1838 = vrot.lane.b32.xlu0 %v1180, 96
      %v1839 = vpop.permute.xlu0 %1838
      %1840 = vrot.lane.b32.xlu0 %v1183, 96
      %v1841 = vpop.permute.xlu0 %1840
      %1842 = vrot.lane.b32.xlu0 %v1186, 96
      %v1843 = vpop.permute.xlu0 %1842
      %1844 = vrot.lane.b32.xlu0 %v1189, 96
      %v1845 = vpop.permute.xlu0 %1844
      %1846 = vrot.lane.b32.xlu0 %v1192, 96
      %v1847 = vpop.permute.xlu0 %1846
      %1848 = vrot.lane.b32.xlu0 %v1195, 96
      %v1849 = vpop.permute.xlu0 %1848
      %1850 = vrot.lane.b32.xlu0 %v1198, 96
      %v1851 = vpop.permute.xlu0 %1850
      %1852 = vrot.lane.b32.xlu0 %v1789, 96
      %v1853 = vpop.permute.xlu0 %1852
      %v1854 = vrot.slane %v1697, 1
      %v1855 = vrot.slane %v1699, 2
      %v1856 = vor.u32 %v1854, %v1855
      %v1857 = vshrl.u32 %v1694, 16
      %v1859 = vrot.slane %v1857, 1
      %v1860 = vrot.slane %v1704, 2
      %v1861 = vor.u32 %v1859, %v1860
      %v1862 = vsel %vm1263, %v1856, %v1861
      %v1863 = vrot.slane %v1709, 1
      %v1864 = vrot.slane %v1711, 2
      %v1865 = vor.u32 %v1863, %v1864
      %v1866 = vshrl.u32 %v1695, 16
      %v1868 = vrot.slane %v1866, 1
      %v1869 = vrot.slane %v1716, 2
      %v1870 = vor.u32 %v1868, %v1869
      %v1871 = vsel %vm1263, %v1865, %v1870
      %1872 = vrot.lane.b32.xlu0 %v1281, 112
      %v1873 = vpop.permute.xlu0 %1872
      %1874 = vrot.lane.b32.xlu0 %v1290, 112
      %v1875 = vpop.permute.xlu0 %1874
      %1876 = vrot.lane.b32.xlu0 %v1299, 112
      %v1877 = vpop.permute.xlu0 %1876
      %1878 = vrot.lane.b32.xlu0 %v1308, 112
      %v1879 = vpop.permute.xlu0 %1878
      %1880 = vrot.lane.b32.xlu0 %v1317, 112
      %v1881 = vpop.permute.xlu0 %1880
      %1882 = vrot.lane.b32.xlu0 %v1326, 112
      %v1883 = vpop.permute.xlu0 %1882
      %1884 = vrot.lane.b32.xlu0 %v1335, 112
      %v1885 = vpop.permute.xlu0 %1884
      %1886 = vrot.lane.b32.xlu0 %v1344, 112
      %v1887 = vpop.permute.xlu0 %1886
      %1888 = vrot.lane.b32.xlu0 %v1353, 112
      %v1889 = vpop.permute.xlu0 %1888
      %1890 = vrot.lane.b32.xlu0 %v1362, 112
      %v1891 = vpop.permute.xlu0 %1890
      %1892 = vrot.lane.b32.xlu0 %v1371, 112
      %v1893 = vpop.permute.xlu0 %1892
      %1894 = vrot.lane.b32.xlu0 %v1380, 112
      %v1895 = vpop.permute.xlu0 %1894
      %1896 = vrot.lane.b32.xlu0 %v1389, 112
      %v1897 = vpop.permute.xlu0 %1896
      %1898 = vrot.lane.b32.xlu0 %v1398, 112
      %v1899 = vpop.permute.xlu0 %1898
      %1900 = vrot.lane.b32.xlu0 %v1407, 112
      %v1901 = vpop.permute.xlu0 %1900
      %1902 = vrot.lane.b32.xlu0 %v1862, 112
      %v1903 = vpop.permute.xlu0 %1902
      %1904 = vrot.lane.b32.xlu0 %v1425, 112
      %v1905 = vpop.permute.xlu0 %1904
      %1906 = vrot.lane.b32.xlu0 %v1434, 112
      %v1907 = vpop.permute.xlu0 %1906
      %1908 = vrot.lane.b32.xlu0 %v1443, 112
      %v1909 = vpop.permute.xlu0 %1908
      %1910 = vrot.lane.b32.xlu0 %v1452, 112
      %v1911 = vpop.permute.xlu0 %1910
      %1912 = vrot.lane.b32.xlu0 %v1461, 112
      %v1913 = vpop.permute.xlu0 %1912
      %1914 = vrot.lane.b32.xlu0 %v1470, 112
      %v1915 = vpop.permute.xlu0 %1914
      %1916 = vrot.lane.b32.xlu0 %v1479, 112
      %v1917 = vpop.permute.xlu0 %1916
      %1918 = vrot.lane.b32.xlu0 %v1488, 112
      %v1919 = vpop.permute.xlu0 %1918
      %1920 = vrot.lane.b32.xlu0 %v1497, 112
      %v1921 = vpop.permute.xlu0 %1920
      %1922 = vrot.lane.b32.xlu0 %v1506, 112
      %v1923 = vpop.permute.xlu0 %1922
      %1924 = vrot.lane.b32.xlu0 %v1515, 112
      %v1925 = vpop.permute.xlu0 %1924
      %1926 = vrot.lane.b32.xlu0 %v1524, 112
      %v1927 = vpop.permute.xlu0 %1926
      %1928 = vrot.lane.b32.xlu0 %v1533, 112
      %v1929 = vpop.permute.xlu0 %1928
      %1930 = vrot.lane.b32.xlu0 %v1542, 112
      %v1931 = vpop.permute.xlu0 %1930
      %1932 = vrot.lane.b32.xlu0 %v1551, 112
      %v1933 = vpop.permute.xlu0 %1932
      %1934 = vrot.lane.b32.xlu0 %v1871, 112
      %v1935 = vpop.permute.xlu0 %1934
      %v1940 = vunpack.c.l.b16 %v334
      %v1941 = vunpack.c.l.b16 %v335
      %v1942 = vunpack.c.l.b16 %v391
      %v1943 = vunpack.c.l.b16 %v392
      %v1944 = vpack.c.b16 %v1941, %v1940
      %v1945 = vpack.c.b16 %v1943, %v1942
      %v1948 = vunpack.c.l.b16 %v336
      %v1949 = vunpack.c.l.b16 %v393
      %v1950 = vpack.c.b16 %v1948, %v1948
      %v1951 = vpack.c.b16 %v1949, %v1949
      %v1953 = vshrl.u32 %v1944, 16
      %v1955 = vshll.u32 %v1944, 16
      %v1957 = vrot.slane %v1955, 1
      %v1958 = vor.u32 %v1953, %v1957
      %v1960 = vshll.u32 %v1950, 16
      %v1962 = vrot.slane %v1960, 1
      %v1963 = vsel %vm653, %v1958, %v1962
      %v1965 = vshrl.u32 %v1945, 16
      %v1967 = vshll.u32 %v1945, 16
      %v1969 = vrot.slane %v1967, 1
      %v1970 = vor.u32 %v1965, %v1969
      %v1972 = vshll.u32 %v1951, 16
      %v1974 = vrot.slane %v1972, 1
      %v1975 = vsel %vm653, %v1970, %v1974
      %1976 = vrot.lane.b32.xlu0 %v1707, 16
      %v1977 = vpop.permute.xlu0 %1976
      %1978 = vrot.lane.b32.xlu0 %v1963, 16
      %v1979 = vpop.permute.xlu0 %1978
      %1980 = vrot.lane.b32.xlu0 %v1719, 16
      %v1981 = vpop.permute.xlu0 %1980
      %1982 = vrot.lane.b32.xlu0 %v1975, 16
      %v1983 = vpop.permute.xlu0 %1982
      %v1984 = vrot.slane %v1944, 1
      %v1985 = vrot.slane %v1950, 1
      %v1986 = vsel %vm1102, %v1984, %v1985
      %v1987 = vrot.slane %v1945, 1
      %v1988 = vrot.slane %v1951, 1
      %v1989 = vsel %vm1102, %v1987, %v1988
      %1990 = vrot.lane.b32.xlu0 %v1786, 32
      %v1991 = vpop.permute.xlu0 %1990
      %1992 = vrot.lane.b32.xlu0 %v1986, 32
      %v1993 = vpop.permute.xlu0 %1992
      %1994 = vrot.lane.b32.xlu0 %v1789, 32
      %v1995 = vpop.permute.xlu0 %1994
      %1996 = vrot.lane.b32.xlu0 %v1989, 32
      %v1997 = vpop.permute.xlu0 %1996
      %v1998 = vrot.slane %v1953, 1
      %v1999 = vrot.slane %v1955, 2
      %v2000 = vor.u32 %v1998, %v1999
      %v2001 = vshrl.u32 %v1950, 16
      %v2003 = vrot.slane %v2001, 1
      %v2004 = vrot.slane %v1960, 2
      %v2005 = vor.u32 %v2003, %v2004
      %v2006 = vsel %vm1263, %v2000, %v2005
      %v2007 = vrot.slane %v1965, 1
      %v2008 = vrot.slane %v1967, 2
      %v2009 = vor.u32 %v2007, %v2008
      %v2010 = vshrl.u32 %v1951, 16
      %v2012 = vrot.slane %v2010, 1
      %v2013 = vrot.slane %v1972, 2
      %v2014 = vor.u32 %v2012, %v2013
      %v2015 = vsel %vm1263, %v2009, %v2014
      %2016 = vrot.lane.b32.xlu0 %v1862, 48
      %v2017 = vpop.permute.xlu0 %2016
      %2018 = vrot.lane.b32.xlu0 %v2006, 48
      %v2019 = vpop.permute.xlu0 %2018
      %2020 = vrot.lane.b32.xlu0 %v1871, 48
      %v2021 = vpop.permute.xlu0 %2020
      %2022 = vrot.lane.b32.xlu0 %v2015, 48
      %v2023 = vpop.permute.xlu0 %2022
      %v2028 = vunpack.c.l.b16 %v337
      %v2029 = vunpack.c.l.b16 %v338
      %v2030 = vunpack.c.l.b16 %v394
      %v2031 = vunpack.c.l.b16 %v395
      %v2032 = vpack.c.b16 %v2029, %v2028
      %v2033 = vpack.c.b16 %v2031, %v2030
      %2034 = vrot.lane.b32.xlu0 %v1944, 64
      %v2035 = vpop.permute.xlu0 %2034
      %2036 = vrot.lane.b32.xlu0 %v2032, 64
      %v2037 = vpop.permute.xlu0 %2036
      %2038 = vrot.lane.b32.xlu0 %v1945, 64
      %v2039 = vpop.permute.xlu0 %2038
      %2040 = vrot.lane.b32.xlu0 %v2033, 64
      %v2041 = vpop.permute.xlu0 %2040
      %v2044 = vunpack.c.l.b16 %v339
      %v2045 = vunpack.c.l.b16 %v396
      %v2046 = vpack.c.b16 %v2044, %v2044
      %v2047 = vpack.c.b16 %v2045, %v2045
      %v2049 = vshrl.u32 %v2032, 16
      %v2051 = vshll.u32 %v2032, 16
      %v2053 = vrot.slane %v2051, 1
      %v2054 = vor.u32 %v2049, %v2053
      %v2056 = vshll.u32 %v2046, 16
      %v2058 = vrot.slane %v2056, 1
      %v2059 = vsel %vm653, %v2054, %v2058
      %v2061 = vshrl.u32 %v2033, 16
      %v2063 = vshll.u32 %v2033, 16
      %v2065 = vrot.slane %v2063, 1
      %v2066 = vor.u32 %v2061, %v2065
      %v2068 = vshll.u32 %v2047, 16
      %v2070 = vrot.slane %v2068, 1
      %v2071 = vsel %vm653, %v2066, %v2070
      %2072 = vrot.lane.b32.xlu0 %v1963, 80
      %v2073 = vpop.permute.xlu0 %2072
      %2074 = vrot.lane.b32.xlu0 %v2059, 80
      %v2075 = vpop.permute.xlu0 %2074
      %2076 = vrot.lane.b32.xlu0 %v1975, 80
      %v2077 = vpop.permute.xlu0 %2076
      %2078 = vrot.lane.b32.xlu0 %v2071, 80
      %v2079 = vpop.permute.xlu0 %2078
      %v2080 = vrot.slane %v2032, 1
      %v2081 = vrot.slane %v2046, 1
      %v2082 = vsel %vm1102, %v2080, %v2081
      %v2083 = vrot.slane %v2033, 1
      %v2084 = vrot.slane %v2047, 1
      %v2085 = vsel %vm1102, %v2083, %v2084
      %2086 = vrot.lane.b32.xlu0 %v1986, 96
      %v2087 = vpop.permute.xlu0 %2086
      %2088 = vrot.lane.b32.xlu0 %v2082, 96
      %v2089 = vpop.permute.xlu0 %2088
      %2090 = vrot.lane.b32.xlu0 %v1989, 96
      %v2091 = vpop.permute.xlu0 %2090
      %2092 = vrot.lane.b32.xlu0 %v2085, 96
      %v2093 = vpop.permute.xlu0 %2092
      %v2094 = vrot.slane %v2049, 1
      %v2095 = vrot.slane %v2051, 2
      %v2096 = vor.u32 %v2094, %v2095
      %v2097 = vshrl.u32 %v2046, 16
      %v2099 = vrot.slane %v2097, 1
      %v2100 = vrot.slane %v2056, 2
      %v2101 = vor.u32 %v2099, %v2100
      %v2102 = vsel %vm1263, %v2096, %v2101
      %v2103 = vrot.slane %v2061, 1
      %v2104 = vrot.slane %v2063, 2
      %v2105 = vor.u32 %v2103, %v2104
      %v2106 = vshrl.u32 %v2047, 16
      %v2108 = vrot.slane %v2106, 1
      %v2109 = vrot.slane %v2068, 2
      %v2110 = vor.u32 %v2108, %v2109
      %v2111 = vsel %vm1263, %v2105, %v2110
      %2112 = vrot.lane.b32.xlu0 %v2006, 112
      %v2113 = vpop.permute.xlu0 %2112
      %2114 = vrot.lane.b32.xlu0 %v2102, 112
      %v2115 = vpop.permute.xlu0 %2114
      %2116 = vrot.lane.b32.xlu0 %v2015, 112
      %v2117 = vpop.permute.xlu0 %2116
      %2118 = vrot.lane.b32.xlu0 %v2111, 112
      %v2119 = vpop.permute.xlu0 %2118
      %vm2120 = vcmask 130048
      %v2122 = vsel %vm2120, %v525, %v1039
      %v2124 = vsel %vm2120, %v526, %v1041
      %v2126 = vsel %vm2120, %v527, %v1043
      %v2128 = vsel %vm2120, %v528, %v1045
      %v2130 = vsel %vm2120, %v529, %v1047
      %v2132 = vsel %vm2120, %v530, %v1049
      %v2134 = vsel %vm2120, %v531, %v1051
      %v2136 = vsel %vm2120, %v532, %v1053
      %v2138 = vsel %vm2120, %v533, %v1055
      %v2140 = vsel %vm2120, %v534, %v1057
      %v2142 = vsel %vm2120, %v535, %v1059
      %v2144 = vsel %vm2120, %v536, %v1061
      %v2146 = vsel %vm2120, %v537, %v1063
      %v2148 = vsel %vm2120, %v538, %v1065
      %v2150 = vsel %vm2120, %v539, %v1067
      %v2152 = vsel %vm2120, %v540, %v1069
      %v2154 = vsel %vm2120, %v541, %v1071
      %v2156 = vsel %vm2120, %v542, %v1073
      %v2158 = vsel %vm2120, %v543, %v1075
      %v2160 = vsel %vm2120, %v544, %v1077
      %v2162 = vsel %vm2120, %v545, %v1079
      %v2164 = vsel %vm2120, %v546, %v1081
      %v2166 = vsel %vm2120, %v547, %v1083
      %v2168 = vsel %vm2120, %v548, %v1085
      %v2170 = vsel %vm2120, %v549, %v1087
      %v2172 = vsel %vm2120, %v550, %v1089
      %v2174 = vsel %vm2120, %v551, %v1091
      %v2176 = vsel %vm2120, %v552, %v1093
      %v2178 = vsel %vm2120, %v553, %v1095
      %v2180 = vsel %vm2120, %v554, %v1097
      %v2182 = vsel %vm2120, %v555, %v1099
      %v2184 = vsel %vm2120, %v556, %v1101
      %vm2185 = vcmask 261120
      %v2187 = vsel %vm2185, %v2122, %v1200
      %v2189 = vsel %vm2185, %v2124, %v1202
      %v2191 = vsel %vm2185, %v2126, %v1204
      %v2193 = vsel %vm2185, %v2128, %v1206
      %v2195 = vsel %vm2185, %v2130, %v1208
      %v2197 = vsel %vm2185, %v2132, %v1210
      %v2199 = vsel %vm2185, %v2134, %v1212
      %v2201 = vsel %vm2185, %v2136, %v1214
      %v2203 = vsel %vm2185, %v2138, %v1216
      %v2205 = vsel %vm2185, %v2140, %v1218
      %v2207 = vsel %vm2185, %v2142, %v1220
      %v2209 = vsel %vm2185, %v2144, %v1222
      %v2211 = vsel %vm2185, %v2146, %v1224
      %v2213 = vsel %vm2185, %v2148, %v1226
      %v2215 = vsel %vm2185, %v2150, %v1228
      %v2217 = vsel %vm2185, %v2152, %v1230
      %v2219 = vsel %vm2185, %v2154, %v1232
      %v2221 = vsel %vm2185, %v2156, %v1234
      %v2223 = vsel %vm2185, %v2158, %v1236
      %v2225 = vsel %vm2185, %v2160, %v1238
      %v2227 = vsel %vm2185, %v2162, %v1240
      %v2229 = vsel %vm2185, %v2164, %v1242
      %v2231 = vsel %vm2185, %v2166, %v1244
      %v2233 = vsel %vm2185, %v2168, %v1246
      %v2235 = vsel %vm2185, %v2170, %v1248
      %v2237 = vsel %vm2185, %v2172, %v1250
      %v2239 = vsel %vm2185, %v2174, %v1252
      %v2241 = vsel %vm2185, %v2176, %v1254
      %v2243 = vsel %vm2185, %v2178, %v1256
      %v2245 = vsel %vm2185, %v2180, %v1258
      %v2247 = vsel %vm2185, %v2182, %v1260
      %v2249 = vsel %vm2185, %v2184, %v1262
      %vm2250 = vcmask 392192
      %v2252 = vsel %vm2250, %v2187, %v1553
      %v2254 = vsel %vm2250, %v2189, %v1555
      %v2256 = vsel %vm2250, %v2191, %v1557
      %v2258 = vsel %vm2250, %v2193, %v1559
      %v2260 = vsel %vm2250, %v2195, %v1561
      %v2262 = vsel %vm2250, %v2197, %v1563
      %v2264 = vsel %vm2250, %v2199, %v1565
      %v2266 = vsel %vm2250, %v2201, %v1567
      %v2268 = vsel %vm2250, %v2203, %v1569
      %v2270 = vsel %vm2250, %v2205, %v1571
      %v2272 = vsel %vm2250, %v2207, %v1573
      %v2274 = vsel %vm2250, %v2209, %v1575
      %v2276 = vsel %vm2250, %v2211, %v1577
      %v2278 = vsel %vm2250, %v2213, %v1579
      %v2280 = vsel %vm2250, %v2215, %v1581
      %v2282 = vsel %vm2250, %v2217, %v1583
      %v2284 = vsel %vm2250, %v2219, %v1585
      %v2286 = vsel %vm2250, %v2221, %v1587
      %v2288 = vsel %vm2250, %v2223, %v1589
      %v2290 = vsel %vm2250, %v2225, %v1591
      %v2292 = vsel %vm2250, %v2227, %v1593
      %v2294 = vsel %vm2250, %v2229, %v1595
      %v2296 = vsel %vm2250, %v2231, %v1597
      %v2298 = vsel %vm2250, %v2233, %v1599
      %v2300 = vsel %vm2250, %v2235, %v1601
      %v2302 = vsel %vm2250, %v2237, %v1603
      %v2304 = vsel %vm2250, %v2239, %v1605
      %v2306 = vsel %vm2250, %v2241, %v1607
      %v2308 = vsel %vm2250, %v2243, %v1609
      %v2310 = vsel %vm2250, %v2245, %v1611
      %v2312 = vsel %vm2250, %v2247, %v1613
      %v2314 = vsel %vm2250, %v2249, %v1615
      %vm2315 = vcmask 523264
      %v2317 = vsel %vm2315, %v2252, %v1627
      %v2319 = vsel %vm2315, %v2254, %v1629
      %v2321 = vsel %vm2315, %v2256, %v1631
      %v2323 = vsel %vm2315, %v2258, %v1633
      %v2325 = vsel %vm2315, %v2260, %v1635
      %v2327 = vsel %vm2315, %v2262, %v1637
      %v2329 = vsel %vm2315, %v2264, %v1639
      %v2331 = vsel %vm2315, %v2266, %v1641
      %v2333 = vsel %vm2315, %v2268, %v1643
      %v2335 = vsel %vm2315, %v2270, %v1645
      %v2337 = vsel %vm2315, %v2272, %v1647
      %v2339 = vsel %vm2315, %v2274, %v1649
      %v2341 = vsel %vm2315, %v2276, %v1651
      %v2343 = vsel %vm2315, %v2278, %v1653
      %v2345 = vsel %vm2315, %v2280, %v1655
      %v2347 = vsel %vm2315, %v2282, %v1657
      %v2349 = vsel %vm2315, %v2284, %v1659
      %v2351 = vsel %vm2315, %v2286, %v1661
      %v2353 = vsel %vm2315, %v2288, %v1663
      %v2355 = vsel %vm2315, %v2290, %v1665
      %v2357 = vsel %vm2315, %v2292, %v1667
      %v2359 = vsel %vm2315, %v2294, %v1669
      %v2361 = vsel %vm2315, %v2296, %v1671
      %v2363 = vsel %vm2315, %v2298, %v1673
      %v2365 = vsel %vm2315, %v2300, %v1675
      %v2367 = vsel %vm2315, %v2302, %v1677
      %v2369 = vsel %vm2315, %v2304, %v1679
      %v2371 = vsel %vm2315, %v2306, %v1681
      %v2373 = vsel %vm2315, %v2308, %v1683
      %v2375 = vsel %vm2315, %v2310, %v1685
      %v2377 = vsel %vm2315, %v2312, %v1687
      %v2379 = vsel %vm2315, %v2314, %v1689
      %vm2380 = vcmask 654336
      %v2382 = vsel %vm2380, %v2317, %v1721
      %v2384 = vsel %vm2380, %v2319, %v1723
      %v2386 = vsel %vm2380, %v2321, %v1725
      %v2388 = vsel %vm2380, %v2323, %v1727
      %v2390 = vsel %vm2380, %v2325, %v1729
      %v2392 = vsel %vm2380, %v2327, %v1731
      %v2394 = vsel %vm2380, %v2329, %v1733
      %v2396 = vsel %vm2380, %v2331, %v1735
      %v2398 = vsel %vm2380, %v2333, %v1737
      %v2400 = vsel %vm2380, %v2335, %v1739
      %v2402 = vsel %vm2380, %v2337, %v1741
      %v2404 = vsel %vm2380, %v2339, %v1743
      %v2406 = vsel %vm2380, %v2341, %v1745
      %v2408 = vsel %vm2380, %v2343, %v1747
      %v2410 = vsel %vm2380, %v2345, %v1749
      %v2412 = vsel %vm2380, %v2347, %v1751
      %v2414 = vsel %vm2380, %v2349, %v1753
      %v2416 = vsel %vm2380, %v2351, %v1755
      %v2418 = vsel %vm2380, %v2353, %v1757
      %v2420 = vsel %vm2380, %v2355, %v1759
      %v2422 = vsel %vm2380, %v2357, %v1761
      %v2424 = vsel %vm2380, %v2359, %v1763
      %v2426 = vsel %vm2380, %v2361, %v1765
      %v2428 = vsel %vm2380, %v2363, %v1767
      %v2430 = vsel %vm2380, %v2365, %v1769
      %v2432 = vsel %vm2380, %v2367, %v1771
      %v2434 = vsel %vm2380, %v2369, %v1773
      %v2436 = vsel %vm2380, %v2371, %v1775
      %v2438 = vsel %vm2380, %v2373, %v1777
      %v2440 = vsel %vm2380, %v2375, %v1779
      %v2442 = vsel %vm2380, %v2377, %v1781
      %v2444 = vsel %vm2380, %v2379, %v1783
      %vm2445 = vcmask 785408
      %v2447 = vsel %vm2445, %v2382, %v1791
      %v2449 = vsel %vm2445, %v2384, %v1793
      %v2451 = vsel %vm2445, %v2386, %v1795
      %v2453 = vsel %vm2445, %v2388, %v1797
      %v2455 = vsel %vm2445, %v2390, %v1799
      %v2457 = vsel %vm2445, %v2392, %v1801
      %v2459 = vsel %vm2445, %v2394, %v1803
      %v2461 = vsel %vm2445, %v2396, %v1805
      %v2463 = vsel %vm2445, %v2398, %v1807
      %v2465 = vsel %vm2445, %v2400, %v1809
      %v2467 = vsel %vm2445, %v2402, %v1811
      %v2469 = vsel %vm2445, %v2404, %v1813
      %v2471 = vsel %vm2445, %v2406, %v1815
      %v2473 = vsel %vm2445, %v2408, %v1817
      %v2475 = vsel %vm2445, %v2410, %v1819
      %v2477 = vsel %vm2445, %v2412, %v1821
      %v2479 = vsel %vm2445, %v2414, %v1823
      %v2481 = vsel %vm2445, %v2416, %v1825
      %v2483 = vsel %vm2445, %v2418, %v1827
      %v2485 = vsel %vm2445, %v2420, %v1829
      %v2487 = vsel %vm2445, %v2422, %v1831
      %v2489 = vsel %vm2445, %v2424, %v1833
      %v2491 = vsel %vm2445, %v2426, %v1835
      %v2493 = vsel %vm2445, %v2428, %v1837
      %v2495 = vsel %vm2445, %v2430, %v1839
      %v2497 = vsel %vm2445, %v2432, %v1841
      %v2499 = vsel %vm2445, %v2434, %v1843
      %v2501 = vsel %vm2445, %v2436, %v1845
      %v2503 = vsel %vm2445, %v2438, %v1847
      %v2505 = vsel %vm2445, %v2440, %v1849
      %v2507 = vsel %vm2445, %v2442, %v1851
      %v2509 = vsel %vm2445, %v2444, %v1853
      %vm2510 = vcmask 916480
      %v2512 = vsel %vm2510, %v2447, %v1873
      %v2515 = vsel %vm2510, %v2449, %v1875
      %v2518 = vsel %vm2510, %v2451, %v1877
      %v2521 = vsel %vm2510, %v2453, %v1879
      %v2524 = vsel %vm2510, %v2455, %v1881
      %v2527 = vsel %vm2510, %v2457, %v1883
      %v2530 = vsel %vm2510, %v2459, %v1885
      %v2533 = vsel %vm2510, %v2461, %v1887
      %v2536 = vsel %vm2510, %v2463, %v1889
      %v2539 = vsel %vm2510, %v2465, %v1891
      %v2542 = vsel %vm2510, %v2467, %v1893
      %v2545 = vsel %vm2510, %v2469, %v1895
      %v2548 = vsel %vm2510, %v2471, %v1897
      %v2551 = vsel %vm2510, %v2473, %v1899
      %v2554 = vsel %vm2510, %v2475, %v1901
      %v2557 = vsel %vm2510, %v2477, %v1903
      %v2560 = vsel %vm2510, %v2479, %v1905
      %v2563 = vsel %vm2510, %v2481, %v1907
      %v2566 = vsel %vm2510, %v2483, %v1909
      %v2569 = vsel %vm2510, %v2485, %v1911
      %v2572 = vsel %vm2510, %v2487, %v1913
      %v2575 = vsel %vm2510, %v2489, %v1915
      %v2578 = vsel %vm2510, %v2491, %v1917
      %v2581 = vsel %vm2510, %v2493, %v1919
      %v2584 = vsel %vm2510, %v2495, %v1921
      %v2587 = vsel %vm2510, %v2497, %v1923
      %v2590 = vsel %vm2510, %v2499, %v1925
      %v2593 = vsel %vm2510, %v2501, %v1927
      %v2596 = vsel %vm2510, %v2503, %v1929
      %v2599 = vsel %vm2510, %v2505, %v1931
      %v2602 = vsel %vm2510, %v2507, %v1933
      %v2605 = vsel %vm2510, %v2509, %v1935
      %v2608 = vsel %vm2120, %v1624, %v1977
      %v2610 = vsel %vm2120, %v1944, %v1979
      %v2612 = vsel %vm2120, %v1625, %v1981
      %v2614 = vsel %vm2120, %v1945, %v1983
      %v2616 = vsel %vm2185, %v2608, %v1991
      %v2618 = vsel %vm2185, %v2610, %v1993
      %v2620 = vsel %vm2185, %v2612, %v1995
      %v2622 = vsel %vm2185, %v2614, %v1997
      %v2624 = vsel %vm2250, %v2616, %v2017
      %v2626 = vsel %vm2250, %v2618, %v2019
      %v2628 = vsel %vm2250, %v2620, %v2021
      %v2630 = vsel %vm2250, %v2622, %v2023
      %v2632 = vsel %vm2315, %v2624, %v2035
      %v2634 = vsel %vm2315, %v2626, %v2037
      %v2636 = vsel %vm2315, %v2628, %v2039
      %v2638 = vsel %vm2315, %v2630, %v2041
      %v2640 = vsel %vm2380, %v2632, %v2073
      %v2642 = vsel %vm2380, %v2634, %v2075
      %v2644 = vsel %vm2380, %v2636, %v2077
      %v2646 = vsel %vm2380, %v2638, %v2079
      %v2648 = vsel %vm2445, %v2640, %v2087
      %v2650 = vsel %vm2445, %v2642, %v2089
      %v2652 = vsel %vm2445, %v2644, %v2091
      %v2654 = vsel %vm2445, %v2646, %v2093
      %v2656 = vsel %vm2510, %v2648, %v2113
      %v2659 = vsel %vm2510, %v2650, %v2115
      %v2662 = vsel %vm2510, %v2652, %v2117
      %v2665 = vsel %vm2510, %v2654, %v2119
      %v2667 = vld [vmem:[%s1] sm:$0xf]
      %v2668 = vld [vmem:[%s1 + $0x4] sm:$0xf]
      %v2669 = vld [vmem:[%s1 + $0x8] sm:$0xf]
      %v2670 = vld [vmem:[%s1 + $0xc] sm:$0xf]
      %v2671 = vld [vmem:[%s1 + $0x10] sm:$0xf]
      %v2672 = vld [vmem:[%s1 + $0x14] sm:$0xf]
      %v2673 = vld [vmem:[%s1 + $0x18] sm:$0xf]
      %v2674 = vld [vmem:[%s1 + $0x1c] sm:$0xf]
      %v2675 = vld [vmem:[%s1 + $0x20] sm:$0xf]
      %v2676 = vld [vmem:[%s1 + $0x24] sm:$0xf]
      %v2677 = vld [vmem:[%s1 + $0x28] sm:$0xf]
      %v2678 = vld [vmem:[%s1 + $0x2c] sm:$0xf]
      %v2679 = vld [vmem:[%s1 + $0x30] sm:$0xf]
      %v2680 = vld [vmem:[%s1 + $0x34] sm:$0xf]
      %v2681 = vld [vmem:[%s1 + $0x38] sm:$0xf]
      %v2682 = vld [vmem:[%s1 + $0x3c] sm:$0xf]
      %v2683 = vld [vmem:[%s1 + $0x40] sm:$0xf]
      %v2684 = vld [vmem:[%s1 + $0x44] sm:$0xf]
      %v2685 = vld [vmem:[%s1 + $0x48] sm:$0xf]
      %v2686 = vld [vmem:[%s1 + $0x4c] sm:$0xf]
      %v2687 = vld [vmem:[%s1 + $0x50] sm:$0xf]
      %v2688 = vld [vmem:[%s1 + $0x54] sm:$0xf]
      %v2689 = vld [vmem:[%s1 + $0x58] sm:$0xf]
      %v2690 = vld [vmem:[%s1 + $0x5c] sm:$0xf]
      %v2691 = vld [vmem:[%s1 + $0x60] sm:$0xf]
      %v2692 = vld [vmem:[%s1 + $0x64] sm:$0xf]
      %v2693 = vld [vmem:[%s1 + $0x68] sm:$0xf]
      %v2694 = vld [vmem:[%s1 + $0x6c] sm:$0xf]
      %v2695 = vld [vmem:[%s1 + $0x70] sm:$0xf]
      %v2696 = vld [vmem:[%s1 + $0x74] sm:$0xf]
      %v2697 = vld [vmem:[%s1 + $0x78] sm:$0xf]
      %v2698 = vld [vmem:[%s1 + $0x7c] sm:$0xf]
      %v2699 = vld [vmem:[%s2] sm:$0x1]
      %v2701 = vlaneseq
      %v2702 = vshrl.u32 %v2701, 7
      %v2703 = vsub.s32 0, %v2702
      %v2704 = vrot.slane %v2699, %v2703
      %v2738 = vunpack.c.l.b16 %v2667
      %v2739 = vunpack.c.l.b16 %v2668
      %v2740 = vunpack.c.l.b16 %v2669
      %v2741 = vunpack.c.l.b16 %v2670
      %v2742 = vunpack.c.l.b16 %v2671
      %v2743 = vunpack.c.l.b16 %v2672
      %v2744 = vunpack.c.l.b16 %v2673
      %v2745 = vunpack.c.l.b16 %v2674
      %v2746 = vunpack.c.l.b16 %v2675
      %v2747 = vunpack.c.l.b16 %v2676
      %v2748 = vunpack.c.l.b16 %v2677
      %v2749 = vunpack.c.l.b16 %v2678
      %v2750 = vunpack.c.l.b16 %v2679
      %v2751 = vunpack.c.l.b16 %v2680
      %v2752 = vunpack.c.l.b16 %v2681
      %v2753 = vunpack.c.l.b16 %v2682
      %v2754 = vunpack.c.l.b16 %v2683
      %v2755 = vunpack.c.l.b16 %v2684
      %v2756 = vunpack.c.l.b16 %v2685
      %v2757 = vunpack.c.l.b16 %v2686
      %v2758 = vunpack.c.l.b16 %v2687
      %v2759 = vunpack.c.l.b16 %v2688
      %v2760 = vunpack.c.l.b16 %v2689
      %v2761 = vunpack.c.l.b16 %v2690
      %v2762 = vunpack.c.l.b16 %v2691
      %v2763 = vunpack.c.l.b16 %v2692
      %v2764 = vunpack.c.l.b16 %v2693
      %v2765 = vunpack.c.l.b16 %v2694
      %v2766 = vunpack.c.l.b16 %v2695
      %v2767 = vunpack.c.l.b16 %v2696
      %v2768 = vunpack.c.l.b16 %v2697
      %v2769 = vunpack.c.l.b16 %v2698
      %v2770 = vpack.c.b16 %v2739, %v2738
      %v2771 = vpack.c.b16 %v2741, %v2740
      %v2772 = vpack.c.b16 %v2743, %v2742
      %v2773 = vpack.c.b16 %v2745, %v2744
      %v2774 = vpack.c.b16 %v2747, %v2746
      %v2775 = vpack.c.b16 %v2749, %v2748
      %v2776 = vpack.c.b16 %v2751, %v2750
      %v2777 = vpack.c.b16 %v2753, %v2752
      %v2778 = vpack.c.b16 %v2755, %v2754
      %v2779 = vpack.c.b16 %v2757, %v2756
      %v2780 = vpack.c.b16 %v2759, %v2758
      %v2781 = vpack.c.b16 %v2761, %v2760
      %v2782 = vpack.c.b16 %v2763, %v2762
      %v2783 = vpack.c.b16 %v2765, %v2764
      %v2784 = vpack.c.b16 %v2767, %v2766
      %v2785 = vpack.c.b16 %v2769, %v2768
      %2802 = vmatprep.subr.bf16.mxu0 0
      %2803 = vmatpush1.bf16.msra.mxu0 %v2770
      %2804 = vmatprep.subr.bf16.mxu0 0
      %2805 = vmatpush1.bf16.msra.mxu0 %v2771
      %2806 = vmatprep.subr.bf16.mxu0 0
      %2807 = vmatpush1.bf16.msra.mxu0 %v2772
      %2808 = vmatprep.subr.bf16.mxu0 0
      %2809 = vmatpush1.bf16.msra.mxu0 %v2773
      %2810 = vmatprep.subr.bf16.mxu0 0
      %2811 = vmatpush1.bf16.msra.mxu0 %v2774
      %2812 = vmatprep.subr.bf16.mxu0 0
      %2813 = vmatpush1.bf16.msra.mxu0 %v2775
      %2814 = vmatprep.subr.bf16.mxu0 0
      %2815 = vmatpush1.bf16.msra.mxu0 %v2776
      %2816 = vmatprep.subr.bf16.mxu0 0
      %2817 = vmatpush1.bf16.msra.mxu0 %v2777
      %2818 = vmatprep.subr.bf16.mxu0 0
      %2819 = vmatpush1.bf16.msra.mxu0 %v2778
      %2820 = vmatprep.subr.bf16.mxu0 0
      %2821 = vmatpush1.bf16.msra.mxu0 %v2779
      %2822 = vmatprep.subr.bf16.mxu0 0
      %2823 = vmatpush1.bf16.msra.mxu0 %v2780
      %2824 = vmatprep.subr.bf16.mxu0 0
      %2825 = vmatpush1.bf16.msra.mxu0 %v2781
      %2826 = vmatprep.subr.bf16.mxu0 0
      %2827 = vmatpush1.bf16.msra.mxu0 %v2782
      %2828 = vmatprep.subr.bf16.mxu0 0
      %2829 = vmatpush1.bf16.msra.mxu0 %v2783
      %2830 = vmatprep.subr.bf16.mxu0 0
      %2831 = vmatpush1.bf16.msra.mxu0 %v2784
      %2832 = vmatprep.subr.bf16.mxu0 0
      %2833 = vmatpush1.bf16.msra.mxu0 %v2785
      %2834 = vmatprep.mubr.bf16.mxu0 %v2518
      %2835 = vmatmul.mubr.bf16.gmra.mrb[0].mxu0 %v2512
      %v2836 = vpop.f32.mrb[0].mxu0
      %v2837 = vadd.f32 %v2704, %v2836
      %v2838 = vpop.f32.mrb[0].mxu0
      %v2839 = vpop.f32.mrb[0].mxu0
      %v2840 = vadd.f32 %v2704, %v2839
      %v2841 = vpop.f32.mrb[0].mxu0
      %2842 = vmatprep.mubr.bf16.mxu0 %v2521
      %2843 = vmatmul.mubr.bf16.gmra.mrb[0].mxu0 %v2515
      %v2844 = vpop.f32.mrb[0].mxu0
      %v2845 = vadd.f32 %v2704, %v2844
      %v2846 = vpop.f32.mrb[0].mxu0
      %v2847 = vpop.f32.mrb[0].mxu0
      %v2848 = vadd.f32 %v2704, %v2847
      %v2849 = vpop.f32.mrb[0].mxu0
      %2850 = vmatprep.mubr.bf16.mxu0 %v2524
      %2851 = vmatmul.mubr.bf16.gmra.mrb[0].mxu0 %v2518
      %v2852 = vpop.f32.mrb[0].mxu0
      %v2853 = vadd.f32 %v2704, %v2852
      %v2854 = vpop.f32.mrb[0].mxu0
      %v2855 = vpop.f32.mrb[0].mxu0
      %v2856 = vadd.f32 %v2704, %v2855
      %v2857 = vpop.f32.mrb[0].mxu0
      %2858 = vmatprep.mubr.bf16.mxu0 %v2527
      %2859 = vmatmul.mubr.bf16.gmra.mrb[0].mxu0 %v2521
      %v2860 = vpop.f32.mrb[0].mxu0
      %v2861 = vadd.f32 %v2704, %v2860
      %v2862 = vpop.f32.mrb[0].mxu0
      %v2863 = vpop.f32.mrb[0].mxu0
      %v2864 = vadd.f32 %v2704, %v2863
      %v2865 = vpop.f32.mrb[0].mxu0
      %2866 = vmatprep.mubr.bf16.mxu0 %v2530
      %2867 = vmatmul.mubr.bf16.gmra.mrb[0].mxu0 %v2524
      %v2868 = vpop.f32.mrb[0].mxu0
      %v2869 = vadd.f32 %v2704, %v2868
      %v2870 = vpop.f32.mrb[0].mxu0
      %v2871 = vpop.f32.mrb[0].mxu0
      %v2872 = vadd.f32 %v2704, %v2871
      %v2873 = vpop.f32.mrb[0].mxu0
      %2874 = vmatprep.mubr.bf16.mxu0 %v2533
      %2875 = vmatmul.mubr.bf16.gmra.mrb[0].mxu0 %v2527
      %v2876 = vpop.f32.mrb[0].mxu0
      %v2877 = vadd.f32 %v2704, %v2876
      %v2878 = vpop.f32.mrb[0].mxu0
      %v2879 = vpop.f32.mrb[0].mxu0
      %v2880 = vadd.f32 %v2704, %v2879
      %v2881 = vpop.f32.mrb[0].mxu0
      %2882 = vmatprep.mubr.bf16.mxu0 %v2536
      %2883 = vmatmul.mubr.bf16.gmra.mrb[0].mxu0 %v2530
      %v2884 = vpop.f32.mrb[0].mxu0
      %v2885 = vadd.f32 %v2704, %v2884
      %v2886 = vpop.f32.mrb[0].mxu0
      %v2887 = vpop.f32.mrb[0].mxu0
      %v2888 = vadd.f32 %v2704, %v2887
      %v2889 = vpop.f32.mrb[0].mxu0
      %2890 = vmatprep.mubr.bf16.mxu0 %v2539
      %2891 = vmatmul.mubr.bf16.gmra.mrb[0].mxu0 %v2533
      %v2892 = vpop.f32.mrb[0].mxu0
      %v2893 = vadd.f32 %v2704, %v2892
      %v2894 = vpop.f32.mrb[0].mxu0
      %v2895 = vpop.f32.mrb[0].mxu0
      %v2896 = vadd.f32 %v2704, %v2895
      %v2897 = vpop.f32.mrb[0].mxu0
      %2898 = vmatprep.mubr.bf16.mxu0 %v2542
      %2899 = vmatmul.mubr.bf16.gmra.mrb[0].mxu0 %v2536
      %v2900 = vpop.f32.mrb[0].mxu0
      %v2901 = vadd.f32 %v2704, %v2900
      %v2902 = vpop.f32.mrb[0].mxu0
      %v2903 = vpop.f32.mrb[0].mxu0
      %v2904 = vadd.f32 %v2704, %v2903
      %v2905 = vpop.f32.mrb[0].mxu0
      %2906 = vmatprep.mubr.bf16.mxu0 %v2545
      %2907 = vmatmul.mubr.bf16.gmra.mrb[0].mxu0 %v2539
      %v2908 = vpop.f32.mrb[0].mxu0
      %v2909 = vadd.f32 %v2704, %v2908
      %v2910 = vpop.f32.mrb[0].mxu0
      %v2911 = vpop.f32.mrb[0].mxu0
      %v2912 = vadd.f32 %v2704, %v2911
      %v2913 = vpop.f32.mrb[0].mxu0
      %2914 = vmatprep.mubr.bf16.mxu0 %v2548
      %2915 = vmatmul.mubr.bf16.gmra.mrb[0].mxu0 %v2542
      %v2916 = vpop.f32.mrb[0].mxu0
      %v2917 = vadd.f32 %v2704, %v2916
      %v2918 = vpop.f32.mrb[0].mxu0
      %v2919 = vpop.f32.mrb[0].mxu0
      %v2920 = vadd.f32 %v2704, %v2919
      %v2921 = vpop.f32.mrb[0].mxu0
      %2922 = vmatprep.mubr.bf16.mxu0 %v2551
      %2923 = vmatmul.mubr.bf16.gmra.mrb[0].mxu0 %v2545
      %v2924 = vpop.f32.mrb[0].mxu0
      %v2925 = vadd.f32 %v2704, %v2924
      %v2926 = vpop.f32.mrb[0].mxu0
      %v2927 = vpop.f32.mrb[0].mxu0
      %v2928 = vadd.f32 %v2704, %v2927
      %v2929 = vpop.f32.mrb[0].mxu0
      %2930 = vmatprep.mubr.bf16.mxu0 %v2554
      %2931 = vmatmul.mubr.bf16.gmra.mrb[0].mxu0 %v2548
      %v2932 = vpop.f32.mrb[0].mxu0
      %v2933 = vadd.f32 %v2704, %v2932
      %v2934 = vpop.f32.mrb[0].mxu0
      %v2935 = vpop.f32.mrb[0].mxu0
      %v2936 = vadd.f32 %v2704, %v2935
      %v2937 = vpop.f32.mrb[0].mxu0
      %2938 = vmatprep.mubr.bf16.mxu0 %v2557
      %2939 = vmatmul.mubr.bf16.gmra.mrb[0].mxu0 %v2551
      %v2940 = vpop.f32.mrb[0].mxu0
      %v2941 = vadd.f32 %v2704, %v2940
      %v2942 = vpop.f32.mrb[0].mxu0
      %v2943 = vpop.f32.mrb[0].mxu0
      %v2944 = vadd.f32 %v2704, %v2943
      %v2945 = vpop.f32.mrb[0].mxu0
      %2946 = vmatprep.mubr.bf16.mxu0 %v2656
      %2947 = vmatmul.mubr.bf16.gmra.mrb[0].mxu0 %v2554
      %v2948 = vpop.f32.mrb[0].mxu0
      %v2949 = vadd.f32 %v2704, %v2948
      %v2950 = vpop.f32.mrb[0].mxu0
      %v2951 = vpop.f32.mrb[0].mxu0
      %v2952 = vadd.f32 %v2704, %v2951
      %v2953 = vpop.f32.mrb[0].mxu0
      %2954 = vmatprep.mubr.bf16.mxu0 %v2659
      %2955 = vmatmul.mubr.bf16.gmra.mrb[0].mxu0 %v2557
      %v2956 = vpop.f32.mrb[0].mxu0
      %v2957 = vadd.f32 %v2704, %v2956
      %v2958 = vpop.f32.mrb[0].mxu0
      %v2959 = vpop.f32.mrb[0].mxu0
      %v2960 = vadd.f32 %v2704, %v2959
      %v2961 = vpop.f32.mrb[0].mxu0
      %2962 = vmatprep.mubr.bf16.mxu0 %v2566
      %2963 = vmatmul.mubr.bf16.gmra.mrb[0].mxu0 %v2560
      %v2964 = vpop.f32.mrb[0].mxu0
      %v2965 = vadd.f32 %v2704, %v2964
      %v2966 = vpop.f32.mrb[0].mxu0
      %v2967 = vpop.f32.mrb[0].mxu0
      %v2968 = vadd.f32 %v2704, %v2967
      %v2969 = vpop.f32.mrb[0].mxu0
      %2970 = vmatprep.mubr.bf16.mxu0 %v2569
      %2971 = vmatmul.mubr.bf16.gmra.mrb[0].mxu0 %v2563
      %v2972 = vpop.f32.mrb[0].mxu0
      %v2973 = vadd.f32 %v2704, %v2972
      %v2974 = vpop.f32.mrb[0].mxu0
      %v2975 = vpop.f32.mrb[0].mxu0
      %v2976 = vadd.f32 %v2704, %v2975
      %v2977 = vpop.f32.mrb[0].mxu0
      %2978 = vmatprep.mubr.bf16.mxu0 %v2572
      %2979 = vmatmul.mubr.bf16.gmra.mrb[0].mxu0 %v2566
      %v2980 = vpop.f32.mrb[0].mxu0
      %v2981 = vadd.f32 %v2704, %v2980
      %v2982 = vpop.f32.mrb[0].mxu0
      %v2983 = vpop.f32.mrb[0].mxu0
      %v2984 = vadd.f32 %v2704, %v2983
      %v2985 = vpop.f32.mrb[0].mxu0
      %2986 = vmatprep.mubr.bf16.mxu0 %v2575
      %2987 = vmatmul.mubr.bf16.gmra.mrb[0].mxu0 %v2569
      %v2988 = vpop.f32.mrb[0].mxu0
      %v2989 = vadd.f32 %v2704, %v2988
      %v2990 = vpop.f32.mrb[0].mxu0
      %v2991 = vpop.f32.mrb[0].mxu0
      %v2992 = vadd.f32 %v2704, %v2991
      %v2993 = vpop.f32.mrb[0].mxu0
      %2994 = vmatprep.mubr.bf16.mxu0 %v2578
      %2995 = vmatmul.mubr.bf16.gmra.mrb[0].mxu0 %v2572
      %v2996 = vpop.f32.mrb[0].mxu0
      %v2997 = vadd.f32 %v2704, %v2996
      %v2998 = vpop.f32.mrb[0].mxu0
      %v2999 = vpop.f32.mrb[0].mxu0
      %v3000 = vadd.f32 %v2704, %v2999
      %v3001 = vpop.f32.mrb[0].mxu0
      %3002 = vmatprep.mubr.bf16.mxu0 %v2581
      %3003 = vmatmul.mubr.bf16.gmra.mrb[0].mxu0 %v2575
      %v3004 = vpop.f32.mrb[0].mxu0
      %v3005 = vadd.f32 %v2704, %v3004
      %v3006 = vpop.f32.mrb[0].mxu0
      %v3007 = vpop.f32.mrb[0].mxu0
      %v3008 = vadd.f32 %v2704, %v3007
      %v3009 = vpop.f32.mrb[0].mxu0
      %3010 = vmatprep.mubr.bf16.mxu0 %v2584
      %3011 = vmatmul.mubr.bf16.gmra.mrb[0].mxu0 %v2578
      %v3012 = vpop.f32.mrb[0].mxu0
      %v3013 = vadd.f32 %v2704, %v3012
      %v3014 = vpop.f32.mrb[0].mxu0
      %v3015 = vpop.f32.mrb[0].mxu0
      %v3016 = vadd.f32 %v2704, %v3015
      %v3017 = vpop.f32.mrb[0].mxu0
      %3018 = vmatprep.mubr.bf16.mxu0 %v2587
      %3019 = vmatmul.mubr.bf16.gmra.mrb[0].mxu0 %v2581
      %v3020 = vpop.f32.mrb[0].mxu0
      %v3021 = vadd.f32 %v2704, %v3020
      %v3022 = vpop.f32.mrb[0].mxu0
      %v3023 = vpop.f32.mrb[0].mxu0
      %v3024 = vadd.f32 %v2704, %v3023
      %v3025 = vpop.f32.mrb[0].mxu0
      %3026 = vmatprep.mubr.bf16.mxu0 %v2590
      %3027 = vmatmul.mubr.bf16.gmra.mrb[0].mxu0 %v2584
      %v3028 = vpop.f32.mrb[0].mxu0
      %v3029 = vadd.f32 %v2704, %v3028
      %v3030 = vpop.f32.mrb[0].mxu0
      %v3031 = vpop.f32.mrb[0].mxu0
      %v3032 = vadd.f32 %v2704, %v3031
      %v3033 = vpop.f32.mrb[0].mxu0
      %3034 = vmatprep.mubr.bf16.mxu0 %v2593
      %3035 = vmatmul.mubr.bf16.gmra.mrb[0].mxu0 %v2587
      %v3036 = vpop.f32.mrb[0].mxu0
      %v3037 = vadd.f32 %v2704, %v3036
      %v3038 = vpop.f32.mrb[0].mxu0
      %v3039 = vpop.f32.mrb[0].mxu0
      %v3040 = vadd.f32 %v2704, %v3039
      %v3041 = vpop.f32.mrb[0].mxu0
      %3042 = vmatprep.mubr.bf16.mxu0 %v2596
      %3043 = vmatmul.mubr.bf16.gmra.mrb[0].mxu0 %v2590
      %v3044 = vpop.f32.mrb[0].mxu0
      %v3045 = vadd.f32 %v2704, %v3044
      %v3046 = vpop.f32.mrb[0].mxu0
      %v3047 = vpop.f32.mrb[0].mxu0
      %v3048 = vadd.f32 %v2704, %v3047
      %v3049 = vpop.f32.mrb[0].mxu0
      %3050 = vmatprep.mubr.bf16.mxu0 %v2599
      %3051 = vmatmul.mubr.bf16.gmra.mrb[0].mxu0 %v2593
      %v3052 = vpop.f32.mrb[0].mxu0
      %v3053 = vadd.f32 %v2704, %v3052
      %v3054 = vpop.f32.mrb[0].mxu0
      %v3055 = vpop.f32.mrb[0].mxu0
      %v3056 = vadd.f32 %v2704, %v3055
      %v3057 = vpop.f32.mrb[0].mxu0
      %3058 = vmatprep.mubr.bf16.mxu0 %v2602
      %3059 = vmatmul.mubr.bf16.gmra.mrb[0].mxu0 %v2596
      %v3060 = vpop.f32.mrb[0].mxu0
      %v3061 = vadd.f32 %v2704, %v3060
      %v3062 = vpop.f32.mrb[0].mxu0
      %v3063 = vpop.f32.mrb[0].mxu0
      %v3064 = vadd.f32 %v2704, %v3063
      %v3065 = vpop.f32.mrb[0].mxu0
      %3066 = vmatprep.mubr.bf16.mxu0 %v2605
      %3067 = vmatmul.mubr.bf16.gmra.mrb[0].mxu0 %v2599
      %v3068 = vpop.f32.mrb[0].mxu0
      %v3069 = vadd.f32 %v2704, %v3068
      %v3070 = vpop.f32.mrb[0].mxu0
      %v3071 = vpop.f32.mrb[0].mxu0
      %v3072 = vadd.f32 %v2704, %v3071
      %v3073 = vpop.f32.mrb[0].mxu0
      %3074 = vmatprep.mubr.bf16.mxu0 %v2662
      %3075 = vmatmul.mubr.bf16.gmra.mrb[0].mxu0 %v2602
      %v3076 = vpop.f32.mrb[0].mxu0
      %v3077 = vadd.f32 %v2704, %v3076
      %v3078 = vpop.f32.mrb[0].mxu0
      %v3079 = vpop.f32.mrb[0].mxu0
      %v3080 = vadd.f32 %v2704, %v3079
      %v3081 = vpop.f32.mrb[0].mxu0
      %3082 = vmatprep.mubr.bf16.mxu0 %v2665
      %3083 = vmatmul.mubr.bf16.gmra.mrb[0].mxu0 %v2605
      %v3084 = vpop.f32.mrb[0].mxu0
      %v3085 = vadd.f32 %v2704, %v3084
      %v3086 = vpop.f32.mrb[0].mxu0
      %v3087 = vpop.f32.mrb[0].mxu0
      %v3088 = vadd.f32 %v2704, %v3087
      %v3089 = vpop.f32.mrb[0].mxu0
      %3090 = vdwg.mxu0
      %v3091 = vmax.f32 %v2837, 0.0
      %v3092 = vmax.f32 %v2840, 0.0
      %v3093 = vmax.f32 %v2845, 0.0
      %v3094 = vmax.f32 %v2848, 0.0
      %v3095 = vmax.f32 %v2853, 0.0
      %v3096 = vmax.f32 %v2856, 0.0
      %v3097 = vmax.f32 %v2861, 0.0
      %v3098 = vmax.f32 %v2864, 0.0
      %v3099 = vmax.f32 %v2869, 0.0
      %v3100 = vmax.f32 %v2872, 0.0
      %v3101 = vmax.f32 %v2877, 0.0
      %v3102 = vmax.f32 %v2880, 0.0
      %v3103 = vmax.f32 %v2885, 0.0
      %v3104 = vmax.f32 %v2888, 0.0
      %v3105 = vmax.f32 %v2893, 0.0
      %v3106 = vmax.f32 %v2896, 0.0
      %v3107 = vmax.f32 %v2901, 0.0
      %v3108 = vmax.f32 %v2904, 0.0
      %v3109 = vmax.f32 %v2909, 0.0
      %v3110 = vmax.f32 %v2912, 0.0
      %v3111 = vmax.f32 %v2917, 0.0
      %v3112 = vmax.f32 %v2920, 0.0
      %v3113 = vmax.f32 %v2925, 0.0
      %v3114 = vmax.f32 %v2928, 0.0
      %v3115 = vmax.f32 %v2933, 0.0
      %v3116 = vmax.f32 %v2936, 0.0
      %v3117 = vmax.f32 %v2941, 0.0
      %v3118 = vmax.f32 %v2944, 0.0
      %v3119 = vmax.f32 %v2949, 0.0
      %v3120 = vmax.f32 %v2952, 0.0
      %v3121 = vmax.f32 %v2957, 0.0
      %v3122 = vmax.f32 %v2960, 0.0
      %v3123 = vmax.f32 %v2965, 0.0
      %v3124 = vmax.f32 %v2968, 0.0
      %v3125 = vmax.f32 %v2973, 0.0
      %v3126 = vmax.f32 %v2976, 0.0
      %v3127 = vmax.f32 %v2981, 0.0
      %v3128 = vmax.f32 %v2984, 0.0
      %v3129 = vmax.f32 %v2989, 0.0
      %v3130 = vmax.f32 %v2992, 0.0
      %v3131 = vmax.f32 %v2997, 0.0
      %v3132 = vmax.f32 %v3000, 0.0
      %v3133 = vmax.f32 %v3005, 0.0
      %v3134 = vmax.f32 %v3008, 0.0
      %v3135 = vmax.f32 %v3013, 0.0
      %v3136 = vmax.f32 %v3016, 0.0
      %v3137 = vmax.f32 %v3021, 0.0
      %v3138 = vmax.f32 %v3024, 0.0
      %v3139 = vmax.f32 %v3029, 0.0
      %v3140 = vmax.f32 %v3032, 0.0
      %v3141 = vmax.f32 %v3037, 0.0
      %v3142 = vmax.f32 %v3040, 0.0
      %v3143 = vmax.f32 %v3045, 0.0
      %v3144 = vmax.f32 %v3048, 0.0
      %v3145 = vmax.f32 %v3053, 0.0
      %v3146 = vmax.f32 %v3056, 0.0
      %v3147 = vmax.f32 %v3061, 0.0
      %v3148 = vmax.f32 %v3064, 0.0
      %v3149 = vmax.f32 %v3069, 0.0
      %v3150 = vmax.f32 %v3072, 0.0
      %v3151 = vmax.f32 %v3077, 0.0
      %v3152 = vmax.f32 %v3080, 0.0
      %v3153 = vmax.f32 %v3085, 0.0
      %v3154 = vmax.f32 %v3088, 0.0
      %v3155 = vpack.c.bf16 %v3092, %v3091
      %v3156 = vpack.c.bf16 %v3094, %v3093
      %v3157 = vpack.c.bf16 %v3096, %v3095
      %v3158 = vpack.c.bf16 %v3098, %v3097
      %v3159 = vpack.c.bf16 %v3100, %v3099
      %v3160 = vpack.c.bf16 %v3102, %v3101
      %v3161 = vpack.c.bf16 %v3104, %v3103
      %v3162 = vpack.c.bf16 %v3106, %v3105
      %v3163 = vpack.c.bf16 %v3108, %v3107
      %v3164 = vpack.c.bf16 %v3110, %v3109
      %v3165 = vpack.c.bf16 %v3112, %v3111
      %v3166 = vpack.c.bf16 %v3114, %v3113
      %v3167 = vpack.c.bf16 %v3116, %v3115
      %v3168 = vpack.c.bf16 %v3118, %v3117
      %v3169 = vpack.c.bf16 %v3120, %v3119
      %v3170 = vpack.c.bf16 %v3122, %v3121
      %v3171 = vpack.c.bf16 %v3124, %v3123
      %v3172 = vpack.c.bf16 %v3126, %v3125
      %v3173 = vpack.c.bf16 %v3128, %v3127
      %v3174 = vpack.c.bf16 %v3130, %v3129
      %v3175 = vpack.c.bf16 %v3132, %v3131
      %v3176 = vpack.c.bf16 %v3134, %v3133
      %v3177 = vpack.c.bf16 %v3136, %v3135
      %v3178 = vpack.c.bf16 %v3138, %v3137
      %v3179 = vpack.c.bf16 %v3140, %v3139
      %v3180 = vpack.c.bf16 %v3142, %v3141
      %v3181 = vpack.c.bf16 %v3144, %v3143
      %v3182 = vpack.c.bf16 %v3146, %v3145
      %v3183 = vpack.c.bf16 %v3148, %v3147
      %v3184 = vpack.c.bf16 %v3150, %v3149
      %v3185 = vpack.c.bf16 %v3152, %v3151
      %v3186 = vpack.c.bf16 %v3154, %v3153
      %v3188 = vshrl.u32 %v3155, 16
      %v3190 = vrot.slane %v3188, 7
      %v3191 = vshll.u32 %v3155, 16
      %v3193 = vor.u32 %v3190, %v3191
      %v3195 = vshrl.u32 %v3156, 16
      %v3197 = vrot.slane %v3195, 7
      %v3198 = vshll.u32 %v3156, 16
      %v3200 = vor.u32 %v3197, %v3198
      %v3202 = vshrl.u32 %v3157, 16
      %v3204 = vrot.slane %v3202, 7
      %v3205 = vshll.u32 %v3157, 16
      %v3207 = vor.u32 %v3204, %v3205
      %v3209 = vshrl.u32 %v3158, 16
      %v3211 = vrot.slane %v3209, 7
      %v3212 = vshll.u32 %v3158, 16
      %v3214 = vor.u32 %v3211, %v3212
      %v3216 = vshrl.u32 %v3159, 16
      %v3218 = vrot.slane %v3216, 7
      %v3219 = vshll.u32 %v3159, 16
      %v3221 = vor.u32 %v3218, %v3219
      %v3223 = vshrl.u32 %v3160, 16
      %v3225 = vrot.slane %v3223, 7
      %v3226 = vshll.u32 %v3160, 16
      %v3228 = vor.u32 %v3225, %v3226
      %v3230 = vshrl.u32 %v3161, 16
      %v3232 = vrot.slane %v3230, 7
      %v3233 = vshll.u32 %v3161, 16
      %v3235 = vor.u32 %v3232, %v3233
      %v3237 = vshrl.u32 %v3162, 16
      %v3239 = vrot.slane %v3237, 7
      %v3240 = vshll.u32 %v3162, 16
      %v3242 = vor.u32 %v3239, %v3240
      %v3244 = vshrl.u32 %v3163, 16
      %v3246 = vrot.slane %v3244, 7
      %v3247 = vshll.u32 %v3163, 16
      %v3249 = vor.u32 %v3246, %v3247
      %v3251 = vshrl.u32 %v3164, 16
      %v3253 = vrot.slane %v3251, 7
      %v3254 = vshll.u32 %v3164, 16
      %v3256 = vor.u32 %v3253, %v3254
      %v3258 = vshrl.u32 %v3165, 16
      %v3260 = vrot.slane %v3258, 7
      %v3261 = vshll.u32 %v3165, 16
      %v3263 = vor.u32 %v3260, %v3261
      %v3265 = vshrl.u32 %v3166, 16
      %v3267 = vrot.slane %v3265, 7
      %v3268 = vshll.u32 %v3166, 16
      %v3270 = vor.u32 %v3267, %v3268
      %v3272 = vshrl.u32 %v3167, 16
      %v3274 = vrot.slane %v3272, 7
      %v3275 = vshll.u32 %v3167, 16
      %v3277 = vor.u32 %v3274, %v3275
      %v3279 = vshrl.u32 %v3168, 16
      %v3281 = vrot.slane %v3279, 7
      %v3282 = vshll.u32 %v3168, 16
      %v3284 = vor.u32 %v3281, %v3282
      %v3286 = vshrl.u32 %v3169, 16
      %v3288 = vrot.slane %v3286, 7
      %v3289 = vshll.u32 %v3169, 16
      %v3291 = vor.u32 %v3288, %v3289
      %v3293 = vshrl.u32 %v3170, 16
      %v3295 = vrot.slane %v3293, 7
      %v3296 = vshll.u32 %v3170, 16
      %v3298 = vor.u32 %v3295, %v3296
      %v3300 = vshrl.u32 %v3171, 16
      %v3302 = vrot.slane %v3300, 7
      %v3303 = vshll.u32 %v3171, 16
      %v3305 = vor.u32 %v3302, %v3303
      %v3307 = vshrl.u32 %v3172, 16
      %v3309 = vrot.slane %v3307, 7
      %v3310 = vshll.u32 %v3172, 16
      %v3312 = vor.u32 %v3309, %v3310
      %v3314 = vshrl.u32 %v3173, 16
      %v3316 = vrot.slane %v3314, 7
      %v3317 = vshll.u32 %v3173, 16
      %v3319 = vor.u32 %v3316, %v3317
      %v3321 = vshrl.u32 %v3174, 16
      %v3323 = vrot.slane %v3321, 7
      %v3324 = vshll.u32 %v3174, 16
      %v3326 = vor.u32 %v3323, %v3324
      %v3328 = vshrl.u32 %v3175, 16
      %v3330 = vrot.slane %v3328, 7
      %v3331 = vshll.u32 %v3175, 16
      %v3333 = vor.u32 %v3330, %v3331
      %v3335 = vshrl.u32 %v3176, 16
      %v3337 = vrot.slane %v3335, 7
      %v3338 = vshll.u32 %v3176, 16
      %v3340 = vor.u32 %v3337, %v3338
      %v3342 = vshrl.u32 %v3177, 16
      %v3344 = vrot.slane %v3342, 7
      %v3345 = vshll.u32 %v3177, 16
      %v3347 = vor.u32 %v3344, %v3345
      %v3349 = vshrl.u32 %v3178, 16
      %v3351 = vrot.slane %v3349, 7
      %v3352 = vshll.u32 %v3178, 16
      %v3354 = vor.u32 %v3351, %v3352
      %v3356 = vshrl.u32 %v3179, 16
      %v3358 = vrot.slane %v3356, 7
      %v3359 = vshll.u32 %v3179, 16
      %v3361 = vor.u32 %v3358, %v3359
      %v3363 = vshrl.u32 %v3180, 16
      %v3365 = vrot.slane %v3363, 7
      %v3366 = vshll.u32 %v3180, 16
      %v3368 = vor.u32 %v3365, %v3366
      %v3370 = vshrl.u32 %v3181, 16
      %v3372 = vrot.slane %v3370, 7
      %v3373 = vshll.u32 %v3181, 16
      %v3375 = vor.u32 %v3372, %v3373
      %v3377 = vshrl.u32 %v3182, 16
      %v3379 = vrot.slane %v3377, 7
      %v3380 = vshll.u32 %v3182, 16
      %v3382 = vor.u32 %v3379, %v3380
      %v3384 = vshrl.u32 %v3183, 16
      %v3386 = vrot.slane %v3384, 7
      %v3387 = vshll.u32 %v3183, 16
      %v3389 = vor.u32 %v3386, %v3387
      %v3391 = vshrl.u32 %v3184, 16
      %v3393 = vrot.slane %v3391, 7
      %v3394 = vshll.u32 %v3184, 16
      %v3396 = vor.u32 %v3393, %v3394
      %v3398 = vshrl.u32 %v3185, 16
      %v3400 = vrot.slane %v3398, 7
      %v3401 = vshll.u32 %v3185, 16
      %v3403 = vor.u32 %v3400, %v3401
      %v3405 = vshrl.u32 %v3186, 16
      %v3407 = vrot.slane %v3405, 7
      %v3408 = vshll.u32 %v3186, 16
      %v3410 = vor.u32 %v3407, %v3408
      %vm3475 = vcmask 1040384
      %vm3476 = vsmask.f32 256
      %vm3477 = vmand %vm3475, %vm3476
      %v3478 = vsel %vm3477, 0, %v3193
      %v3479 = vsel %vm3477, 0, %v3200
      %v3480 = vsel %vm3477, 0, %v3207
      %v3481 = vsel %vm3477, 0, %v3214
      %v3482 = vsel %vm3477, 0, %v3221
      %v3483 = vsel %vm3477, 0, %v3228
      %v3484 = vsel %vm3477, 0, %v3235
      %v3485 = vsel %vm3477, 0, %v3242
      %v3486 = vsel %vm3477, 0, %v3249
      %v3487 = vsel %vm3477, 0, %v3256
      %v3488 = vsel %vm3477, 0, %v3263
      %v3489 = vsel %vm3477, 0, %v3270
      %v3490 = vsel %vm3477, 0, %v3277
      %v3491 = vsel %vm3477, 0, %v3284
      %v3492 = vsel %vm3477, 0, %v3291
      %v3493 = vsel %vm3477, 0, %v3298
      %v3494 = vsel %vm3477, 0, %v3305
      %v3495 = vsel %vm3477, 0, %v3312
      %v3496 = vsel %vm3477, 0, %v3319
      %v3497 = vsel %vm3477, 0, %v3326
      %v3498 = vsel %vm3477, 0, %v3333
      %v3499 = vsel %vm3477, 0, %v3340
      %v3500 = vsel %vm3477, 0, %v3347
      %v3501 = vsel %vm3477, 0, %v3354
      %v3502 = vsel %vm3477, 0, %v3361
      %v3503 = vsel %vm3477, 0, %v3368
      %v3504 = vsel %vm3477, 0, %v3375
      %v3505 = vsel %vm3477, 0, %v3382
      %v3506 = vsel %vm3477, 0, %v3389
      %v3507 = vsel %vm3477, 0, %v3396
      %v3508 = vsel %vm3477, 0, %v3403
      %v3509 = vsel %vm3477, 0, %v3410
      %v3510 = vsel %vm3477, %v3190, 0
      %v3511 = vsel %vm3477, %v3197, 0
      %v3512 = vsel %vm3477, %v3204, 0
      %v3513 = vsel %vm3477, %v3211, 0
      %v3514 = vsel %vm3477, %v3218, 0
      %v3515 = vsel %vm3477, %v3225, 0
      %v3516 = vsel %vm3477, %v3232, 0
      %v3517 = vsel %vm3477, %v3239, 0
      %v3518 = vsel %vm3477, %v3246, 0
      %v3519 = vsel %vm3477, %v3253, 0
      %v3520 = vsel %vm3477, %v3260, 0
      %v3521 = vsel %vm3477, %v3267, 0
      %v3522 = vsel %vm3477, %v3274, 0
      %v3523 = vsel %vm3477, %v3281, 0
      %v3524 = vsel %vm3477, %v3288, 0
      %v3525 = vsel %vm3477, %v3295, 0
      %v3526 = vsel %vm3477, %v3302, 0
      %v3527 = vsel %vm3477, %v3309, 0
      %v3528 = vsel %vm3477, %v3316, 0
      %v3529 = vsel %vm3477, %v3323, 0
      %v3530 = vsel %vm3477, %v3330, 0
      %v3531 = vsel %vm3477, %v3337, 0
      %v3532 = vsel %vm3477, %v3344, 0
      %v3533 = vsel %vm3477, %v3351, 0
      %v3534 = vsel %vm3477, %v3358, 0
      %v3535 = vsel %vm3477, %v3365, 0
      %v3536 = vsel %vm3477, %v3372, 0
      %v3537 = vsel %vm3477, %v3379, 0
      %v3538 = vsel %vm3477, %v3386, 0
      %v3539 = vsel %vm3477, %v3393, 0
      %v3540 = vsel %vm3477, %v3400, 0
      %v3541 = vsel %vm3477, %v3407, 0
      %v3543 = vshrl.u32 %v3478, 16
      %v3545 = vshll.u32 %v3478, 16
      %v3547 = vrot.slane %v3545, 1
      %v3548 = vor.u32 %v3543, %v3547
      %v3550 = vshll.u32 %v3510, 16
      %v3552 = vrot.slane %v3550, 1
      %v3553 = vsel %vm653, %v3548, %v3552
      %v3555 = vshrl.u32 %v3479, 16
      %v3557 = vshll.u32 %v3479, 16
      %v3559 = vrot.slane %v3557, 1
      %v3560 = vor.u32 %v3555, %v3559
      %v3562 = vshll.u32 %v3511, 16
      %v3564 = vrot.slane %v3562, 1
      %v3565 = vsel %vm653, %v3560, %v3564
      %v3567 = vshrl.u32 %v3480, 16
      %v3569 = vshll.u32 %v3480, 16
      %v3571 = vrot.slane %v3569, 1
      %v3572 = vor.u32 %v3567, %v3571
      %v3574 = vshll.u32 %v3512, 16
      %v3576 = vrot.slane %v3574, 1
      %v3577 = vsel %vm653, %v3572, %v3576
      %v3579 = vshrl.u32 %v3481, 16
      %v3581 = vshll.u32 %v3481, 16
      %v3583 = vrot.slane %v3581, 1
      %v3584 = vor.u32 %v3579, %v3583
      %v3586 = vshll.u32 %v3513, 16
      %v3588 = vrot.slane %v3586, 1
      %v3589 = vsel %vm653, %v3584, %v3588
      %v3591 = vshrl.u32 %v3482, 16
      %v3593 = vshll.u32 %v3482, 16
      %v3595 = vrot.slane %v3593, 1
      %v3596 = vor.u32 %v3591, %v3595
      %v3598 = vshll.u32 %v3514, 16
      %v3600 = vrot.slane %v3598, 1
      %v3601 = vsel %vm653, %v3596, %v3600
      %v3603 = vshrl.u32 %v3483, 16
      %v3605 = vshll.u32 %v3483, 16
      %v3607 = vrot.slane %v3605, 1
      %v3608 = vor.u32 %v3603, %v3607
      %v3610 = vshll.u32 %v3515, 16
      %v3612 = vrot.slane %v3610, 1
      %v3613 = vsel %vm653, %v3608, %v3612
      %v3615 = vshrl.u32 %v3484, 16
      %v3617 = vshll.u32 %v3484, 16
      %v3619 = vrot.slane %v3617, 1
      %v3620 = vor.u32 %v3615, %v3619
      %v3622 = vshll.u32 %v3516, 16
      %v3624 = vrot.slane %v3622, 1
      %v3625 = vsel %vm653, %v3620, %v3624
      %v3627 = vshrl.u32 %v3485, 16
      %v3629 = vshll.u32 %v3485, 16
      %v3631 = vrot.slane %v3629, 1
      %v3632 = vor.u32 %v3627, %v3631
      %v3634 = vshll.u32 %v3517, 16
      %v3636 = vrot.slane %v3634, 1
      %v3637 = vsel %vm653, %v3632, %v3636
      %v3639 = vshrl.u32 %v3486, 16
      %v3641 = vshll.u32 %v3486, 16
      %v3643 = vrot.slane %v3641, 1
      %v3644 = vor.u32 %v3639, %v3643
      %v3646 = vshll.u32 %v3518, 16
      %v3648 = vrot.slane %v3646, 1
      %v3649 = vsel %vm653, %v3644, %v3648
      %v3651 = vshrl.u32 %v3487, 16
      %v3653 = vshll.u32 %v3487, 16
      %v3655 = vrot.slane %v3653, 1
      %v3656 = vor.u32 %v3651, %v3655
      %v3658 = vshll.u32 %v3519, 16
      %v3660 = vrot.slane %v3658, 1
      %v3661 = vsel %vm653, %v3656, %v3660
      %v3663 = vshrl.u32 %v3488, 16
      %v3665 = vshll.u32 %v3488, 16
      %v3667 = vrot.slane %v3665, 1
      %v3668 = vor.u32 %v3663, %v3667
      %v3670 = vshll.u32 %v3520, 16
      %v3672 = vrot.slane %v3670, 1
      %v3673 = vsel %vm653, %v3668, %v3672
      %v3675 = vshrl.u32 %v3489, 16
      %v3677 = vshll.u32 %v3489, 16
      %v3679 = vrot.slane %v3677, 1
      %v3680 = vor.u32 %v3675, %v3679
      %v3682 = vshll.u32 %v3521, 16
      %v3684 = vrot.slane %v3682, 1
      %v3685 = vsel %vm653, %v3680, %v3684
      %v3687 = vshrl.u32 %v3490, 16
      %v3689 = vshll.u32 %v3490, 16
      %v3691 = vrot.slane %v3689, 1
      %v3692 = vor.u32 %v3687, %v3691
      %v3694 = vshll.u32 %v3522, 16
      %v3696 = vrot.slane %v3694, 1
      %v3697 = vsel %vm653, %v3692, %v3696
      %v3699 = vshrl.u32 %v3491, 16
      %v3701 = vshll.u32 %v3491, 16
      %v3703 = vrot.slane %v3701, 1
      %v3704 = vor.u32 %v3699, %v3703
      %v3706 = vshll.u32 %v3523, 16
      %v3708 = vrot.slane %v3706, 1
      %v3709 = vsel %vm653, %v3704, %v3708
      %v3711 = vshrl.u32 %v3492, 16
      %v3713 = vshll.u32 %v3492, 16
      %v3715 = vrot.slane %v3713, 1
      %v3716 = vor.u32 %v3711, %v3715
      %v3718 = vshll.u32 %v3524, 16
      %v3720 = vrot.slane %v3718, 1
      %v3721 = vsel %vm653, %v3716, %v3720
      %v3723 = vshrl.u32 %v3493, 16
      %v3725 = vshll.u32 %v3493, 16
      %v3727 = vrot.slane %v3725, 1
      %v3728 = vor.u32 %v3723, %v3727
      %v3730 = vshll.u32 %v3525, 16
      %v3732 = vrot.slane %v3730, 1
      %v3733 = vsel %vm653, %v3728, %v3732
      %v3735 = vshrl.u32 %v3494, 16
      %v3737 = vshll.u32 %v3494, 16
      %v3739 = vrot.slane %v3737, 1
      %v3740 = vor.u32 %v3735, %v3739
      %v3742 = vshll.u32 %v3526, 16
      %v3744 = vrot.slane %v3742, 1
      %v3745 = vsel %vm653, %v3740, %v3744
      %v3747 = vshrl.u32 %v3495, 16
      %v3749 = vshll.u32 %v3495, 16
      %v3751 = vrot.slane %v3749, 1
      %v3752 = vor.u32 %v3747, %v3751
      %v3754 = vshll.u32 %v3527, 16
      %v3756 = vrot.slane %v3754, 1
      %v3757 = vsel %vm653, %v3752, %v3756
      %v3759 = vshrl.u32 %v3496, 16
      %v3761 = vshll.u32 %v3496, 16
      %v3763 = vrot.slane %v3761, 1
      %v3764 = vor.u32 %v3759, %v3763
      %v3766 = vshll.u32 %v3528, 16
      %v3768 = vrot.slane %v3766, 1
      %v3769 = vsel %vm653, %v3764, %v3768
      %v3771 = vshrl.u32 %v3497, 16
      %v3773 = vshll.u32 %v3497, 16
      %v3775 = vrot.slane %v3773, 1
      %v3776 = vor.u32 %v3771, %v3775
      %v3778 = vshll.u32 %v3529, 16
      %v3780 = vrot.slane %v3778, 1
      %v3781 = vsel %vm653, %v3776, %v3780
      %v3783 = vshrl.u32 %v3498, 16
      %v3785 = vshll.u32 %v3498, 16
      %v3787 = vrot.slane %v3785, 1
      %v3788 = vor.u32 %v3783, %v3787
      %v3790 = vshll.u32 %v3530, 16
      %v3792 = vrot.slane %v3790, 1
      %v3793 = vsel %vm653, %v3788, %v3792
      %v3795 = vshrl.u32 %v3499, 16
      %v3797 = vshll.u32 %v3499, 16
      %v3799 = vrot.slane %v3797, 1
      %v3800 = vor.u32 %v3795, %v3799
      %v3802 = vshll.u32 %v3531, 16
      %v3804 = vrot.slane %v3802, 1
      %v3805 = vsel %vm653, %v3800, %v3804
      %v3807 = vshrl.u32 %v3500, 16
      %v3809 = vshll.u32 %v3500, 16
      %v3811 = vrot.slane %v3809, 1
      %v3812 = vor.u32 %v3807, %v3811
      %v3814 = vshll.u32 %v3532, 16
      %v3816 = vrot.slane %v3814, 1
      %v3817 = vsel %vm653, %v3812, %v3816
      %v3819 = vshrl.u32 %v3501, 16
      %v3821 = vshll.u32 %v3501, 16
      %v3823 = vrot.slane %v3821, 1
      %v3824 = vor.u32 %v3819, %v3823
      %v3826 = vshll.u32 %v3533, 16
      %v3828 = vrot.slane %v3826, 1
      %v3829 = vsel %vm653, %v3824, %v3828
      %v3831 = vshrl.u32 %v3502, 16
      %v3833 = vshll.u32 %v3502, 16
      %v3835 = vrot.slane %v3833, 1
      %v3836 = vor.u32 %v3831, %v3835
      %v3838 = vshll.u32 %v3534, 16
      %v3840 = vrot.slane %v3838, 1
      %v3841 = vsel %vm653, %v3836, %v3840
      %v3843 = vshrl.u32 %v3503, 16
      %v3845 = vshll.u32 %v3503, 16
      %v3847 = vrot.slane %v3845, 1
      %v3848 = vor.u32 %v3843, %v3847
      %v3850 = vshll.u32 %v3535, 16
      %v3852 = vrot.slane %v3850, 1
      %v3853 = vsel %vm653, %v3848, %v3852
      %v3855 = vshrl.u32 %v3504, 16
      %v3857 = vshll.u32 %v3504, 16
      %v3859 = vrot.slane %v3857, 1
      %v3860 = vor.u32 %v3855, %v3859
      %v3862 = vshll.u32 %v3536, 16
      %v3864 = vrot.slane %v3862, 1
      %v3865 = vsel %vm653, %v3860, %v3864
      %v3867 = vshrl.u32 %v3505, 16
      %v3869 = vshll.u32 %v3505, 16
      %v3871 = vrot.slane %v3869, 1
      %v3872 = vor.u32 %v3867, %v3871
      %v3874 = vshll.u32 %v3537, 16
      %v3876 = vrot.slane %v3874, 1
      %v3877 = vsel %vm653, %v3872, %v3876
      %v3879 = vshrl.u32 %v3506, 16
      %v3881 = vshll.u32 %v3506, 16
      %v3883 = vrot.slane %v3881, 1
      %v3884 = vor.u32 %v3879, %v3883
      %v3886 = vshll.u32 %v3538, 16
      %v3888 = vrot.slane %v3886, 1
      %v3889 = vsel %vm653, %v3884, %v3888
      %v3891 = vshrl.u32 %v3507, 16
      %v3893 = vshll.u32 %v3507, 16
      %v3895 = vrot.slane %v3893, 1
      %v3896 = vor.u32 %v3891, %v3895
      %v3898 = vshll.u32 %v3539, 16
      %v3900 = vrot.slane %v3898, 1
      %v3901 = vsel %vm653, %v3896, %v3900
      %v3903 = vshrl.u32 %v3508, 16
      %v3905 = vshll.u32 %v3508, 16
      %v3907 = vrot.slane %v3905, 1
      %v3908 = vor.u32 %v3903, %v3907
      %v3910 = vshll.u32 %v3540, 16
      %v3912 = vrot.slane %v3910, 1
      %v3913 = vsel %vm653, %v3908, %v3912
      %v3915 = vshrl.u32 %v3509, 16
      %v3917 = vshll.u32 %v3509, 16
      %v3919 = vrot.slane %v3917, 1
      %v3920 = vor.u32 %v3915, %v3919
      %v3922 = vshll.u32 %v3541, 16
      %v3924 = vrot.slane %v3922, 1
      %v3925 = vsel %vm653, %v3920, %v3924
      %v3958 = vmax.bf16 %v3478, %v3553
      %v3959 = vmax.bf16 %v3479, %v3565
      %v3960 = vmax.bf16 %v3480, %v3577
      %v3961 = vmax.bf16 %v3481, %v3589
      %v3962 = vmax.bf16 %v3482, %v3601
      %v3963 = vmax.bf16 %v3483, %v3613
      %v3964 = vmax.bf16 %v3484, %v3625
      %v3965 = vmax.bf16 %v3485, %v3637
      %v3966 = vmax.bf16 %v3486, %v3649
      %v3967 = vmax.bf16 %v3487, %v3661
      %v3968 = vmax.bf16 %v3488, %v3673
      %v3969 = vmax.bf16 %v3489, %v3685
      %v3970 = vmax.bf16 %v3490, %v3697
      %v3971 = vmax.bf16 %v3491, %v3709
      %v3972 = vmax.bf16 %v3492, %v3721
      %v3973 = vmax.bf16 %v3493, %v3733
      %v3974 = vmax.bf16 %v3494, %v3745
      %v3975 = vmax.bf16 %v3495, %v3757
      %v3976 = vmax.bf16 %v3496, %v3769
      %v3977 = vmax.bf16 %v3497, %v3781
      %v3978 = vmax.bf16 %v3498, %v3793
      %v3979 = vmax.bf16 %v3499, %v3805
      %v3980 = vmax.bf16 %v3500, %v3817
      %v3981 = vmax.bf16 %v3501, %v3829
      %v3982 = vmax.bf16 %v3502, %v3841
      %v3983 = vmax.bf16 %v3503, %v3853
      %v3984 = vmax.bf16 %v3504, %v3865
      %v3985 = vmax.bf16 %v3505, %v3877
      %v3986 = vmax.bf16 %v3506, %v3889
      %v3987 = vmax.bf16 %v3507, %v3901
      %v3988 = vmax.bf16 %v3508, %v3913
      %v3989 = vmax.bf16 %v3509, %v3925
      %v4054 = vrot.slane %v3478, 1
      %v4055 = vrot.slane %v3510, 1
      %v4056 = vsel %vm1102, %v4054, %v4055
      %v4057 = vrot.slane %v3479, 1
      %v4058 = vrot.slane %v3511, 1
      %v4059 = vsel %vm1102, %v4057, %v4058
      %v4060 = vrot.slane %v3480, 1
      %v4061 = vrot.slane %v3512, 1
      %v4062 = vsel %vm1102, %v4060, %v4061
      %v4063 = vrot.slane %v3481, 1
      %v4064 = vrot.slane %v3513, 1
      %v4065 = vsel %vm1102, %v4063, %v4064
      %v4066 = vrot.slane %v3482, 1
      %v4067 = vrot.slane %v3514, 1
      %v4068 = vsel %vm1102, %v4066, %v4067
      %v4069 = vrot.slane %v3483, 1
      %v4070 = vrot.slane %v3515, 1
      %v4071 = vsel %vm1102, %v4069, %v4070
      %v4072 = vrot.slane %v3484, 1
      %v4073 = vrot.slane %v3516, 1
      %v4074 = vsel %vm1102, %v4072, %v4073
      %v4075 = vrot.slane %v3485, 1
      %v4076 = vrot.slane %v3517, 1
      %v4077 = vsel %vm1102, %v4075, %v4076
      %v4078 = vrot.slane %v3486, 1
      %v4079 = vrot.slane %v3518, 1
      %v4080 = vsel %vm1102, %v4078, %v4079
      %v4081 = vrot.slane %v3487, 1
      %v4082 = vrot.slane %v3519, 1
      %v4083 = vsel %vm1102, %v4081, %v4082
      %v4084 = vrot.slane %v3488, 1
      %v4085 = vrot.slane %v3520, 1
      %v4086 = vsel %vm1102, %v4084, %v4085
      %v4087 = vrot.slane %v3489, 1
      %v4088 = vrot.slane %v3521, 1
      %v4089 = vsel %vm1102, %v4087, %v4088
      %v4090 = vrot.slane %v3490, 1
      %v4091 = vrot.slane %v3522, 1
      %v4092 = vsel %vm1102, %v4090, %v4091
      %v4093 = vrot.slane %v3491, 1
      %v4094 = vrot.slane %v3523, 1
      %v4095 = vsel %vm1102, %v4093, %v4094
      %v4096 = vrot.slane %v3492, 1
      %v4097 = vrot.slane %v3524, 1
      %v4098 = vsel %vm1102, %v4096, %v4097
      %v4099 = vrot.slane %v3493, 1
      %v4100 = vrot.slane %v3525, 1
      %v4101 = vsel %vm1102, %v4099, %v4100
      %v4102 = vrot.slane %v3494, 1
      %v4103 = vrot.slane %v3526, 1
      %v4104 = vsel %vm1102, %v4102, %v4103
      %v4105 = vrot.slane %v3495, 1
      %v4106 = vrot.slane %v3527, 1
      %v4107 = vsel %vm1102, %v4105, %v4106
      %v4108 = vrot.slane %v3496, 1
      %v4109 = vrot.slane %v3528, 1
      %v4110 = vsel %vm1102, %v4108, %v4109
      %v4111 = vrot.slane %v3497, 1
      %v4112 = vrot.slane %v3529, 1
      %v4113 = vsel %vm1102, %v4111, %v4112
      %v4114 = vrot.slane %v3498, 1
      %v4115 = vrot.slane %v3530, 1
      %v4116 = vsel %vm1102, %v4114, %v4115
      %v4117 = vrot.slane %v3499, 1
      %v4118 = vrot.slane %v3531, 1
      %v4119 = vsel %vm1102, %v4117, %v4118
      %v4120 = vrot.slane %v3500, 1
      %v4121 = vrot.slane %v3532, 1
      %v4122 = vsel %vm1102, %v4120, %v4121
      %v4123 = vrot.slane %v3501, 1
      %v4124 = vrot.slane %v3533, 1
      %v4125 = vsel %vm1102, %v4123, %v4124
      %v4126 = vrot.slane %v3502, 1
      %v4127 = vrot.slane %v3534, 1
      %v4128 = vsel %vm1102, %v4126, %v4127
      %v4129 = vrot.slane %v3503, 1
      %v4130 = vrot.slane %v3535, 1
      %v4131 = vsel %vm1102, %v4129, %v4130
      %v4132 = vrot.slane %v3504, 1
      %v4133 = vrot.slane %v3536, 1
      %v4134 = vsel %vm1102, %v4132, %v4133
      %v4135 = vrot.slane %v3505, 1
      %v4136 = vrot.slane %v3537, 1
      %v4137 = vsel %vm1102, %v4135, %v4136
      %v4138 = vrot.slane %v3506, 1
      %v4139 = vrot.slane %v3538, 1
      %v4140 = vsel %vm1102, %v4138, %v4139
      %v4141 = vrot.slane %v3507, 1
      %v4142 = vrot.slane %v3539, 1
      %v4143 = vsel %vm1102, %v4141, %v4142
      %v4144 = vrot.slane %v3508, 1
      %v4145 = vrot.slane %v3540, 1
      %v4146 = vsel %vm1102, %v4144, %v4145
      %v4147 = vrot.slane %v3509, 1
      %v4148 = vrot.slane %v3541, 1
      %v4149 = vsel %vm1102, %v4147, %v4148
      %v4182 = vmax.bf16 %v3958, %v4056
      %v4183 = vmax.bf16 %v3959, %v4059
      %v4184 = vmax.bf16 %v3960, %v4062
      %v4185 = vmax.bf16 %v3961, %v4065
      %v4186 = vmax.bf16 %v3962, %v4068
      %v4187 = vmax.bf16 %v3963, %v4071
      %v4188 = vmax.bf16 %v3964, %v4074
      %v4189 = vmax.bf16 %v3965, %v4077
      %v4190 = vmax.bf16 %v3966, %v4080
      %v4191 = vmax.bf16 %v3967, %v4083
      %v4192 = vmax.bf16 %v3968, %v4086
      %v4193 = vmax.bf16 %v3969, %v4089
      %v4194 = vmax.bf16 %v3970, %v4092
      %v4195 = vmax.bf16 %v3971, %v4095
      %v4196 = vmax.bf16 %v3972, %v4098
      %v4197 = vmax.bf16 %v3973, %v4101
      %v4198 = vmax.bf16 %v3974, %v4104
      %v4199 = vmax.bf16 %v3975, %v4107
      %v4200 = vmax.bf16 %v3976, %v4110
      %v4201 = vmax.bf16 %v3977, %v4113
      %v4202 = vmax.bf16 %v3978, %v4116
      %v4203 = vmax.bf16 %v3979, %v4119
      %v4204 = vmax.bf16 %v3980, %v4122
      %v4205 = vmax.bf16 %v3981, %v4125
      %v4206 = vmax.bf16 %v3982, %v4128
      %v4207 = vmax.bf16 %v3983, %v4131
      %v4208 = vmax.bf16 %v3984, %v4134
      %v4209 = vmax.bf16 %v3985, %v4137
      %v4210 = vmax.bf16 %v3986, %v4140
      %v4211 = vmax.bf16 %v3987, %v4143
      %v4212 = vmax.bf16 %v3988, %v4146
      %v4213 = vmax.bf16 %v3989, %v4149
      %v4215 = vshll.u32 %v4182, 16
      %v4217 = vrot.slane %v4215, 1
      %v4219 = vshll.u32 %v4183, 16
      %v4221 = vrot.slane %v4219, 1
      %v4223 = vshll.u32 %v4184, 16
      %v4225 = vrot.slane %v4223, 1
      %v4227 = vshll.u32 %v4185, 16
      %v4229 = vrot.slane %v4227, 1
      %v4231 = vshll.u32 %v4186, 16
      %v4233 = vrot.slane %v4231, 1
      %v4235 = vshll.u32 %v4187, 16
      %v4237 = vrot.slane %v4235, 1
      %v4239 = vshll.u32 %v4188, 16
      %v4241 = vrot.slane %v4239, 1
      %v4243 = vshll.u32 %v4189, 16
      %v4245 = vrot.slane %v4243, 1
      %v4247 = vshll.u32 %v4190, 16
      %v4249 = vrot.slane %v4247, 1
      %v4251 = vshll.u32 %v4191, 16
      %v4253 = vrot.slane %v4251, 1
      %v4255 = vshll.u32 %v4192, 16
      %v4257 = vrot.slane %v4255, 1
      %v4259 = vshll.u32 %v4193, 16
      %v4261 = vrot.slane %v4259, 1
      %v4263 = vshll.u32 %v4194, 16
      %v4265 = vrot.slane %v4263, 1
      %v4267 = vshll.u32 %v4195, 16
      %v4269 = vrot.slane %v4267, 1
      %v4271 = vshll.u32 %v4196, 16
      %v4273 = vrot.slane %v4271, 1
      %v4275 = vshll.u32 %v4197, 16
      %v4277 = vrot.slane %v4275, 1
      %v4279 = vshll.u32 %v4198, 16
      %v4281 = vrot.slane %v4279, 1
      %v4283 = vshll.u32 %v4199, 16
      %v4285 = vrot.slane %v4283, 1
      %v4287 = vshll.u32 %v4200, 16
      %v4289 = vrot.slane %v4287, 1
      %v4291 = vshll.u32 %v4201, 16
      %v4293 = vrot.slane %v4291, 1
      %v4295 = vshll.u32 %v4202, 16
      %v4297 = vrot.slane %v4295, 1
      %v4299 = vshll.u32 %v4203, 16
      %v4301 = vrot.slane %v4299, 1
      %v4303 = vshll.u32 %v4204, 16
      %v4305 = vrot.slane %v4303, 1
      %v4307 = vshll.u32 %v4205, 16
      %v4309 = vrot.slane %v4307, 1
      %v4311 = vshll.u32 %v4206, 16
      %v4313 = vrot.slane %v4311, 1
      %v4315 = vshll.u32 %v4207, 16
      %v4317 = vrot.slane %v4315, 1
      %v4319 = vshll.u32 %v4208, 16
      %v4321 = vrot.slane %v4319, 1
      %v4323 = vshll.u32 %v4209, 16
      %v4325 = vrot.slane %v4323, 1
      %v4327 = vshll.u32 %v4210, 16
      %v4329 = vrot.slane %v4327, 1
      %v4331 = vshll.u32 %v4211, 16
      %v4333 = vrot.slane %v4331, 1
      %v4335 = vshll.u32 %v4212, 16
      %v4337 = vrot.slane %v4335, 1
      %v4339 = vshll.u32 %v4213, 16
      %v4341 = vrot.slane %v4339, 1
      %v4406 = vrot.slane %v4182, 1
      %v4407 = vrot.slane %v4183, 1
      %v4408 = vrot.slane %v4184, 1
      %v4409 = vrot.slane %v4185, 1
      %v4410 = vrot.slane %v4186, 1
      %v4411 = vrot.slane %v4187, 1
      %v4412 = vrot.slane %v4188, 1
      %v4413 = vrot.slane %v4189, 1
      %v4414 = vrot.slane %v4190, 1
      %v4415 = vrot.slane %v4191, 1
      %v4416 = vrot.slane %v4192, 1
      %v4417 = vrot.slane %v4193, 1
      %v4418 = vrot.slane %v4194, 1
      %v4419 = vrot.slane %v4195, 1
      %v4420 = vrot.slane %v4196, 1
      %v4421 = vrot.slane %v4197, 1
      %v4422 = vrot.slane %v4198, 1
      %v4423 = vrot.slane %v4199, 1
      %v4424 = vrot.slane %v4200, 1
      %v4425 = vrot.slane %v4201, 1
      %v4426 = vrot.slane %v4202, 1
      %v4427 = vrot.slane %v4203, 1
      %v4428 = vrot.slane %v4204, 1
      %v4429 = vrot.slane %v4205, 1
      %v4430 = vrot.slane %v4206, 1
      %v4431 = vrot.slane %v4207, 1
      %v4432 = vrot.slane %v4208, 1
      %v4433 = vrot.slane %v4209, 1
      %v4434 = vrot.slane %v4210, 1
      %v4435 = vrot.slane %v4211, 1
      %v4436 = vrot.slane %v4212, 1
      %v4437 = vrot.slane %v4213, 1
      %v4438 = vrot.slane %v4215, 2
      %v4439 = vrot.slane %v4219, 2
      %v4440 = vrot.slane %v4223, 2
      %v4441 = vrot.slane %v4227, 2
      %v4442 = vrot.slane %v4231, 2
      %v4443 = vrot.slane %v4235, 2
      %v4444 = vrot.slane %v4239, 2
      %v4445 = vrot.slane %v4243, 2
      %v4446 = vrot.slane %v4247, 2
      %v4447 = vrot.slane %v4251, 2
      %v4448 = vrot.slane %v4255, 2
      %v4449 = vrot.slane %v4259, 2
      %v4450 = vrot.slane %v4263, 2
      %v4451 = vrot.slane %v4267, 2
      %v4452 = vrot.slane %v4271, 2
      %v4453 = vrot.slane %v4275, 2
      %v4454 = vrot.slane %v4279, 2
      %v4455 = vrot.slane %v4283, 2
      %v4456 = vrot.slane %v4287, 2
      %v4457 = vrot.slane %v4291, 2
      %v4458 = vrot.slane %v4295, 2
      %v4459 = vrot.slane %v4299, 2
      %v4460 = vrot.slane %v4303, 2
      %v4461 = vrot.slane %v4307, 2
      %v4462 = vrot.slane %v4311, 2
      %v4463 = vrot.slane %v4315, 2
      %v4464 = vrot.slane %v4319, 2
      %v4465 = vrot.slane %v4323, 2
      %v4466 = vrot.slane %v4327, 2
      %v4467 = vrot.slane %v4331, 2
      %v4468 = vrot.slane %v4335, 2
      %v4469 = vrot.slane %v4339, 2
      %v4502 = vrot.slane %v4182, 2
      %v4503 = vrot.slane %v4183, 2
      %v4504 = vrot.slane %v4184, 2
      %v4505 = vrot.slane %v4185, 2
      %v4506 = vrot.slane %v4186, 2
      %v4507 = vrot.slane %v4187, 2
      %v4508 = vrot.slane %v4188, 2
      %v4509 = vrot.slane %v4189, 2
      %v4510 = vrot.slane %v4190, 2
      %v4511 = vrot.slane %v4191, 2
      %v4512 = vrot.slane %v4192, 2
      %v4513 = vrot.slane %v4193, 2
      %v4514 = vrot.slane %v4194, 2
      %v4515 = vrot.slane %v4195, 2
      %v4516 = vrot.slane %v4196, 2
      %v4517 = vrot.slane %v4197, 2
      %v4518 = vrot.slane %v4198, 2
      %v4519 = vrot.slane %v4199, 2
      %v4520 = vrot.slane %v4200, 2
      %v4521 = vrot.slane %v4201, 2
      %v4522 = vrot.slane %v4202, 2
      %v4523 = vrot.slane %v4203, 2
      %v4524 = vrot.slane %v4204, 2
      %v4525 = vrot.slane %v4205, 2
      %v4526 = vrot.slane %v4206, 2
      %v4527 = vrot.slane %v4207, 2
      %v4528 = vrot.slane %v4208, 2
      %v4529 = vrot.slane %v4209, 2
      %v4530 = vrot.slane %v4210, 2
      %v4531 = vrot.slane %v4211, 2
      %v4532 = vrot.slane %v4212, 2
      %v4533 = vrot.slane %v4213, 2
      %v4534 = vrot.slane %v4215, 3
      %v4535 = vrot.slane %v4219, 3
      %v4536 = vrot.slane %v4223, 3
      %v4537 = vrot.slane %v4227, 3
      %v4538 = vrot.slane %v4231, 3
      %v4539 = vrot.slane %v4235, 3
      %v4540 = vrot.slane %v4239, 3
      %v4541 = vrot.slane %v4243, 3
      %v4542 = vrot.slane %v4247, 3
      %v4543 = vrot.slane %v4251, 3
      %v4544 = vrot.slane %v4255, 3
      %v4545 = vrot.slane %v4259, 3
      %v4546 = vrot.slane %v4263, 3
      %v4547 = vrot.slane %v4267, 3
      %v4548 = vrot.slane %v4271, 3
      %v4549 = vrot.slane %v4275, 3
      %v4550 = vrot.slane %v4279, 3
      %v4551 = vrot.slane %v4283, 3
      %v4552 = vrot.slane %v4287, 3
      %v4553 = vrot.slane %v4291, 3
      %v4554 = vrot.slane %v4295, 3
      %v4555 = vrot.slane %v4299, 3
      %v4556 = vrot.slane %v4303, 3
      %v4557 = vrot.slane %v4307, 3
      %v4558 = vrot.slane %v4311, 3
      %v4559 = vrot.slane %v4315, 3
      %v4560 = vrot.slane %v4319, 3
      %v4561 = vrot.slane %v4323, 3
      %v4562 = vrot.slane %v4327, 3
      %v4563 = vrot.slane %v4331, 3
      %v4564 = vrot.slane %v4335, 3
      %v4565 = vrot.slane %v4339, 3
      %v4598 = vrot.slane %v4182, 3
      %v4599 = vrot.slane %v4183, 3
      %v4600 = vrot.slane %v4184, 3
      %v4601 = vrot.slane %v4185, 3
      %v4602 = vrot.slane %v4186, 3
      %v4603 = vrot.slane %v4187, 3
      %v4604 = vrot.slane %v4188, 3
      %v4605 = vrot.slane %v4189, 3
      %v4606 = vrot.slane %v4190, 3
      %v4607 = vrot.slane %v4191, 3
      %v4608 = vrot.slane %v4192, 3
      %v4609 = vrot.slane %v4193, 3
      %v4610 = vrot.slane %v4194, 3
      %v4611 = vrot.slane %v4195, 3
      %v4612 = vrot.slane %v4196, 3
      %v4613 = vrot.slane %v4197, 3
      %v4614 = vrot.slane %v4198, 3
      %v4615 = vrot.slane %v4199, 3
      %v4616 = vrot.slane %v4200, 3
      %v4617 = vrot.slane %v4201, 3
      %v4618 = vrot.slane %v4202, 3
      %v4619 = vrot.slane %v4203, 3
      %v4620 = vrot.slane %v4204, 3
      %v4621 = vrot.slane %v4205, 3
      %v4622 = vrot.slane %v4206, 3
      %v4623 = vrot.slane %v4207, 3
      %v4624 = vrot.slane %v4208, 3
      %v4625 = vrot.slane %v4209, 3
      %v4626 = vrot.slane %v4210, 3
      %v4627 = vrot.slane %v4211, 3
      %v4628 = vrot.slane %v4212, 3
      %v4629 = vrot.slane %v4213, 3
      %v4630 = vrot.slane %v4215, 4
      %v4631 = vrot.slane %v4219, 4
      %v4632 = vrot.slane %v4223, 4
      %v4633 = vrot.slane %v4227, 4
      %v4634 = vrot.slane %v4231, 4
      %v4635 = vrot.slane %v4235, 4
      %v4636 = vrot.slane %v4239, 4
      %v4637 = vrot.slane %v4243, 4
      %v4638 = vrot.slane %v4247, 4
      %v4639 = vrot.slane %v4251, 4
      %v4640 = vrot.slane %v4255, 4
      %v4641 = vrot.slane %v4259, 4
      %v4642 = vrot.slane %v4263, 4
      %v4643 = vrot.slane %v4267, 4
      %v4644 = vrot.slane %v4271, 4
      %v4645 = vrot.slane %v4275, 4
      %v4646 = vrot.slane %v4279, 4
      %v4647 = vrot.slane %v4283, 4
      %v4648 = vrot.slane %v4287, 4
      %v4649 = vrot.slane %v4291, 4
      %v4650 = vrot.slane %v4295, 4
      %v4651 = vrot.slane %v4299, 4
      %v4652 = vrot.slane %v4303, 4
      %v4653 = vrot.slane %v4307, 4
      %v4654 = vrot.slane %v4311, 4
      %v4655 = vrot.slane %v4315, 4
      %v4656 = vrot.slane %v4319, 4
      %v4657 = vrot.slane %v4323, 4
      %v4658 = vrot.slane %v4327, 4
      %v4659 = vrot.slane %v4331, 4
      %v4660 = vrot.slane %v4335, 4
      %v4661 = vrot.slane %v4339, 4
      %v4694 = vsel %vm3477, %v4182, %v4217
      %v4695 = vsel %vm3477, %v4183, %v4221
      %v4696 = vsel %vm3477, %v4184, %v4225
      %v4697 = vsel %vm3477, %v4185, %v4229
      %v4698 = vsel %vm3477, %v4186, %v4233
      %v4699 = vsel %vm3477, %v4187, %v4237
      %v4700 = vsel %vm3477, %v4188, %v4241
      %v4701 = vsel %vm3477, %v4189, %v4245
      %v4702 = vsel %vm3477, %v4190, %v4249
      %v4703 = vsel %vm3477, %v4191, %v4253
      %v4704 = vsel %vm3477, %v4192, %v4257
      %v4705 = vsel %vm3477, %v4193, %v4261
      %v4706 = vsel %vm3477, %v4194, %v4265
      %v4707 = vsel %vm3477, %v4195, %v4269
      %v4708 = vsel %vm3477, %v4196, %v4273
      %v4709 = vsel %vm3477, %v4197, %v4277
      %v4710 = vsel %vm3477, %v4198, %v4281
      %v4711 = vsel %vm3477, %v4199, %v4285
      %v4712 = vsel %vm3477, %v4200, %v4289
      %v4713 = vsel %vm3477, %v4201, %v4293
      %v4714 = vsel %vm3477, %v4202, %v4297
      %v4715 = vsel %vm3477, %v4203, %v4301
      %v4716 = vsel %vm3477, %v4204, %v4305
      %v4717 = vsel %vm3477, %v4205, %v4309
      %v4718 = vsel %vm3477, %v4206, %v4313
      %v4719 = vsel %vm3477, %v4207, %v4317
      %v4720 = vsel %vm3477, %v4208, %v4321
      %v4721 = vsel %vm3477, %v4209, %v4325
      %v4722 = vsel %vm3477, %v4210, %v4329
      %v4723 = vsel %vm3477, %v4211, %v4333
      %v4724 = vsel %vm3477, %v4212, %v4337
      %v4725 = vsel %vm3477, %v4213, %v4341
      %vm4726 = vcmask 1040384
      %v4729 = vsel %vm4726, %v4694, %v4406
      %v4733 = vsel %vm4726, %v4695, %v4407
      %v4737 = vsel %vm4726, %v4696, %v4408
      %v4741 = vsel %vm4726, %v4697, %v4409
      %v4745 = vsel %vm4726, %v4698, %v4410
      %v4749 = vsel %vm4726, %v4699, %v4411
      %v4753 = vsel %vm4726, %v4700, %v4412
      %v4757 = vsel %vm4726, %v4701, %v4413
      %v4761 = vsel %vm4726, %v4702, %v4414
      %v4765 = vsel %vm4726, %v4703, %v4415
      %v4769 = vsel %vm4726, %v4704, %v4416
      %v4773 = vsel %vm4726, %v4705, %v4417
      %v4777 = vsel %vm4726, %v4706, %v4418
      %v4781 = vsel %vm4726, %v4707, %v4419
      %v4785 = vsel %vm4726, %v4708, %v4420
      %v4789 = vsel %vm4726, %v4709, %v4421
      %v4793 = vsel %vm4726, %v4710, %v4422
      %v4797 = vsel %vm4726, %v4711, %v4423
      %v4801 = vsel %vm4726, %v4712, %v4424
      %v4805 = vsel %vm4726, %v4713, %v4425
      %v4809 = vsel %vm4726, %v4714, %v4426
      %v4813 = vsel %vm4726, %v4715, %v4427
      %v4817 = vsel %vm4726, %v4716, %v4428
      %v4821 = vsel %vm4726, %v4717, %v4429
      %v4825 = vsel %vm4726, %v4718, %v4430
      %v4829 = vsel %vm4726, %v4719, %v4431
      %v4833 = vsel %vm4726, %v4720, %v4432
      %v4837 = vsel %vm4726, %v4721, %v4433
      %v4841 = vsel %vm4726, %v4722, %v4434
      %v4845 = vsel %vm4726, %v4723, %v4435
      %v4849 = vsel %vm4726, %v4724, %v4436
      %v4853 = vsel %vm4726, %v4725, %v4437
      %vm4855 = vcmask 1041408
      %vm4856 = vsmask.f32 1280
      %vm4857 = vmand %vm4855, %vm4856
      %v4858 = vsel %vm4857, %v4729, %v4438
      %v4859 = vsel %vm4857, %v4733, %v4439
      %v4860 = vsel %vm4857, %v4737, %v4440
      %v4861 = vsel %vm4857, %v4741, %v4441
      %v4862 = vsel %vm4857, %v4745, %v4442
      %v4863 = vsel %vm4857, %v4749, %v4443
      %v4864 = vsel %vm4857, %v4753, %v4444
      %v4865 = vsel %vm4857, %v4757, %v4445
      %v4866 = vsel %vm4857, %v4761, %v4446
      %v4867 = vsel %vm4857, %v4765, %v4447
      %v4868 = vsel %vm4857, %v4769, %v4448
      %v4869 = vsel %vm4857, %v4773, %v4449
      %v4870 = vsel %vm4857, %v4777, %v4450
      %v4871 = vsel %vm4857, %v4781, %v4451
      %v4872 = vsel %vm4857, %v4785, %v4452
      %v4873 = vsel %vm4857, %v4789, %v4453
      %v4874 = vsel %vm4857, %v4793, %v4454
      %v4875 = vsel %vm4857, %v4797, %v4455
      %v4876 = vsel %vm4857, %v4801, %v4456
      %v4877 = vsel %vm4857, %v4805, %v4457
      %v4878 = vsel %vm4857, %v4809, %v4458
      %v4879 = vsel %vm4857, %v4813, %v4459
      %v4880 = vsel %vm4857, %v4817, %v4460
      %v4881 = vsel %vm4857, %v4821, %v4461
      %v4882 = vsel %vm4857, %v4825, %v4462
      %v4883 = vsel %vm4857, %v4829, %v4463
      %v4884 = vsel %vm4857, %v4833, %v4464
      %v4885 = vsel %vm4857, %v4837, %v4465
      %v4886 = vsel %vm4857, %v4841, %v4466
      %v4887 = vsel %vm4857, %v4845, %v4467
      %v4888 = vsel %vm4857, %v4849, %v4468
      %v4889 = vsel %vm4857, %v4853, %v4469
      %vm4890 = vcmask 1041408
      %v4893 = vsel %vm4890, %v4858, %v4502
      %v4897 = vsel %vm4890, %v4859, %v4503
      %v4901 = vsel %vm4890, %v4860, %v4504
      %v4905 = vsel %vm4890, %v4861, %v4505
      %v4909 = vsel %vm4890, %v4862, %v4506
      %v4913 = vsel %vm4890, %v4863, %v4507
      %v4917 = vsel %vm4890, %v4864, %v4508
      %v4921 = vsel %vm4890, %v4865, %v4509
      %v4925 = vsel %vm4890, %v4866, %v4510
      %v4929 = vsel %vm4890, %v4867, %v4511
      %v4933 = vsel %vm4890, %v4868, %v4512
      %v4937 = vsel %vm4890, %v4869, %v4513
      %v4941 = vsel %vm4890, %v4870, %v4514
      %v4945 = vsel %vm4890, %v4871, %v4515
      %v4949 = vsel %vm4890, %v4872, %v4516
      %v4953 = vsel %vm4890, %v4873, %v4517
      %v4957 = vsel %vm4890, %v4874, %v4518
      %v4961 = vsel %vm4890, %v4875, %v4519
      %v4965 = vsel %vm4890, %v4876, %v4520
      %v4969 = vsel %vm4890, %v4877, %v4521
      %v4973 = vsel %vm4890, %v4878, %v4522
      %v4977 = vsel %vm4890, %v4879, %v4523
      %v4981 = vsel %vm4890, %v4880, %v4524
      %v4985 = vsel %vm4890, %v4881, %v4525
      %v4989 = vsel %vm4890, %v4882, %v4526
      %v4993 = vsel %vm4890, %v4883, %v4527
      %v4997 = vsel %vm4890, %v4884, %v4528
      %v5001 = vsel %vm4890, %v4885, %v4529
      %v5005 = vsel %vm4890, %v4886, %v4530
      %v5009 = vsel %vm4890, %v4887, %v4531
      %v5013 = vsel %vm4890, %v4888, %v4532
      %v5017 = vsel %vm4890, %v4889, %v4533
      %vm5019 = vcmask 1042432
      %vm5020 = vsmask.f32 2304
      %vm5021 = vmand %vm5019, %vm5020
      %v5022 = vsel %vm5021, %v4893, %v4534
      %v5023 = vsel %vm5021, %v4897, %v4535
      %v5024 = vsel %vm5021, %v4901, %v4536
      %v5025 = vsel %vm5021, %v4905, %v4537
      %v5026 = vsel %vm5021, %v4909, %v4538
      %v5027 = vsel %vm5021, %v4913, %v4539
      %v5028 = vsel %vm5021, %v4917, %v4540
      %v5029 = vsel %vm5021, %v4921, %v4541
      %v5030 = vsel %vm5021, %v4925, %v4542
      %v5031 = vsel %vm5021, %v4929, %v4543
      %v5032 = vsel %vm5021, %v4933, %v4544
      %v5033 = vsel %vm5021, %v4937, %v4545
      %v5034 = vsel %vm5021, %v4941, %v4546
      %v5035 = vsel %vm5021, %v4945, %v4547
      %v5036 = vsel %vm5021, %v4949, %v4548
      %v5037 = vsel %vm5021, %v4953, %v4549
      %v5038 = vsel %vm5021, %v4957, %v4550
      %v5039 = vsel %vm5021, %v4961, %v4551
      %v5040 = vsel %vm5021, %v4965, %v4552
      %v5041 = vsel %vm5021, %v4969, %v4553
      %v5042 = vsel %vm5021, %v4973, %v4554
      %v5043 = vsel %vm5021, %v4977, %v4555
      %v5044 = vsel %vm5021, %v4981, %v4556
      %v5045 = vsel %vm5021, %v4985, %v4557
      %v5046 = vsel %vm5021, %v4989, %v4558
      %v5047 = vsel %vm5021, %v4993, %v4559
      %v5048 = vsel %vm5021, %v4997, %v4560
      %v5049 = vsel %vm5021, %v5001, %v4561
      %v5050 = vsel %vm5021, %v5005, %v4562
      %v5051 = vsel %vm5021, %v5009, %v4563
      %v5052 = vsel %vm5021, %v5013, %v4564
      %v5053 = vsel %vm5021, %v5017, %v4565
      %vm5054 = vcmask 1042432
      %v5057 = vsel %vm5054, %v5022, %v4598
      %v5061 = vsel %vm5054, %v5023, %v4599
      %v5065 = vsel %vm5054, %v5024, %v4600
      %v5069 = vsel %vm5054, %v5025, %v4601
      %v5073 = vsel %vm5054, %v5026, %v4602
      %v5077 = vsel %vm5054, %v5027, %v4603
      %v5081 = vsel %vm5054, %v5028, %v4604
      %v5085 = vsel %vm5054, %v5029, %v4605
      %v5089 = vsel %vm5054, %v5030, %v4606
      %v5093 = vsel %vm5054, %v5031, %v4607
      %v5097 = vsel %vm5054, %v5032, %v4608
      %v5101 = vsel %vm5054, %v5033, %v4609
      %v5105 = vsel %vm5054, %v5034, %v4610
      %v5109 = vsel %vm5054, %v5035, %v4611
      %v5113 = vsel %vm5054, %v5036, %v4612
      %v5117 = vsel %vm5054, %v5037, %v4613
      %v5121 = vsel %vm5054, %v5038, %v4614
      %v5125 = vsel %vm5054, %v5039, %v4615
      %v5129 = vsel %vm5054, %v5040, %v4616
      %v5133 = vsel %vm5054, %v5041, %v4617
      %v5137 = vsel %vm5054, %v5042, %v4618
      %v5141 = vsel %vm5054, %v5043, %v4619
      %v5145 = vsel %vm5054, %v5044, %v4620
      %v5149 = vsel %vm5054, %v5045, %v4621
      %v5153 = vsel %vm5054, %v5046, %v4622
      %v5157 = vsel %vm5054, %v5047, %v4623
      %v5161 = vsel %vm5054, %v5048, %v4624
      %v5165 = vsel %vm5054, %v5049, %v4625
      %v5169 = vsel %vm5054, %v5050, %v4626
      %v5173 = vsel %vm5054, %v5051, %v4627
      %v5177 = vsel %vm5054, %v5052, %v4628
      %v5181 = vsel %vm5054, %v5053, %v4629
      %vm5183 = vcmask 1043456
      %vm5184 = vsmask.f32 3328
      %vm5185 = vmand %vm5183, %vm5184
      %v5186 = vsel %vm5185, %v5057, %v4630
      %v5187 = vsel %vm5185, %v5061, %v4631
      %v5188 = vsel %vm5185, %v5065, %v4632
      %v5189 = vsel %vm5185, %v5069, %v4633
      %v5190 = vsel %vm5185, %v5073, %v4634
      %v5191 = vsel %vm5185, %v5077, %v4635
      %v5192 = vsel %vm5185, %v5081, %v4636
      %v5193 = vsel %vm5185, %v5085, %v4637
      %v5194 = vsel %vm5185, %v5089, %v4638
      %v5195 = vsel %vm5185, %v5093, %v4639
      %v5196 = vsel %vm5185, %v5097, %v4640
      %v5197 = vsel %vm5185, %v5101, %v4641
      %v5198 = vsel %vm5185, %v5105, %v4642
      %v5199 = vsel %vm5185, %v5109, %v4643
      %v5200 = vsel %vm5185, %v5113, %v4644
      %v5201 = vsel %vm5185, %v5117, %v4645
      %v5202 = vsel %vm5185, %v5121, %v4646
      %v5203 = vsel %vm5185, %v5125, %v4647
      %v5204 = vsel %vm5185, %v5129, %v4648
      %v5205 = vsel %vm5185, %v5133, %v4649
      %v5206 = vsel %vm5185, %v5137, %v4650
      %v5207 = vsel %vm5185, %v5141, %v4651
      %v5208 = vsel %vm5185, %v5145, %v4652
      %v5209 = vsel %vm5185, %v5149, %v4653
      %v5210 = vsel %vm5185, %v5153, %v4654
      %v5211 = vsel %vm5185, %v5157, %v4655
      %v5212 = vsel %vm5185, %v5161, %v4656
      %v5213 = vsel %vm5185, %v5165, %v4657
      %v5214 = vsel %vm5185, %v5169, %v4658
      %v5215 = vsel %vm5185, %v5173, %v4659
      %v5216 = vsel %vm5185, %v5177, %v4660
      %v5217 = vsel %vm5185, %v5181, %v4661
      %v5218 = vmax.bf16 %v5186, 0
      %v5219 = vmax.bf16 %v5187, %v5188
      %v5220 = vmax.bf16 %v5189, %v5190
      %v5221 = vmax.bf16 %v5191, %v5192
      %v5222 = vmax.bf16 %v5193, %v5194
      %v5223 = vmax.bf16 %v5195, %v5196
      %v5224 = vmax.bf16 %v5197, %v5198
      %v5225 = vmax.bf16 %v5199, %v5200
      %v5226 = vmax.bf16 %v5202, 0
      %v5227 = vmax.bf16 %v5203, %v5204
      %v5228 = vmax.bf16 %v5205, %v5206
      %v5229 = vmax.bf16 %v5207, %v5208
      %v5230 = vmax.bf16 %v5209, %v5210
      %v5231 = vmax.bf16 %v5211, %v5212
      %v5232 = vmax.bf16 %v5213, %v5214
      %v5233 = vmax.bf16 %v5215, %v5216
      %v5234 = vmax.bf16 %v5218, %v5187
      %v5235 = vmax.bf16 %v5219, %v5189
      %v5236 = vmax.bf16 %v5220, %v5191
      %v5237 = vmax.bf16 %v5221, %v5193
      %v5238 = vmax.bf16 %v5222, %v5195
      %v5239 = vmax.bf16 %v5223, %v5197
      %v5240 = vmax.bf16 %v5224, %v5199
      %v5241 = vmax.bf16 %v5225, %v5201
      %v5242 = vmax.bf16 %v5226, %v5203
      %v5243 = vmax.bf16 %v5227, %v5205
      %v5244 = vmax.bf16 %v5228, %v5207
      %v5245 = vmax.bf16 %v5229, %v5209
      %v5246 = vmax.bf16 %v5230, %v5211
      %v5247 = vmax.bf16 %v5231, %v5213
      %v5248 = vmax.bf16 %v5232, %v5215
      %v5249 = vmax.bf16 %v5233, %v5217
      %v5251 = vshrl.u32 %v5234, 16
      %v5253 = vrot.slane %v5251, 7
      %v5254 = vshll.u32 %v5234, 16
      %v5256 = vor.u32 %v5253, %v5254
      %v5258 = vshrl.u32 %v5235, 16
      %v5260 = vrot.slane %v5258, 7
      %v5261 = vshll.u32 %v5235, 16
      %v5263 = vor.u32 %v5260, %v5261
      %v5265 = vshrl.u32 %v5236, 16
      %v5267 = vrot.slane %v5265, 7
      %v5268 = vshll.u32 %v5236, 16
      %v5270 = vor.u32 %v5267, %v5268
      %v5272 = vshrl.u32 %v5237, 16
      %v5274 = vrot.slane %v5272, 7
      %v5275 = vshll.u32 %v5237, 16
      %v5277 = vor.u32 %v5274, %v5275
      %v5279 = vshrl.u32 %v5238, 16
      %v5281 = vrot.slane %v5279, 7
      %v5282 = vshll.u32 %v5238, 16
      %v5284 = vor.u32 %v5281, %v5282
      %v5286 = vshrl.u32 %v5239, 16
      %v5288 = vrot.slane %v5286, 7
      %v5289 = vshll.u32 %v5239, 16
      %v5291 = vor.u32 %v5288, %v5289
      %v5293 = vshrl.u32 %v5240, 16
      %v5295 = vrot.slane %v5293, 7
      %v5296 = vshll.u32 %v5240, 16
      %v5298 = vor.u32 %v5295, %v5296
      %v5300 = vshrl.u32 %v5241, 16
      %v5302 = vrot.slane %v5300, 7
      %v5303 = vshll.u32 %v5241, 16
      %v5305 = vor.u32 %v5302, %v5303
      %v5307 = vshrl.u32 %v5242, 16
      %v5309 = vrot.slane %v5307, 7
      %v5310 = vshll.u32 %v5242, 16
      %v5312 = vor.u32 %v5309, %v5310
      %v5314 = vshrl.u32 %v5243, 16
      %v5316 = vrot.slane %v5314, 7
      %v5317 = vshll.u32 %v5243, 16
      %v5319 = vor.u32 %v5316, %v5317
      %v5321 = vshrl.u32 %v5244, 16
      %v5323 = vrot.slane %v5321, 7
      %v5324 = vshll.u32 %v5244, 16
      %v5326 = vor.u32 %v5323, %v5324
      %v5328 = vshrl.u32 %v5245, 16
      %v5330 = vrot.slane %v5328, 7
      %v5331 = vshll.u32 %v5245, 16
      %v5333 = vor.u32 %v5330, %v5331
      %v5335 = vshrl.u32 %v5246, 16
      %v5337 = vrot.slane %v5335, 7
      %v5338 = vshll.u32 %v5246, 16
      %v5340 = vor.u32 %v5337, %v5338
      %v5342 = vshrl.u32 %v5247, 16
      %v5344 = vrot.slane %v5342, 7
      %v5345 = vshll.u32 %v5247, 16
      %v5347 = vor.u32 %v5344, %v5345
      %v5349 = vshrl.u32 %v5248, 16
      %v5351 = vrot.slane %v5349, 7
      %v5352 = vshll.u32 %v5248, 16
      %v5354 = vor.u32 %v5351, %v5352
      %v5356 = vshrl.u32 %v5249, 16
      %v5358 = vrot.slane %v5356, 7
      %v5359 = vshll.u32 %v5249, 16
      %v5361 = vor.u32 %v5358, %v5359
      %v5378 = vsel %vm3477, 0, %v5256
      %v5379 = vsel %vm3477, 0, %v5263
      %v5380 = vsel %vm3477, 0, %v5270
      %v5381 = vsel %vm3477, 0, %v5277
      %v5382 = vsel %vm3477, 0, %v5284
      %v5383 = vsel %vm3477, 0, %v5291
      %v5384 = vsel %vm3477, 0, %v5298
      %v5385 = vsel %vm3477, 0, %v5305
      %v5386 = vsel %vm3477, 0, %v5312
      %v5387 = vsel %vm3477, 0, %v5319
      %v5388 = vsel %vm3477, 0, %v5326
      %v5389 = vsel %vm3477, 0, %v5333
      %v5390 = vsel %vm3477, 0, %v5340
      %v5391 = vsel %vm3477, 0, %v5347
      %v5392 = vsel %vm3477, 0, %v5354
      %v5393 = vsel %vm3477, 0, %v5361
      %vm5394 = vcmask 1044480
      %vm5395 = vsmask.f32 4352
      %vm5396 = vmand %vm5394, %vm5395
      %v5397 = vsel %vm5396, %v5378, 0
      %v5398 = vsel %vm5396, %v5379, 0
      %v5399 = vsel %vm5396, %v5380, 0
      %v5400 = vsel %vm5396, %v5381, 0
      %v5401 = vsel %vm5396, %v5382, 0
      %v5402 = vsel %vm5396, %v5383, 0
      %v5403 = vsel %vm5396, %v5384, 0
      %v5404 = vsel %vm5396, %v5385, 0
      %v5405 = vsel %vm5396, %v5386, 0
      %v5406 = vsel %vm5396, %v5387, 0
      %v5407 = vsel %vm5396, %v5388, 0
      %v5408 = vsel %vm5396, %v5389, 0
      %v5409 = vsel %vm5396, %v5390, 0
      %v5410 = vsel %vm5396, %v5391, 0
      %v5411 = vsel %vm5396, %v5392, 0
      %v5412 = vsel %vm5396, %v5393, 0
      %v5414 = vshrl.u32 0, 16
      %v5416 = vshll.u32 0, 16
      %v5418 = vrot.slane %v5416, 1
      %v5419 = vor.u32 %v5414, %v5418
      %v5421 = vshrl.u32 %v5397, 16
      %v5423 = vshll.u32 %v5397, 16
      %v5425 = vrot.slane %v5423, 1
      %v5426 = vor.u32 %v5421, %v5425
      %v5428 = vshrl.u32 %v5398, 16
      %v5430 = vshll.u32 %v5398, 16
      %v5432 = vrot.slane %v5430, 1
      %v5433 = vor.u32 %v5428, %v5432
      %v5435 = vshrl.u32 %v5399, 16
      %v5437 = vshll.u32 %v5399, 16
      %v5439 = vrot.slane %v5437, 1
      %v5440 = vor.u32 %v5435, %v5439
      %v5442 = vshrl.u32 %v5400, 16
      %v5444 = vshll.u32 %v5400, 16
      %v5446 = vrot.slane %v5444, 1
      %v5447 = vor.u32 %v5442, %v5446
      %v5449 = vshrl.u32 %v5401, 16
      %v5451 = vshll.u32 %v5401, 16
      %v5453 = vrot.slane %v5451, 1
      %v5454 = vor.u32 %v5449, %v5453
      %v5456 = vshrl.u32 %v5402, 16
      %v5458 = vshll.u32 %v5402, 16
      %v5460 = vrot.slane %v5458, 1
      %v5461 = vor.u32 %v5456, %v5460
      %v5463 = vshrl.u32 %v5403, 16
      %v5465 = vshll.u32 %v5403, 16
      %v5467 = vrot.slane %v5465, 1
      %v5468 = vor.u32 %v5463, %v5467
      %v5470 = vshrl.u32 %v5405, 16
      %v5472 = vshll.u32 %v5405, 16
      %v5474 = vrot.slane %v5472, 1
      %v5475 = vor.u32 %v5470, %v5474
      %v5477 = vshrl.u32 %v5406, 16
      %v5479 = vshll.u32 %v5406, 16
      %v5481 = vrot.slane %v5479, 1
      %v5482 = vor.u32 %v5477, %v5481
      %v5484 = vshrl.u32 %v5407, 16
      %v5486 = vshll.u32 %v5407, 16
      %v5488 = vrot.slane %v5486, 1
      %v5489 = vor.u32 %v5484, %v5488
      %v5491 = vshrl.u32 %v5408, 16
      %v5493 = vshll.u32 %v5408, 16
      %v5495 = vrot.slane %v5493, 1
      %v5496 = vor.u32 %v5491, %v5495
      %v5498 = vshrl.u32 %v5409, 16
      %v5500 = vshll.u32 %v5409, 16
      %v5502 = vrot.slane %v5500, 1
      %v5503 = vor.u32 %v5498, %v5502
      %v5505 = vshrl.u32 %v5410, 16
      %v5507 = vshll.u32 %v5410, 16
      %v5509 = vrot.slane %v5507, 1
      %v5510 = vor.u32 %v5505, %v5509
      %v5512 = vshrl.u32 %v5411, 16
      %v5514 = vshll.u32 %v5411, 16
      %v5516 = vrot.slane %v5514, 1
      %v5517 = vor.u32 %v5512, %v5516
      %5518 = vrot.lane.b32.xlu0 %v5419, 16
      %v5519 = vpop.permute.xlu0 %5518
      %5520 = vrot.lane.b32.xlu0 %v5426, 16
      %v5521 = vpop.permute.xlu0 %5520
      %5522 = vrot.lane.b32.xlu0 %v5433, 16
      %v5523 = vpop.permute.xlu0 %5522
      %5524 = vrot.lane.b32.xlu0 %v5440, 16
      %v5525 = vpop.permute.xlu0 %5524
      %5526 = vrot.lane.b32.xlu0 %v5447, 16
      %v5527 = vpop.permute.xlu0 %5526
      %5528 = vrot.lane.b32.xlu0 %v5454, 16
      %v5529 = vpop.permute.xlu0 %5528
      %5530 = vrot.lane.b32.xlu0 %v5461, 16
      %v5531 = vpop.permute.xlu0 %5530
      %5532 = vrot.lane.b32.xlu0 %v5468, 16
      %v5533 = vpop.permute.xlu0 %5532
      %5534 = vrot.lane.b32.xlu0 %v5475, 16
      %v5535 = vpop.permute.xlu0 %5534
      %5536 = vrot.lane.b32.xlu0 %v5482, 16
      %v5537 = vpop.permute.xlu0 %5536
      %5538 = vrot.lane.b32.xlu0 %v5489, 16
      %v5539 = vpop.permute.xlu0 %5538
      %5540 = vrot.lane.b32.xlu0 %v5496, 16
      %v5541 = vpop.permute.xlu0 %5540
      %5542 = vrot.lane.b32.xlu0 %v5503, 16
      %v5543 = vpop.permute.xlu0 %5542
      %5544 = vrot.lane.b32.xlu0 %v5510, 16
      %v5545 = vpop.permute.xlu0 %5544
      %5546 = vrot.lane.b32.xlu0 %v5517, 16
      %v5547 = vpop.permute.xlu0 %5546
      %v5563 = vrot.slane 0, 1
      %v5564 = vrot.slane %v5397, 1
      %v5565 = vrot.slane %v5398, 1
      %v5566 = vrot.slane %v5399, 1
      %v5567 = vrot.slane %v5400, 1
      %v5568 = vrot.slane %v5401, 1
      %v5569 = vrot.slane %v5402, 1
      %v5570 = vrot.slane %v5403, 1
      %v5571 = vrot.slane %v5405, 1
      %v5572 = vrot.slane %v5406, 1
      %v5573 = vrot.slane %v5407, 1
      %v5574 = vrot.slane %v5408, 1
      %v5575 = vrot.slane %v5409, 1
      %v5576 = vrot.slane %v5410, 1
      %v5577 = vrot.slane %v5411, 1
      %5578 = vrot.lane.b32.xlu0 %v5563, 32
      %v5579 = vpop.permute.xlu0 %5578
      %5580 = vrot.lane.b32.xlu0 %v5564, 32
      %v5581 = vpop.permute.xlu0 %5580
      %5582 = vrot.lane.b32.xlu0 %v5565, 32
      %v5583 = vpop.permute.xlu0 %5582
      %5584 = vrot.lane.b32.xlu0 %v5566, 32
      %v5585 = vpop.permute.xlu0 %5584
      %5586 = vrot.lane.b32.xlu0 %v5567, 32
      %v5587 = vpop.permute.xlu0 %5586
      %5588 = vrot.lane.b32.xlu0 %v5568, 32
      %v5589 = vpop.permute.xlu0 %5588
      %5590 = vrot.lane.b32.xlu0 %v5569, 32
      %v5591 = vpop.permute.xlu0 %5590
      %5592 = vrot.lane.b32.xlu0 %v5570, 32
      %v5593 = vpop.permute.xlu0 %5592
      %5594 = vrot.lane.b32.xlu0 %v5571, 32
      %v5595 = vpop.permute.xlu0 %5594
      %5596 = vrot.lane.b32.xlu0 %v5572, 32
      %v5597 = vpop.permute.xlu0 %5596
      %5598 = vrot.lane.b32.xlu0 %v5573, 32
      %v5599 = vpop.permute.xlu0 %5598
      %5600 = vrot.lane.b32.xlu0 %v5574, 32
      %v5601 = vpop.permute.xlu0 %5600
      %5602 = vrot.lane.b32.xlu0 %v5575, 32
      %v5603 = vpop.permute.xlu0 %5602
      %5604 = vrot.lane.b32.xlu0 %v5576, 32
      %v5605 = vpop.permute.xlu0 %5604
      %5606 = vrot.lane.b32.xlu0 %v5577, 32
      %v5607 = vpop.permute.xlu0 %5606
      %5610 = vrot.lane.b32.xlu0 %v5397, 48
      %v5611 = vpop.permute.xlu0 %5610
      %5612 = vrot.lane.b32.xlu0 %v5398, 48
      %v5613 = vpop.permute.xlu0 %5612
      %5614 = vrot.lane.b32.xlu0 %v5399, 48
      %v5615 = vpop.permute.xlu0 %5614
      %5616 = vrot.lane.b32.xlu0 %v5400, 48
      %v5617 = vpop.permute.xlu0 %5616
      %5618 = vrot.lane.b32.xlu0 %v5401, 48
      %v5619 = vpop.permute.xlu0 %5618
      %5620 = vrot.lane.b32.xlu0 %v5402, 48
      %v5621 = vpop.permute.xlu0 %5620
      %5622 = vrot.lane.b32.xlu0 %v5403, 48
      %v5623 = vpop.permute.xlu0 %5622
      %5624 = vrot.lane.b32.xlu0 %v5404, 48
      %v5625 = vpop.permute.xlu0 %5624
      %5626 = vrot.lane.b32.xlu0 %v5405, 48
      %v5627 = vpop.permute.xlu0 %5626
      %5628 = vrot.lane.b32.xlu0 %v5406, 48
      %v5629 = vpop.permute.xlu0 %5628
      %5630 = vrot.lane.b32.xlu0 %v5407, 48
      %v5631 = vpop.permute.xlu0 %5630
      %5632 = vrot.lane.b32.xlu0 %v5408, 48
      %v5633 = vpop.permute.xlu0 %5632
      %5634 = vrot.lane.b32.xlu0 %v5409, 48
      %v5635 = vpop.permute.xlu0 %5634
      %5636 = vrot.lane.b32.xlu0 %v5410, 48
      %v5637 = vpop.permute.xlu0 %5636
      %5638 = vrot.lane.b32.xlu0 %v5411, 48
      %v5639 = vpop.permute.xlu0 %5638
      %5640 = vrot.lane.b32.xlu0 %v5412, 48
      %v5641 = vpop.permute.xlu0 %5640
      %v5643 = vshrl.u32 %v5404, 16
      %v5645 = vshll.u32 %v5404, 16
      %v5647 = vrot.slane %v5645, 1
      %v5648 = vor.u32 %v5643, %v5647
      %v5650 = vshrl.u32 %v5412, 16
      %v5652 = vshll.u32 %v5412, 16
      %v5654 = vrot.slane %v5652, 1
      %v5655 = vor.u32 %v5650, %v5654
      %5656 = vrot.lane.b32.xlu0 %v5426, 64
      %v5657 = vpop.permute.xlu0 %5656
      %5658 = vrot.lane.b32.xlu0 %v5433, 64
      %v5659 = vpop.permute.xlu0 %5658
      %5660 = vrot.lane.b32.xlu0 %v5440, 64
      %v5661 = vpop.permute.xlu0 %5660
      %5662 = vrot.lane.b32.xlu0 %v5447, 64
      %v5663 = vpop.permute.xlu0 %5662
      %5664 = vrot.lane.b32.xlu0 %v5454, 64
      %v5665 = vpop.permute.xlu0 %5664
      %5666 = vrot.lane.b32.xlu0 %v5461, 64
      %v5667 = vpop.permute.xlu0 %5666
      %5668 = vrot.lane.b32.xlu0 %v5468, 64
      %v5669 = vpop.permute.xlu0 %5668
      %5670 = vrot.lane.b32.xlu0 %v5648, 64
      %v5671 = vpop.permute.xlu0 %5670
      %5672 = vrot.lane.b32.xlu0 %v5475, 64
      %v5673 = vpop.permute.xlu0 %5672
      %5674 = vrot.lane.b32.xlu0 %v5482, 64
      %v5675 = vpop.permute.xlu0 %5674
      %5676 = vrot.lane.b32.xlu0 %v5489, 64
      %v5677 = vpop.permute.xlu0 %5676
      %5678 = vrot.lane.b32.xlu0 %v5496, 64
      %v5679 = vpop.permute.xlu0 %5678
      %5680 = vrot.lane.b32.xlu0 %v5503, 64
      %v5681 = vpop.permute.xlu0 %5680
      %5682 = vrot.lane.b32.xlu0 %v5510, 64
      %v5683 = vpop.permute.xlu0 %5682
      %5684 = vrot.lane.b32.xlu0 %v5517, 64
      %v5685 = vpop.permute.xlu0 %5684
      %5686 = vrot.lane.b32.xlu0 %v5655, 64
      %v5687 = vpop.permute.xlu0 %5686
      %v5688 = vrot.slane %v5404, 1
      %v5689 = vrot.slane %v5412, 1
      %5690 = vrot.lane.b32.xlu0 %v5564, 80
      %v5691 = vpop.permute.xlu0 %5690
      %5692 = vrot.lane.b32.xlu0 %v5565, 80
      %v5693 = vpop.permute.xlu0 %5692
      %5694 = vrot.lane.b32.xlu0 %v5566, 80
      %v5695 = vpop.permute.xlu0 %5694
      %5696 = vrot.lane.b32.xlu0 %v5567, 80
      %v5697 = vpop.permute.xlu0 %5696
      %5698 = vrot.lane.b32.xlu0 %v5568, 80
      %v5699 = vpop.permute.xlu0 %5698
      %5700 = vrot.lane.b32.xlu0 %v5569, 80
      %v5701 = vpop.permute.xlu0 %5700
      %5702 = vrot.lane.b32.xlu0 %v5570, 80
      %v5703 = vpop.permute.xlu0 %5702
      %5704 = vrot.lane.b32.xlu0 %v5688, 80
      %v5705 = vpop.permute.xlu0 %5704
      %5706 = vrot.lane.b32.xlu0 %v5571, 80
      %v5707 = vpop.permute.xlu0 %5706
      %5708 = vrot.lane.b32.xlu0 %v5572, 80
      %v5709 = vpop.permute.xlu0 %5708
      %5710 = vrot.lane.b32.xlu0 %v5573, 80
      %v5711 = vpop.permute.xlu0 %5710
      %5712 = vrot.lane.b32.xlu0 %v5574, 80
      %v5713 = vpop.permute.xlu0 %5712
      %5714 = vrot.lane.b32.xlu0 %v5575, 80
      %v5715 = vpop.permute.xlu0 %5714
      %5716 = vrot.lane.b32.xlu0 %v5576, 80
      %v5717 = vpop.permute.xlu0 %5716
      %5718 = vrot.lane.b32.xlu0 %v5577, 80
      %v5719 = vpop.permute.xlu0 %5718
      %5720 = vrot.lane.b32.xlu0 %v5689, 80
      %v5721 = vpop.permute.xlu0 %5720
      %5722 = vrot.lane.b32.xlu0 %v5398, 96
      %v5723 = vpop.permute.xlu0 %5722
      %5724 = vrot.lane.b32.xlu0 %v5399, 96
      %v5725 = vpop.permute.xlu0 %5724
      %5726 = vrot.lane.b32.xlu0 %v5400, 96
      %v5727 = vpop.permute.xlu0 %5726
      %5728 = vrot.lane.b32.xlu0 %v5401, 96
      %v5729 = vpop.permute.xlu0 %5728
      %5730 = vrot.lane.b32.xlu0 %v5402, 96
      %v5731 = vpop.permute.xlu0 %5730
      %5732 = vrot.lane.b32.xlu0 %v5403, 96
      %v5733 = vpop.permute.xlu0 %5732
      %5734 = vrot.lane.b32.xlu0 %v5404, 96
      %v5735 = vpop.permute.xlu0 %5734
      %5736 = vrot.lane.b32.xlu0 0, 96
      %v5737 = vpop.permute.xlu0 %5736
      %5738 = vrot.lane.b32.xlu0 %v5406, 96
      %v5739 = vpop.permute.xlu0 %5738
      %5740 = vrot.lane.b32.xlu0 %v5407, 96
      %v5741 = vpop.permute.xlu0 %5740
      %5742 = vrot.lane.b32.xlu0 %v5408, 96
      %v5743 = vpop.permute.xlu0 %5742
      %5744 = vrot.lane.b32.xlu0 %v5409, 96
      %v5745 = vpop.permute.xlu0 %5744
      %5746 = vrot.lane.b32.xlu0 %v5410, 96
      %v5747 = vpop.permute.xlu0 %5746
      %5748 = vrot.lane.b32.xlu0 %v5411, 96
      %v5749 = vpop.permute.xlu0 %5748
      %5750 = vrot.lane.b32.xlu0 %v5412, 96
      %v5751 = vpop.permute.xlu0 %5750
      %5752 = vrot.lane.b32.xlu0 %v5433, 112
      %v5753 = vpop.permute.xlu0 %5752
      %5754 = vrot.lane.b32.xlu0 %v5440, 112
      %v5755 = vpop.permute.xlu0 %5754
      %5756 = vrot.lane.b32.xlu0 %v5447, 112
      %v5757 = vpop.permute.xlu0 %5756
      %5758 = vrot.lane.b32.xlu0 %v5454, 112
      %v5759 = vpop.permute.xlu0 %5758
      %5760 = vrot.lane.b32.xlu0 %v5461, 112
      %v5761 = vpop.permute.xlu0 %5760
      %5762 = vrot.lane.b32.xlu0 %v5468, 112
      %v5763 = vpop.permute.xlu0 %5762
      %5764 = vrot.lane.b32.xlu0 %v5648, 112
      %v5765 = vpop.permute.xlu0 %5764
      %5766 = vrot.lane.b32.xlu0 %v5419, 112
      %v5767 = vpop.permute.xlu0 %5766
      %5768 = vrot.lane.b32.xlu0 %v5482, 112
      %v5769 = vpop.permute.xlu0 %5768
      %5770 = vrot.lane.b32.xlu0 %v5489, 112
      %v5771 = vpop.permute.xlu0 %5770
      %5772 = vrot.lane.b32.xlu0 %v5496, 112
      %v5773 = vpop.permute.xlu0 %5772
      %5774 = vrot.lane.b32.xlu0 %v5503, 112
      %v5775 = vpop.permute.xlu0 %5774
      %5776 = vrot.lane.b32.xlu0 %v5510, 112
      %v5777 = vpop.permute.xlu0 %5776
      %5778 = vrot.lane.b32.xlu0 %v5517, 112
      %v5779 = vpop.permute.xlu0 %5778
      %5780 = vrot.lane.b32.xlu0 %v5655, 112
      %v5781 = vpop.permute.xlu0 %5780
      %v5783 = vsel %vm2120, 0, %v5519
      %v5785 = vsel %vm2120, %v5397, %v5521
      %v5787 = vsel %vm2120, %v5398, %v5523
      %v5789 = vsel %vm2120, %v5399, %v5525
      %v5791 = vsel %vm2120, %v5400, %v5527
      %v5793 = vsel %vm2120, %v5401, %v5529
      %v5795 = vsel %vm2120, %v5402, %v5531
      %v5797 = vsel %vm2120, %v5403, %v5533
      %v5799 = vsel %vm2120, %v5405, %v5535
      %v5801 = vsel %vm2120, %v5406, %v5537
      %v5803 = vsel %vm2120, %v5407, %v5539
      %v5805 = vsel %vm2120, %v5408, %v5541
      %v5807 = vsel %vm2120, %v5409, %v5543
      %v5809 = vsel %vm2120, %v5410, %v5545
      %v5811 = vsel %vm2120, %v5411, %v5547
      %v5813 = vsel %vm2185, %v5783, %v5579
      %v5815 = vsel %vm2185, %v5785, %v5581
      %v5817 = vsel %vm2185, %v5787, %v5583
      %v5819 = vsel %vm2185, %v5789, %v5585
      %v5821 = vsel %vm2185, %v5791, %v5587
      %v5823 = vsel %vm2185, %v5793, %v5589
      %v5825 = vsel %vm2185, %v5795, %v5591
      %v5827 = vsel %vm2185, %v5797, %v5593
      %v5829 = vsel %vm2185, %v5799, %v5595
      %v5831 = vsel %vm2185, %v5801, %v5597
      %v5833 = vsel %vm2185, %v5803, %v5599
      %v5835 = vsel %vm2185, %v5805, %v5601
      %v5837 = vsel %vm2185, %v5807, %v5603
      %v5839 = vsel %vm2185, %v5809, %v5605
      %v5841 = vsel %vm2185, %v5811, %v5607
      %v5843 = vsel %vm2250, %v5813, %v5611
      %v5845 = vsel %vm2250, %v5815, %v5613
      %v5847 = vsel %vm2250, %v5817, %v5615
      %v5849 = vsel %vm2250, %v5819, %v5617
      %v5851 = vsel %vm2250, %v5821, %v5619
      %v5853 = vsel %vm2250, %v5823, %v5621
      %v5855 = vsel %vm2250, %v5825, %v5623
      %v5857 = vsel %vm2250, %v5827, %v5625
      %v5859 = vsel %vm2250, %v5813, %v5627
      %v5861 = vsel %vm2250, %v5829, %v5629
      %v5863 = vsel %vm2250, %v5831, %v5631
      %v5865 = vsel %vm2250, %v5833, %v5633
      %v5867 = vsel %vm2250, %v5835, %v5635
      %v5869 = vsel %vm2250, %v5837, %v5637
      %v5871 = vsel %vm2250, %v5839, %v5639
      %v5873 = vsel %vm2250, %v5841, %v5641
      %v5875 = vsel %vm2315, %v5843, %v5657
      %v5877 = vsel %vm2315, %v5845, %v5659
      %v5879 = vsel %vm2315, %v5847, %v5661
      %v5881 = vsel %vm2315, %v5849, %v5663
      %v5883 = vsel %vm2315, %v5851, %v5665
      %v5885 = vsel %vm2315, %v5853, %v5667
      %v5887 = vsel %vm2315, %v5855, %v5669
      %v5889 = vsel %vm2315, %v5857, %v5671
      %v5891 = vsel %vm2315, %v5859, %v5673
      %v5893 = vsel %vm2315, %v5861, %v5675
      %v5895 = vsel %vm2315, %v5863, %v5677
      %v5897 = vsel %vm2315, %v5865, %v5679
      %v5899 = vsel %vm2315, %v5867, %v5681
      %v5901 = vsel %vm2315, %v5869, %v5683
      %v5903 = vsel %vm2315, %v5871, %v5685
      %v5905 = vsel %vm2315, %v5873, %v5687
      %v5907 = vsel %vm2380, %v5875, %v5691
      %v5909 = vsel %vm2380, %v5877, %v5693
      %v5911 = vsel %vm2380, %v5879, %v5695
      %v5913 = vsel %vm2380, %v5881, %v5697
      %v5915 = vsel %vm2380, %v5883, %v5699
      %v5917 = vsel %vm2380, %v5885, %v5701
      %v5919 = vsel %vm2380, %v5887, %v5703
      %v5921 = vsel %vm2380, %v5889, %v5705
      %v5923 = vsel %vm2380, %v5891, %v5707
      %v5925 = vsel %vm2380, %v5893, %v5709
      %v5927 = vsel %vm2380, %v5895, %v5711
      %v5929 = vsel %vm2380, %v5897, %v5713
      %v5931 = vsel %vm2380, %v5899, %v5715
      %v5933 = vsel %vm2380, %v5901, %v5717
      %v5935 = vsel %vm2380, %v5903, %v5719
      %v5937 = vsel %vm2380, %v5905, %v5721
      %v5939 = vsel %vm2445, %v5907, %v5723
      %v5941 = vsel %vm2445, %v5909, %v5725
      %v5943 = vsel %vm2445, %v5911, %v5727
      %v5945 = vsel %vm2445, %v5913, %v5729
      %v5947 = vsel %vm2445, %v5915, %v5731
      %v5949 = vsel %vm2445, %v5917, %v5733
      %v5951 = vsel %vm2445, %v5919, %v5735
      %v5953 = vsel %vm2445, %v5921, %v5737
      %v5955 = vsel %vm2445, %v5923, %v5739
      %v5957 = vsel %vm2445, %v5925, %v5741
      %v5959 = vsel %vm2445, %v5927, %v5743
      %v5961 = vsel %vm2445, %v5929, %v5745
      %v5963 = vsel %vm2445, %v5931, %v5747
      %v5965 = vsel %vm2445, %v5933, %v5749
      %v5967 = vsel %vm2445, %v5935, %v5751
      %v5968 = vsel %vm2445, %v5937, %v5737
      %v5970 = vsel %vm2510, %v5939, %v5753
      %v5972 = vsel %vm2510, %v5941, %v5755
      %v5974 = vsel %vm2510, %v5943, %v5757
      %v5976 = vsel %vm2510, %v5945, %v5759
      %v5978 = vsel %vm2510, %v5947, %v5761
      %v5980 = vsel %vm2510, %v5949, %v5763
      %v5982 = vsel %vm2510, %v5951, %v5765
      %v5984 = vsel %vm2510, %v5953, %v5767
      %v5986 = vsel %vm2510, %v5955, %v5769
      %v5988 = vsel %vm2510, %v5957, %v5771
      %v5990 = vsel %vm2510, %v5959, %v5773
      %v5992 = vsel %vm2510, %v5961, %v5775
      %v5994 = vsel %vm2510, %v5963, %v5777
      %v5996 = vsel %vm2510, %v5965, %v5779
      %v5998 = vsel %vm2510, %v5967, %v5781
      %v5999 = vsel %vm2510, %v5968, %v5767
      %v6016 = vunpack.c.l.b16 %v5970
      %v6017 = vunpack.c.l.b16 %v5565
      %v6018 = vunpack.c.l.b16 %v5972
      %v6019 = vunpack.c.l.b16 %v5566
      %v6020 = vunpack.c.l.b16 %v5974
      %v6021 = vunpack.c.l.b16 %v5567
      %v6022 = vunpack.c.l.b16 %v5976
      %v6023 = vunpack.c.l.b16 %v5568
      %v6024 = vunpack.c.l.b16 %v5978
      %v6025 = vunpack.c.l.b16 %v5569
      %v6026 = vunpack.c.l.b16 %v5980
      %v6027 = vunpack.c.l.b16 %v5570
      %v6028 = vunpack.c.l.b16 %v5982
      %v6029 = vunpack.c.l.b16 %v5688
      %v6030 = vunpack.c.l.b16 %v5984
      %v6031 = vunpack.c.l.b16 %v5563
      %v6032 = vunpack.c.l.b16 %v5986
      %v6033 = vunpack.c.l.b16 %v5572
      %v6034 = vunpack.c.l.b16 %v5988
      %v6035 = vunpack.c.l.b16 %v5573
      %v6036 = vunpack.c.l.b16 %v5990
      %v6037 = vunpack.c.l.b16 %v5574
      %v6038 = vunpack.c.l.b16 %v5992
      %v6039 = vunpack.c.l.b16 %v5575
      %v6040 = vunpack.c.l.b16 %v5994
      %v6041 = vunpack.c.l.b16 %v5576
      %v6042 = vunpack.c.l.b16 %v5996
      %v6043 = vunpack.c.l.b16 %v5577
      %v6044 = vunpack.c.l.b16 %v5998
      %v6045 = vunpack.c.l.b16 %v5689
      %v6046 = vunpack.c.l.b16 %v5999
      %v6047 = vld [vmem:[%s3] sm:$0xf]
      %v6048 = vld [vmem:[%s3 + $0x4] sm:$0xf]
      %v6049 = vld [vmem:[%s3 + $0x8] sm:$0xf]
      %v6050 = vld [vmem:[%s3 + $0xc] sm:$0xf]
      %v6051 = vld [vmem:[%s3 + $0x10] sm:$0xf]
      %v6052 = vld [vmem:[%s3 + $0x14] sm:$0xf]
      %v6053 = vld [vmem:[%s3 + $0x18] sm:$0xf]
      %v6054 = vld [vmem:[%s3 + $0x1c] sm:$0xf]
      %v6055 = vld [vmem:[%s3 + $0x20] sm:$0xf]
      %v6056 = vld [vmem:[%s3 + $0x24] sm:$0xf]
      %v6057 = vld [vmem:[%s3 + $0x28] sm:$0xf]
      %v6058 = vld [vmem:[%s3 + $0x2c] sm:$0xf]
      %v6059 = vld [vmem:[%s3 + $0x30] sm:$0xf]
      %v6060 = vld [vmem:[%s3 + $0x34] sm:$0xf]
      %v6061 = vld [vmem:[%s3 + $0x38] sm:$0xf]
      %v6062 = vld [vmem:[%s3 + $0x3c] sm:$0xf]
      %v6063 = vld [vmem:[%s3 + $0x40] sm:$0xf]
      %v6064 = vld [vmem:[%s3 + $0x44] sm:$0xf]
      %v6065 = vld [vmem:[%s4] sm:$0x1]
      %v6067 = vlaneseq
      %v6068 = vshrl.u32 %v6067, 7
      %v6069 = vsub.s32 0, %v6068
      %v6070 = vrot.slane %v6065, %v6069
      %v6072 = vpack.c.b16 %v6018, %v6016
      %v6073 = vpack.c.b16 %v6019, %v6017
      %v6074 = vpack.c.b16 %v6022, %v6020
      %v6075 = vpack.c.b16 %v6023, %v6021
      %v6076 = vpack.c.b16 %v6026, %v6024
      %v6077 = vpack.c.b16 %v6027, %v6025
      %v6078 = vpack.c.b16 %v6030, %v6028
      %v6079 = vpack.c.b16 %v6031, %v6029
      %v6080 = vpack.c.b16 %v6034, %v6032
      %v6081 = vpack.c.b16 %v6035, %v6033
      %v6082 = vpack.c.b16 %v6038, %v6036
      %v6083 = vpack.c.b16 %v6039, %v6037
      %v6084 = vpack.c.b16 %v6042, %v6040
      %v6085 = vpack.c.b16 %v6043, %v6041
      %v6086 = vpack.c.b16 %v6046, %v6044
      %v6087 = vpack.c.b16 %v6031, %v6045
      %v6114 = vunpack.c.l.b16 %v6047
      %v6115 = vunpack.c.l.b16 %v6048
      %v6116 = vunpack.c.l.b16 %v6049
      %v6117 = vunpack.c.l.b16 %v6050
      %v6118 = vunpack.c.l.b16 %v6051
      %v6119 = vunpack.c.l.b16 %v6052
      %v6120 = vunpack.c.l.b16 %v6053
      %v6121 = vunpack.c.l.b16 %v6054
      %v6122 = vunpack.c.l.b16 %v6055
      %v6123 = vunpack.c.l.b16 %v6056
      %v6124 = vunpack.c.l.b16 %v6057
      %v6125 = vunpack.c.l.b16 %v6058
      %v6126 = vunpack.c.l.b16 %v6059
      %v6127 = vunpack.c.l.b16 %v6060
      %v6128 = vunpack.c.l.b16 %v6061
      %v6129 = vunpack.c.l.b16 %v6062
      %v6130 = vunpack.c.l.b16 %v6063
      %v6131 = vunpack.c.l.b16 %v6064
      %v6132 = vpack.c.b16 %v6115, %v6114
      %v6133 = vpack.c.b16 %v6117, %v6116
      %v6134 = vpack.c.b16 %v6119, %v6118
      %v6135 = vpack.c.b16 %v6121, %v6120
      %v6136 = vpack.c.b16 %v6123, %v6122
      %v6137 = vpack.c.b16 %v6125, %v6124
      %v6138 = vpack.c.b16 %v6127, %v6126
      %v6139 = vpack.c.b16 %v6129, %v6128
      %v6140 = vpack.c.b16 %v6131, %v6130
      %v6151 = vsel %vm2120, %v6073, 0
      %v6154 = vsel %vm2120, %v6075, 0
      %v6157 = vsel %vm2120, %v6077, 0
      %v6160 = vsel %vm2120, %v6079, 0
      %v6163 = vsel %vm2120, %v6081, 0
      %v6166 = vsel %vm2120, %v6083, 0
      %v6169 = vsel %vm2120, %v6085, 0
      %v6172 = vsel %vm2120, %v6087, 0
      %6174 = vmatprep.subr.bf16.mxu0 0
      %6175 = vmatpush1.bf16.msra.mxu0 %v6132
      %6176 = vmatprep.subr.bf16.mxu0 0
      %6177 = vmatpush1.bf16.msra.mxu0 %v6133
      %6178 = vmatprep.subr.bf16.mxu0 0
      %6179 = vmatpush1.bf16.msra.mxu0 %v6134
      %6180 = vmatprep.subr.bf16.mxu0 0
      %6181 = vmatpush1.bf16.msra.mxu0 %v6135
      %6182 = vmatprep.subr.bf16.mxu0 0
      %6183 = vmatpush1.bf16.msra.mxu0 %v6136
      %6184 = vmatprep.subr.bf16.mxu0 0
      %6185 = vmatpush1.bf16.msra.mxu0 %v6137
      %6186 = vmatprep.subr.bf16.mxu0 0
      %6187 = vmatpush1.bf16.msra.mxu0 %v6138
      %6188 = vmatprep.subr.bf16.mxu0 0
      %6189 = vmatpush1.bf16.msra.mxu0 %v6139
      %6190 = vmatprep.subr.bf16.mxu0 0
      %6191 = vmatpush1.bf16.msra.mxu0 %v6140
      %6192 = vmatprep.subr.bf16.mxu0 0
      %6193 = vmatpush1.bf16.msra.mxu0 0
      %6194 = vmatprep.subr.bf16.mxu0 0
      %6195 = vmatpush1.bf16.msra.mxu0 0
      %6196 = vmatprep.subr.bf16.mxu0 0
      %6197 = vmatpush1.bf16.msra.mxu0 0
      %6198 = vmatprep.subr.bf16.mxu0 0
      %6199 = vmatpush1.bf16.msra.mxu0 0
      %6200 = vmatprep.subr.bf16.mxu0 0
      %6201 = vmatpush1.bf16.msra.mxu0 0
      %6202 = vmatprep.subr.bf16.mxu0 0
      %6203 = vmatpush1.bf16.msra.mxu0 0
      %6204 = vmatprep.subr.bf16.mxu0 0
      %6205 = vmatpush1.bf16.msra.mxu0 0
      %6206 = vmatprep.mubr.bf16.mxu0 %v6151
      %6207 = vmatmul.mubr.bf16.gmra.mrb[0].mxu0 %v6072
      %v6208 = vpop.f32.mrb[0].mxu0
      %v6209 = vadd.f32 %v6070, %v6208
      %v6210 = vpop.f32.mrb[0].mxu0
      %v6211 = vpop.f32.mrb[0].mxu0
      %v6212 = vadd.f32 %v6070, %v6211
      %v6213 = vpop.f32.mrb[0].mxu0
      %6214 = vmatprep.mubr.bf16.mxu0 %v6154
      %6215 = vmatmul.mubr.bf16.gmra.mrb[0].mxu0 %v6074
      %v6216 = vpop.f32.mrb[0].mxu0
      %v6217 = vadd.f32 %v6070, %v6216
      %v6218 = vpop.f32.mrb[0].mxu0
      %v6219 = vpop.f32.mrb[0].mxu0
      %v6220 = vadd.f32 %v6070, %v6219
      %v6221 = vpop.f32.mrb[0].mxu0
      %6222 = vmatprep.mubr.bf16.mxu0 %v6157
      %6223 = vmatmul.mubr.bf16.gmra.mrb[0].mxu0 %v6076
      %v6224 = vpop.f32.mrb[0].mxu0
      %v6225 = vadd.f32 %v6070, %v6224
      %v6226 = vpop.f32.mrb[0].mxu0
      %v6227 = vpop.f32.mrb[0].mxu0
      %v6228 = vadd.f32 %v6070, %v6227
      %v6229 = vpop.f32.mrb[0].mxu0
      %6230 = vmatprep.mubr.bf16.mxu0 %v6160
      %6231 = vmatmul.mubr.bf16.gmra.mrb[0].mxu0 %v6078
      %v6232 = vpop.f32.mrb[0].mxu0
      %v6233 = vadd.f32 %v6070, %v6232
      %v6234 = vpop.f32.mrb[0].mxu0
      %v6235 = vpop.f32.mrb[0].mxu0
      %v6236 = vadd.f32 %v6070, %v6235
      %v6237 = vpop.f32.mrb[0].mxu0
      %6238 = vmatprep.mubr.bf16.mxu0 %v6163
      %6239 = vmatmul.mubr.bf16.gmra.mrb[0].mxu0 %v6080
      %v6240 = vpop.f32.mrb[0].mxu0
      %v6241 = vadd.f32 %v6070, %v6240
      %v6242 = vpop.f32.mrb[0].mxu0
      %v6243 = vpop.f32.mrb[0].mxu0
      %v6244 = vadd.f32 %v6070, %v6243
      %v6245 = vpop.f32.mrb[0].mxu0
      %6246 = vmatprep.mubr.bf16.mxu0 %v6166
      %6247 = vmatmul.mubr.bf16.gmra.mrb[0].mxu0 %v6082
      %v6248 = vpop.f32.mrb[0].mxu0
      %v6249 = vadd.f32 %v6070, %v6248
      %v6250 = vpop.f32.mrb[0].mxu0
      %v6251 = vpop.f32.mrb[0].mxu0
      %v6252 = vadd.f32 %v6070, %v6251
      %v6253 = vpop.f32.mrb[0].mxu0
      %6254 = vmatprep.mubr.bf16.mxu0 %v6169
      %6255 = vmatmul.mubr.bf16.gmra.mrb[0].mxu0 %v6084
      %v6256 = vpop.f32.mrb[0].mxu0
      %v6257 = vadd.f32 %v6070, %v6256
      %v6258 = vpop.f32.mrb[0].mxu0
      %v6259 = vpop.f32.mrb[0].mxu0
      %v6260 = vadd.f32 %v6070, %v6259
      %v6261 = vpop.f32.mrb[0].mxu0
      %6262 = vmatprep.mubr.bf16.mxu0 %v6172
      %6263 = vmatmul.mubr.bf16.gmra.mrb[0].mxu0 %v6086
      %v6264 = vpop.f32.mrb[0].mxu0
      %v6265 = vadd.f32 %v6070, %v6264
      %v6266 = vpop.f32.mrb[0].mxu0
      %v6267 = vpop.f32.mrb[0].mxu0
      %v6268 = vadd.f32 %v6070, %v6267
      %v6269 = vpop.f32.mrb[0].mxu0
      %6270 = vdwg.mxu0
      %v6271 = vmax.f32 %v6209, 0.0
      %v6272 = vmax.f32 %v6212, 0.0
      %v6273 = vmax.f32 %v6217, 0.0
      %v6274 = vmax.f32 %v6220, 0.0
      %v6275 = vmax.f32 %v6225, 0.0
      %v6276 = vmax.f32 %v6228, 0.0
      %v6277 = vmax.f32 %v6233, 0.0
      %v6278 = vmax.f32 %v6236, 0.0
      %v6279 = vmax.f32 %v6241, 0.0
      %v6280 = vmax.f32 %v6244, 0.0
      %v6281 = vmax.f32 %v6249, 0.0
      %v6282 = vmax.f32 %v6252, 0.0
      %v6283 = vmax.f32 %v6257, 0.0
      %v6284 = vmax.f32 %v6260, 0.0
      %v6285 = vmax.f32 %v6265, 0.0
      %v6286 = vmax.f32 %v6268, 0.0
      %v6287 = vsel %vm2185, %v6271, 0.0
      %v6288 = vsel %vm2185, %v6272, 0.0
      %v6289 = vadd.f32 %v6287, %v6288
      %v6290 = vsel %vm2185, %v6273, 0.0
      %v6291 = vadd.f32 %v6289, %v6290
      %v6292 = vsel %vm2185, %v6274, 0.0
      %v6293 = vadd.f32 %v6291, %v6292
      %v6294 = vsel %vm2185, %v6275, 0.0
      %v6295 = vadd.f32 %v6293, %v6294
      %v6296 = vsel %vm2185, %v6276, 0.0
      %v6297 = vadd.f32 %v6295, %v6296
      %v6298 = vsel %vm2185, %v6277, 0.0
      %v6299 = vadd.f32 %v6297, %v6298
      %v6300 = vsel %vm2185, %v6278, 0.0
      %v6301 = vadd.f32 %v6299, %v6300
      %v6302 = vrot.slane %v6301, 4
      %v6303 = vadd.f32 %v6301, %v6302
      %v6304 = vrot.slane %v6303, 2
      %v6305 = vadd.f32 %v6303, %v6304
      %v6306 = vrot.slane %v6305, 1
      %v6307 = vadd.f32 %v6305, %v6306
      %v6308 = vsel %vm2185, %v6279, 0.0
      %v6309 = vsel %vm2185, %v6280, 0.0
      %v6310 = vadd.f32 %v6308, %v6309
      %v6311 = vsel %vm2185, %v6281, 0.0
      %v6312 = vadd.f32 %v6310, %v6311
      %v6313 = vsel %vm2185, %v6282, 0.0
      %v6314 = vadd.f32 %v6312, %v6313
      %v6315 = vsel %vm2185, %v6283, 0.0
      %v6316 = vadd.f32 %v6314, %v6315
      %v6317 = vsel %vm2185, %v6284, 0.0
      %v6318 = vadd.f32 %v6316, %v6317
      %v6319 = vsel %vm2185, %v6285, 0.0
      %v6320 = vadd.f32 %v6318, %v6319
      %v6321 = vsel %vm2185, %v6286, 0.0
      %v6322 = vadd.f32 %v6320, %v6321
      %v6323 = vrot.slane %v6322, 4
      %v6324 = vadd.f32 %v6322, %v6323
      %v6325 = vrot.slane %v6324, 2
      %v6326 = vadd.f32 %v6324, %v6325
      %v6327 = vrot.slane %v6326, 1
      %v6328 = vadd.f32 %v6326, %v6327
      %v6329 = vrcp.pop 64.0
      %v6330 = vmul.f32 %v6307, %v6329
      %v6331 = vmul.f32 %v6328, %v6329
      %v6332 = vpack.c.bf16 %v6330, %v6330
      %v6333 = vpack.c.bf16 %v6331, %v6331
      %v6334 = vld [vmem:[%s5] sm:$0xf]
      %v6335 = vld [vmem:[%s5 + $0x4] sm:$0xf]
      %v6336 = vld [vmem:[%s5 + $0x8] sm:$0xf]
      %v6337 = vld [vmem:[%s5 + $0xc] sm:$0xf]
      %v6338 = vld [vmem:[%s6] sm:$0x1]
      %v6340 = vlaneseq
      %v6341 = vshrl.u32 %v6340, 7
      %v6342 = vsub.s32 0, %v6341
      %v6343 = vrot.slane %v6338, %v6342
      %v6347 = vunpack.c.l.b16 %v6332
      %v6348 = vunpack.c.l.b16 %v6333
      %vm6349 = vcmask 1041409
      %v6350 = vsel %vm6349, %v6348, %v6347
      %v6351 = vpack.c.b16 %v6350, %v6350
      %v6356 = vunpack.c.l.b16 %v6334
      %v6357 = vunpack.c.l.b16 %v6335
      %v6358 = vunpack.c.l.b16 %v6336
      %v6359 = vunpack.c.l.b16 %v6337
      %v6360 = vpack.c.b16 %v6357, %v6356
      %v6361 = vpack.c.b16 %v6359, %v6358
      %v6365 = vsel %vm2185, %v6351, 0
      %6367 = vmatprep.subr.bf16.mxu0 0
      %6368 = vmatpush1.bf16.msra.mxu0 %v6360
      %6369 = vmatprep.subr.bf16.mxu0 0
      %6370 = vmatpush1.bf16.msra.mxu0 %v6361
      %6371 = vmatprep.subr.bf16.mxu0 0
      %6372 = vmatpush1.bf16.msra.mxu0 0
      %6373 = vmatprep.subr.bf16.mxu0 0
      %6374 = vmatpush1.bf16.msra.mxu0 0
      %6375 = vmatprep.subr.bf16.mxu0 0
      %6376 = vmatpush1.bf16.msra.mxu0 0
      %6377 = vmatprep.subr.bf16.mxu0 0
      %6378 = vmatpush1.bf16.msra.mxu0 0
      %6379 = vmatprep.subr.bf16.mxu0 0
      %6380 = vmatpush1.bf16.msra.mxu0 0
      %6381 = vmatprep.subr.bf16.mxu0 0
      %6382 = vmatpush1.bf16.msra.mxu0 0
      %6383 = vmatprep.subr.bf16.mxu0 0
      %6384 = vmatpush1.bf16.msra.mxu0 0
      %6385 = vmatprep.subr.bf16.mxu0 0
      %6386 = vmatpush1.bf16.msra.mxu0 0
      %6387 = vmatprep.subr.bf16.mxu0 0
      %6388 = vmatpush1.bf16.msra.mxu0 0
      %6389 = vmatprep.subr.bf16.mxu0 0
      %6390 = vmatpush1.bf16.msra.mxu0 0
      %6391 = vmatprep.subr.bf16.mxu0 0
      %6392 = vmatpush1.bf16.msra.mxu0 0
      %6393 = vmatprep.subr.bf16.mxu0 0
      %6394 = vmatpush1.bf16.msra.mxu0 0
      %6395 = vmatprep.subr.bf16.mxu0 0
      %6396 = vmatpush1.bf16.msra.mxu0 0
      %6397 = vmatprep.subr.bf16.mxu0 0
      %6398 = vmatpush1.bf16.msra.mxu0 0
      %6399 = vmatprep.mubr.bf16.mxu0 0
      %6400 = vmatmul.mubr.bf16.gmra.mrb[0].mxu0 %v6365
      %v6401 = vpop.f32.mrb[0].mxu0
      %v6402 = vadd.f32 %v6343, %v6401
      %v6403 = vpop.f32.mrb[0].mxu0
      %v6404 = vpop.f32.mrb[0].mxu0
      %v6405 = vpop.f32.mrb[0].mxu0
      %6406 = vdwg.mxu0
      %6407 = vst [vmem:[%s281] sm:$0x3] %v6402
      %p6408 = scmp.lt.s32.totalorder %s18, 1
      %s6409 = scalar_select %p6408, %s18, 1
      %s6410 = smul.addr %s6409, 2
      %s6411 = scalar_lea.vmem %s7, %s6410
      // Predicated region
      $region49: #{siamese_forward.1} parent=47 // pred_check
        %p6412 = pneg %p188
      $region50: #{siamese_forward.1} parent=47 // pred_check_branch
        %6414 = sbr.rel (%p6412) target = $region52
      $region51: #{siamese_forward.1} parent=47 // pred_region
        _
      $region52: #{siamese_forward.1} parent=47 // pred_fallthru
        _
    $region48: #{siamese_forward.1} parent=5 // pred_fallthru
      _
    %p6415 = scmp.le.s32.totalorder 2, %s13
    // Predicated region
    $region53: #{siamese_forward.1} parent=5 // pred_check
      %p6416 = pneg %p6415
    $region54: #{siamese_forward.1} parent=5 // pred_check_branch
      %6418 = sbr.rel (%p6416) target = $region56
    $region55: #{siamese_forward.1} parent=5 // pred_region
      %s6419 = ssub.s32 %s13, 2
      // Predicated region
      $region57: #{siamese_forward.1} parent=55 // pred_check
        %p6420 = pneg %p194
      $region58: #{siamese_forward.1} parent=55 // pred_check_branch
        %6422 = sbr.rel (%p6420) target = $region60
      $region59: #{siamese_forward.1} parent=55 // pred_region
        %p6423 = scmp.lt.s32.totalorder %s19, 1
        %s6424 = scalar_select %p6423, %s19, 1
        %s6425 = smul.addr %s6424, 2
        %s6426 = scalar_lea.vmem %s7, %s6425
      $region60: #{siamese_forward.1} parent=55 // pred_fallthru
        _
    $region56: #{siamese_forward.1} parent=5 // pred_fallthru
      _
  $region6: #{siamese_forward.1} parent=0 // loop_footer
    %s17 = sadd.s32 1, %s13
  $region7: #{siamese_forward.1} parent=0 // loop_footer_branch
    %12 = sbr.rel target = $region3
  $region8: #{siamese_forward.1} parent=0 // loop_exit
    _

</llo_original>
